<compile_context>
chip_gen: v6e
topology: v6e:2x2x1
jax: 0.10.0
libtpu: 0.0.40
codegen_flags: <defaults>
</compile_context>

<pallas_src>
import math

import numpy as np
import jax
import jax.numpy as jnp
from jax.experimental import pallas as pl
from jax.experimental.pallas import tpu as pltpu


def _ca_sa_kernel(x_ref, tc_ref, tsa_ref, b1_ref, b2_ref, o_ref):
    # x_ref:  (Bt, C, HW) VMEM, lane-dense
    # tc_ref: (C, C)       VMEM  ECA band matrix (Conv1d k=7 pad=3 baked in)
    # tsa_ref:(2, HW, HW)  VMEM  SA banded-Toeplitz matrices (max, avg channels)
    # b1_ref, b2_ref: (1,) SMEM scalars
    x = x_ref[...].astype(jnp.float32)                        # (Bt, C, HW)
    Bt, C, HW = x.shape

    # ---------------- ECA: channel attention ----------------
    # conv is linear => conv(avg) + conv(max) = (avg + max) @ Tc + 2*b1
    pooled = jnp.sum(x, axis=2) * (1.0 / HW) + jnp.max(x, axis=2)       # (Bt, C)
    y = jax.nn.sigmoid(
        jnp.dot(pooled, tc_ref[...],
                preferred_element_type=jnp.float32,
                precision=jax.lax.Precision.HIGHEST)
        + 2.0 * b1_ref[0])                                              # (Bt, C)
    x1 = x * y[:, :, None]                                              # (Bt, C, HW)

    # ---------------- SA: spatial attention ----------------
    mx = jnp.max(x1, axis=1)                                            # (Bt, HW)
    av = jnp.sum(x1, axis=1) * (1.0 / C)                                # (Bt, HW)
    conv = (jnp.dot(mx, tsa_ref[0],
                    preferred_element_type=jnp.float32,
                    precision=jax.lax.Precision.HIGHEST)
            + jnp.dot(av, tsa_ref[1],
                      preferred_element_type=jnp.float32,
                      precision=jax.lax.Precision.HIGHEST)
            + b2_ref[0])                                                # (Bt, HW)
    sig = jax.nn.sigmoid(conv)

    o_ref[...] = (x1 * sig[:, None, :]).astype(o_ref.dtype)


def _pick_batch_tile(B, C, HW, budget_bytes=12 << 20):
    """Largest per-step batch tile that (a) divides B, (b) fits the VMEM budget
    (double-buffered in + out blocks plus in-kernel f32 temporaries), and
    (c) leaves >= 2 grid steps when B >= 2 so v7x can use both TensorCores."""
    per_img = 6 * C * HW * 4          # 2x in + 2x out (double-buffered) + ~2x temps
    bt_cap = max(1, budget_bytes // max(per_img, 1))
    if B >= 2:
        bt_cap = min(bt_cap, max(1, B // 2))
    bt = 1
    for d in range(1, B + 1):
        if B % d == 0 and d <= bt_cap:
            bt = d
    return bt


def ca_sa_forward(x, w1, b1, w2, b2):
    """x: (B, C, H, W); w1: (7,), b1: (1,) [Conv1d k=7 pad=3];
       w2: (2, 7, 7), b2: (1,)             [Conv2d 2->1 k=7 pad=3]."""
    B, C, H, W = x.shape
    HW = H * W
    x2 = x.reshape(B, C, HW)                                  # contiguous bitcast

    # ECA band matrix: Tc[p, q] = w1[p - q + 3] if |p - q| <= 3 else 0.
    ci = jnp.arange(C)
    dc = ci[:, None] - ci[None, :]
    tc = jnp.where(jnp.abs(dc) <= 3,
                   w1[jnp.clip(dc + 3, 0, 6)], 0.0).astype(jnp.float32)      # (C, C)

    # SA banded-Toeplitz matrices, boundary clipping baked in:
    #   Tsa[c, p, q] = w2[c, ph-qh+3, pw-qw+3]  when |ph-qh|<=3 and |pw-qw|<=3.
    pix = jnp.arange(HW)
    ph, pw = pix // W, pix % W
    di = ph[:, None] - ph[None, :]                                            # (HW, HW)
    dj = pw[:, None] - pw[None, :]
    valid = (jnp.abs(di) <= 3) & (jnp.abs(dj) <= 3)
    ii = jnp.clip(di + 3, 0, 6)
    jj = jnp.clip(dj + 3, 0, 6)
    tsa = jnp.where(valid[None], w2[:, ii, jj], 0.0).astype(jnp.float32)      # (2, HW, HW)

    Bt = _pick_batch_tile(B, C, HW)
    grid = (B // Bt,)

    out2 = pl.pallas_call(
        _ca_sa_kernel,
        out_shape=jax.ShapeDtypeStruct((B, C, HW), x.dtype),
        grid=grid,
        in_specs=[
            pl.BlockSpec((Bt, C, HW), lambda b: (b, 0, 0)),           # x tile
            pl.BlockSpec((C, C), lambda b: (0, 0)),                   # ECA band matrix
            pl.BlockSpec((2, HW, HW), lambda b: (0, 0, 0)),           # SA Toeplitz
            pl.BlockSpec(memory_space=pltpu.MemorySpace.SMEM),        # b1 (1,)
            pl.BlockSpec(memory_space=pltpu.MemorySpace.SMEM),        # b2 (1,)
        ],
        out_specs=pl.BlockSpec((Bt, C, HW), lambda b: (b, 0, 0)),
        compiler_params=pltpu.CompilerParams(
            dimension_semantics=("parallel",),
            # Explicit scoped-VMEM limit: above v5e's 16 MiB default, well under
            # v7x's 64 MiB physical; the tile pick keeps usage <= ~12 MiB.
            vmem_limit_bytes=32 * 1024 * 1024,
        ),
    )(x2, tc, tsa, b1, b2)

    return out2.reshape(B, C, H, W)


def reference(x, w1, b1, w2, b2):
    """Pure-JAX reference matching the PyTorch forward."""
    B, C, H, W = x.shape
    # ECA
    avg = jnp.mean(x, axis=(2, 3))                            # (B, C)
    mx = jnp.max(x, axis=(2, 3))                              # (B, C)

    def conv1d(p):
        pp = jnp.pad(p, ((0, 0), (3, 3)))
        return b1[0] + sum(w1[k] * pp[:, k:k + C] for k in range(7))

    y = jax.nn.sigmoid(conv1d(avg) + conv1d(mx))              # (B, C)
    x1 = x * y[:, :, None, None]
    # SA
    mxs = jnp.max(x1, axis=1)                                 # (B, H, W)
    avs = jnp.mean(x1, axis=1)                                # (B, H, W)
    pm = jnp.pad(mxs, ((0, 0), (3, 3), (3, 3)))
    pa = jnp.pad(avs, ((0, 0), (3, 3), (3, 3)))
    acc = jnp.full((B, H, W), b2[0], dtype=jnp.float32)
    for i in range(7):
        for j in range(7):
            acc = acc + w2[0, i, j] * pm[:, i:i + H, j:j + W]
            acc = acc + w2[1, i, j] * pa[:, i:i + H, j:j + W]
    sig = jax.nn.sigmoid(acc)
    return x1 * sig[:, None, :, :]


if __name__ == "__main__":
    key = jax.random.PRNGKey(0)
    kx, k1, k2, k3 = jax.random.split(key, 4)

    B, C, H, W = 2, 4, 16, 16
    x = jax.random.normal(kx, (B, C, H, W), dtype=jnp.float32)

    # Conv1d(1, 1, 7) params (PyTorch default uniform init, deterministic here)
    bound1 = 1.0 / math.sqrt(7.0)
    w1 = jax.random.uniform(k1, (7,), minval=-bound1, maxval=bound1, dtype=jnp.float32)
    b1 = jax.random.uniform(k2, (1,), minval=-bound1, maxval=bound1, dtype=jnp.float32)

    # Conv2d(2, 1, 7, 7): kaiming_normal_(mode='fan_out') -> std = sqrt(2/(1*7*7)); bias = 0
    std2 = math.sqrt(2.0 / 49.0)
    w2 = (std2 * jax.random.normal(k3, (2, 7, 7))).astype(jnp.float32)
    b2 = jnp.zeros((1,), dtype=jnp.float32)

    out = jax.jit(ca_sa_forward)(x, w1, b1, w2, b2)
    out = jax.block_until_ready(out)

    ref = reference(x, w1, b1, w2, b2)
    assert out.shape == x.shape and out.dtype == x.dtype
    np.testing.assert_allclose(np.asarray(out), np.asarray(ref), rtol=1e-5, atol=1e-5)
    print("KERNEL_OK")
</pallas_src>

<mosaic_0001>
module attributes {stable_mosaic.version = 11 : i64} {
  func.func @_ca_sa_kernel(%arg0: i32, %arg1: memref<1x4x256xf32, #tpu.memory_space<vmem>>, %arg2: memref<4x4xf32, #tpu.memory_space<vmem>>, %arg3: memref<2x256x256xf32, #tpu.memory_space<vmem>>, %arg4: memref<1xf32, #tpu.memory_space<smem>>, %arg5: memref<1xf32, #tpu.memory_space<smem>>, %arg6: memref<1x4x256xf32, #tpu.memory_space<vmem>>) attributes {dimension_semantics = [#tpu.dimension_semantics<parallel>], iteration_bounds = array<i64: 2>, scalar_prefetch = 0 : i64, scratch_operands = 0 : i64, tpu.core_type = #tpu.core_type<tc>, window_params = [{transform_indices = @transform_0, window_bounds = array<i64: 1, 4, 256>}, {pipeline_mode = #tpu.pipeline_mode<synchronous>, transform_indices = @transform_1, window_bounds = array<i64: 4, 4>}, {pipeline_mode = #tpu.pipeline_mode<synchronous>, transform_indices = @transform_2, window_bounds = array<i64: 2, 256, 256>}, {transform_indices = @transform_3, window_bounds = array<i64: 1>}, {transform_indices = @transform_4, window_bounds = array<i64: 1>}, {transform_indices = @transform_5, window_bounds = array<i64: 1, 4, 256>}]} {
    %c0 = arith.constant 0 : index
    %c0_0 = arith.constant 0 : index
    %c0_1 = arith.constant 0 : index
    %0 = vector.load %arg1[%c0, %c0_0, %c0_1] : memref<1x4x256xf32, #tpu.memory_space<vmem>>, vector<1x4x256xf32>
    %cst = arith.constant dense<0.000000e+00> : vector<1x4xf32>
    %1 = vector.multi_reduction <add>, %0, %cst [2] : vector<1x4x256xf32> to vector<1x4xf32>
    %cst_2 = arith.constant 3.906250e-03 : f32
    %2 = vector.broadcast %cst_2 : f32 to vector<1x4xf32>
    %3 = arith.mulf %1, %2 : vector<1x4xf32>
    %cst_3 = arith.constant dense<0xFF800000> : vector<1x4xf32>
    %4 = vector.multi_reduction <maximumf>, %0, %cst_3 [2] : vector<1x4x256xf32> to vector<1x4xf32>
    %5 = arith.addf %3, %4 : vector<1x4xf32>
    %c0_4 = arith.constant 0 : index
    %c0_5 = arith.constant 0 : index
    %6 = vector.load %arg2[%c0_4, %c0_5] : memref<4x4xf32, #tpu.memory_space<vmem>>, vector<4x4xf32>
    %cst_6 = arith.constant dense<0.000000e+00> : vector<1x4xf32>
    %7 = tpu.matmul %5, %6, %cst_6 {dimension_numbers = #tpu.dot_dimension_numbers<[1], [0], [0], [1], [0, 0, 1, 1], [], []>, precision = #tpu.contract_precision<fp32>} : vector<1x4xf32>, vector<4x4xf32>, vector<1x4xf32> -> vector<1x4xf32>
    %c0_7 = arith.constant 0 : index
    %8 = memref.load %arg4[%c0_7] : memref<1xf32, #tpu.memory_space<smem>>
    %cst_8 = arith.constant 2.000000e+00 : f32
    %9 = arith.mulf %cst_8, %8 : f32
    %10 = vector.broadcast %9 : f32 to vector<1x4xf32>
    %11 = arith.addf %7, %10 : vector<1x4xf32>
    %12 = arith.negf %11 : vector<1x4xf32>
    %13 = math.exp %12 : vector<1x4xf32>
    %cst_9 = arith.constant 1.000000e+00 : f32
    %14 = vector.broadcast %cst_9 : f32 to vector<1x4xf32>
    %15 = arith.addf %14, %13 : vector<1x4xf32>
    %16 = arith.divf %14, %15 : vector<1x4xf32>
    %17 = vector.shape_cast %16 : vector<1x4xf32> to vector<1x4x1xf32>
    %18 = vector.broadcast %17 : vector<1x4x1xf32> to vector<1x4x256xf32>
    %19 = arith.mulf %0, %18 : vector<1x4x256xf32>
    %cst_10 = arith.constant dense<0xFF800000> : vector<1x256xf32>
    %20 = vector.multi_reduction <maximumf>, %19, %cst_10 [1] : vector<1x4x256xf32> to vector<1x256xf32>
    %cst_11 = arith.constant dense<0.000000e+00> : vector<1x256xf32>
    %21 = vector.multi_reduction <add>, %19, %cst_11 [1] : vector<1x4x256xf32> to vector<1x256xf32>
    %cst_12 = arith.constant 2.500000e-01 : f32
    %22 = vector.broadcast %cst_12 : f32 to vector<1x256xf32>
    %23 = arith.mulf %21, %22 : vector<1x256xf32>
    %c0_13 = arith.constant 0 : index
    %c0_14 = arith.constant 0 : index
    %c0_15 = arith.constant 0 : index
    %24 = vector.load %arg3[%c0_13, %c0_14, %c0_15] : memref<2x256x256xf32, #tpu.memory_space<vmem>>, vector<1x256x256xf32>
    %25 = vector.shape_cast %24 : vector<1x256x256xf32> to vector<256x256xf32>
    %cst_16 = arith.constant dense<0.000000e+00> : vector<1x256xf32>
    %26 = tpu.matmul %20, %25, %cst_16 {dimension_numbers = #tpu.dot_dimension_numbers<[1], [0], [0], [1], [0, 0, 1, 1], [], []>, precision = #tpu.contract_precision<fp32>} : vector<1x256xf32>, vector<256x256xf32>, vector<1x256xf32> -> vector<1x256xf32>
    %c1 = arith.constant 1 : index
    %c0_17 = arith.constant 0 : index
    %c0_18 = arith.constant 0 : index
    %27 = vector.load %arg3[%c1, %c0_17, %c0_18] : memref<2x256x256xf32, #tpu.memory_space<vmem>>, vector<1x256x256xf32>
    %28 = vector.shape_cast %27 : vector<1x256x256xf32> to vector<256x256xf32>
    %cst_19 = arith.constant dense<0.000000e+00> : vector<1x256xf32>
    %29 = tpu.matmul %23, %28, %cst_19 {dimension_numbers = #tpu.dot_dimension_numbers<[1], [0], [0], [1], [0, 0, 1, 1], [], []>, precision = #tpu.contract_precision<fp32>} : vector<1x256xf32>, vector<256x256xf32>, vector<1x256xf32> -> vector<1x256xf32>
    %30 = arith.addf %26, %29 : vector<1x256xf32>
    %c0_20 = arith.constant 0 : index
    %31 = memref.load %arg5[%c0_20] : memref<1xf32, #tpu.memory_space<smem>>
    %32 = vector.broadcast %31 : f32 to vector<1x256xf32>
    %33 = arith.addf %30, %32 : vector<1x256xf32>
    %34 = arith.negf %33 : vector<1x256xf32>
    %35 = math.exp %34 : vector<1x256xf32>
    %cst_21 = arith.constant 1.000000e+00 : f32
    %36 = vector.broadcast %cst_21 : f32 to vector<1x256xf32>
    %37 = arith.addf %36, %35 : vector<1x256xf32>
    %38 = arith.divf %36, %37 : vector<1x256xf32>
    %39 = vector.shape_cast %38 : vector<1x256xf32> to vector<1x1x256xf32>
    %40 = vector.broadcast %39 : vector<1x1x256xf32> to vector<1x4x256xf32>
    %41 = arith.mulf %19, %40 : vector<1x4x256xf32>
    %c0_22 = arith.constant 0 : index
    %c0_23 = arith.constant 0 : index
    %c0_24 = arith.constant 0 : index
    %42 = vector.load %arg6[%c0_22, %c0_23, %c0_24] : memref<1x4x256xf32, #tpu.memory_space<vmem>>, vector<1x4x256xf32>
    tpu.vector_store %arg6[%c0_22, %c0_23, %c0_24], %41 {strides = array<i32>} : memref<1x4x256xf32, #tpu.memory_space<vmem>>, vector<1x4x256xf32>,
    return
  }
  func.func @transform_0(%arg0: i32) -> (i32, i32, i32) {
    %c0_i32 = arith.constant 0 : i32
    %c0_i32_0 = arith.constant 0 : i32
    %c0_i32_1 = arith.constant 0 : i32
    return %arg0, %c0_i32, %c0_i32_0 : i32, i32, i32
  }
  func.func @transform_1(%arg0: i32) -> (i32, i32) {
    %c0_i32 = arith.constant 0 : i32
    %c0_i32_0 = arith.constant 0 : i32
    %c0_i32_1 = arith.constant 0 : i32
    return %c0_i32, %c0_i32_0 : i32, i32
  }
  func.func @transform_2(%arg0: i32) -> (i32, i32, i32) {
    %c0_i32 = arith.constant 0 : i32
    %c0_i32_0 = arith.constant 0 : i32
    %c0_i32_1 = arith.constant 0 : i32
    %c0_i32_2 = arith.constant 0 : i32
    return %c0_i32, %c0_i32_0, %c0_i32_1 : i32, i32, i32
  }
  func.func @transform_3(%arg0: i32) -> i32 {
    %c0_i32 = arith.constant 0 : i32
    %c0_i32_0 = arith.constant 0 : i32
    return %c0_i32 : i32
  }
  func.func @transform_4(%arg0: i32) -> i32 {
    %c0_i32 = arith.constant 0 : i32
    %c0_i32_0 = arith.constant 0 : i32
    return %c0_i32 : i32
  }
  func.func @transform_5(%arg0: i32) -> (i32, i32, i32) {
    %c0_i32 = arith.constant 0 : i32
    %c0_i32_0 = arith.constant 0 : i32
    %c0_i32_1 = arith.constant 0 : i32
    return %arg0, %c0_i32, %c0_i32_0 : i32, i32, i32
  }
}

</mosaic_0001>

<llo_original>
// kernel: ca_sa_forward.1
$region0: #{ca_sa_forward.1}
  #allocation0 [shape = 'u32[]', space=smem, size = 0x4, offset = 0x4, fixed_abs, tag = 'smem constant byte address 0x4 - core index']
  #allocation1 [shape = 'u32[144,128]{1,0:T(1,128)}', space=vmem, size = 0x12000, scoped, tag = 'internal scratch']
  #allocation2 [shape = 'f32[1]{0:T(128)S(6)}', space=smem, size = 0x200, scoped, tag = 'scoped memory for ca_sa_forward.1']
  #allocation3 [shape = 'f32[1]{0:T(128)S(6)}', space=smem, size = 0x200, scoped, tag = 'scoped memory for ca_sa_forward.1']
  %s0 = inlined_call_operand.vmem [shape: f32[2,4,256], index: 0, kind: input, shape index: {}]
  %s1 = inlined_call_operand.vmem [shape: f32[4,4], index: 1, kind: input, shape index: {}]
  %s2 = inlined_call_operand.vmem [shape: f32[2,256,256], index: 2, kind: input, shape index: {}]
  %s3 = inlined_call_operand.<no memory space> [shape: f32[1], index: 3, kind: input, shape index: {}]
  %s4 = inlined_call_operand.<no memory space> [shape: f32[1], index: 4, kind: input, shape index: {}]
  %s5 = inlined_call_operand.vmem [shape: f32[2,4,256], index: 5, kind: output, shape index: {}]
  %s6 = sld [smem:[#allocation0]]
  $region53: #{ca_sa_forward.1} parent=0
    _
  %s8 = ssub.s32 1, %s6
  %s9 = scalar_select 0, %s8, %s6
  %10 = sst [smem:[#allocation2]] %s3
  %11 = sst [smem:[#allocation3]] %s4
  loop: start=0, step=1, limit=4
  $region2: #{ca_sa_forward.1} parent=0 // loop_pre_header
    _
  $region3: #{ca_sa_forward.1} parent=0 // loop_header
    %s13 = sphi 0, %s17
    %p14 = scmp.ge.s32.totalorder %s13, 4
    %s23 = sphi 0, %s25
    %s26 = sphi 0, %s23
    %s27 = sphi 0, %s26
    %s43 = sphi 0, %s27
    %s47 = sphi 0, %s47
    %s49 = sphi 0, %s47
    %s50 = sphi 0, %s49
    %s64 = sphi 0, %s50
    %s68 = sphi 0, %s68
    %s70 = sphi 0, %s68
    %s71 = sphi 0, %s70
    %s85 = sphi 0, %s71
    %s89 = sphi 0, %s89
    %s91 = sphi 0, %s89
    %s92 = sphi 0, %s91
    %s106 = sphi 0, %s92
    %s110 = sphi 0, %s110
    %s112 = sphi 0, %s110
    %s113 = sphi 0, %s112
    %s127 = sphi 0, %s113
    %s133 = sphi 0, %s135
    %s136 = sphi 0, %s133
    %s137 = sphi 0, %s136
    %s153 = sphi 0, %s137
  $region4: #{ca_sa_forward.1} parent=0 // loop_header_branch
    %16 = sbr.rel (%p14) target = $region8
  $region5: #{ca_sa_forward.1} parent=0 // loop_body
    %s18 = ssub.s32 %s13, 1
    %s19 = ssub.s32 %s13, 2
    %s20 = sadd.s32 %s13, 1
    %s21 = ssub.s32 %s13, %s20
    %p22 = scmp.eq.s32.totalorder %s21, 0
    %s24 = sadd.s32 %s23, 1
    %s25 = scalar_select %p22, %s23, %s24
    %p28 = pneg %p22
    %p29 = scmp.eq.s32.totalorder %s13, 1
    %p30 = por %p28, %p29
    %p31 = scmp.ne.s32.totalorder %s23, %s26
    %p32 = scmp.eq.s32.totalorder %s13, 0
    %p33 = por %p31, %p32
    %p34 = scmp.ne.s32.totalorder %s23, %s26
    %p35 = scmp.eq.s32.totalorder %s18, 1
    %p36 = por %p34, %p35
    %p37 = scmp.ne.s32.totalorder %s26, %s27
    %p38 = scmp.eq.s32.totalorder %s18, 0
    %p39 = por %p37, %p38
    %p40 = scmp.ne.s32.totalorder %s26, %s27
    %p41 = scmp.eq.s32.totalorder %s19, 1
    %p42 = por %p40, %p41
    %p44 = scmp.ne.s32.totalorder %s27, %s43
    %p45 = scmp.eq.s32.totalorder %s19, 0
    %p46 = por %p44, %p45
    %s48 = sadd.s32 %s47, 1
    %p51 = scmp.eq.s32.totalorder %s13, 1
    %p52 = scmp.ne.s32.totalorder %s47, %s49
    %p53 = scmp.eq.s32.totalorder %s13, 0
    %p54 = por %p52, %p53
    %p55 = scmp.ne.s32.totalorder %s47, %s49
    %p56 = scmp.eq.s32.totalorder %s18, 1
    %p57 = por %p55, %p56
    %p58 = scmp.ne.s32.totalorder %s49, %s50
    %p59 = scmp.eq.s32.totalorder %s18, 0
    %p60 = por %p58, %p59
    %p61 = scmp.ne.s32.totalorder %s49, %s50
    %p62 = scmp.eq.s32.totalorder %s19, 1
    %p63 = por %p61, %p62
    %p65 = scmp.ne.s32.totalorder %s50, %s64
    %p66 = scmp.eq.s32.totalorder %s19, 0
    %p67 = por %p65, %p66
    %s69 = sadd.s32 %s68, 1
    %p72 = scmp.eq.s32.totalorder %s13, 1
    %p73 = scmp.ne.s32.totalorder %s68, %s70
    %p74 = scmp.eq.s32.totalorder %s13, 0
    %p75 = por %p73, %p74
    %p76 = scmp.ne.s32.totalorder %s68, %s70
    %p77 = scmp.eq.s32.totalorder %s18, 1
    %p78 = por %p76, %p77
    %p79 = scmp.ne.s32.totalorder %s70, %s71
    %p80 = scmp.eq.s32.totalorder %s18, 0
    %p81 = por %p79, %p80
    %p82 = scmp.ne.s32.totalorder %s70, %s71
    %p83 = scmp.eq.s32.totalorder %s19, 1
    %p84 = por %p82, %p83
    %p86 = scmp.ne.s32.totalorder %s71, %s85
    %p87 = scmp.eq.s32.totalorder %s19, 0
    %p88 = por %p86, %p87
    %s90 = sadd.s32 %s89, 1
    %p93 = scmp.eq.s32.totalorder %s13, 1
    %p94 = scmp.ne.s32.totalorder %s89, %s91
    %p95 = scmp.eq.s32.totalorder %s13, 0
    %p96 = por %p94, %p95
    %p97 = scmp.ne.s32.totalorder %s89, %s91
    %p98 = scmp.eq.s32.totalorder %s18, 1
    %p99 = por %p97, %p98
    %p100 = scmp.ne.s32.totalorder %s91, %s92
    %p101 = scmp.eq.s32.totalorder %s18, 0
    %p102 = por %p100, %p101
    %p103 = scmp.ne.s32.totalorder %s91, %s92
    %p104 = scmp.eq.s32.totalorder %s19, 1
    %p105 = por %p103, %p104
    %p107 = scmp.ne.s32.totalorder %s92, %s106
    %p108 = scmp.eq.s32.totalorder %s19, 0
    %p109 = por %p107, %p108
    %s111 = sadd.s32 %s110, 1
    %p114 = scmp.eq.s32.totalorder %s13, 1
    %p115 = scmp.ne.s32.totalorder %s110, %s112
    %p116 = scmp.eq.s32.totalorder %s13, 0
    %p117 = por %p115, %p116
    %p118 = scmp.ne.s32.totalorder %s110, %s112
    %p119 = scmp.eq.s32.totalorder %s18, 1
    %p120 = por %p118, %p119
    %p121 = scmp.ne.s32.totalorder %s112, %s113
    %p122 = scmp.eq.s32.totalorder %s18, 0
    %p123 = por %p121, %p122
    %p124 = scmp.ne.s32.totalorder %s112, %s113
    %p125 = scmp.eq.s32.totalorder %s19, 1
    %p126 = por %p124, %p125
    %p128 = scmp.ne.s32.totalorder %s113, %s127
    %p129 = scmp.eq.s32.totalorder %s19, 0
    %p130 = por %p128, %p129
    %s131 = ssub.s32 %s13, %s20
    %p132 = scmp.eq.s32.totalorder %s131, 0
    %s134 = sadd.s32 %s133, 1
    %s135 = scalar_select %p132, %s133, %s134
    %p138 = pneg %p132
    %p139 = scmp.eq.s32.totalorder %s13, 1
    %p140 = por %p138, %p139
    %p141 = scmp.ne.s32.totalorder %s133, %s136
    %p142 = scmp.eq.s32.totalorder %s13, 0
    %p143 = por %p141, %p142
    %p144 = scmp.ne.s32.totalorder %s133, %s136
    %p145 = scmp.eq.s32.totalorder %s18, 1
    %p146 = por %p144, %p145
    %p147 = scmp.ne.s32.totalorder %s136, %s137
    %p148 = scmp.eq.s32.totalorder %s18, 0
    %p149 = por %p147, %p148
    %p150 = scmp.ne.s32.totalorder %s136, %s137
    %p151 = scmp.eq.s32.totalorder %s19, 1
    %p152 = por %p150, %p151
    %p154 = scmp.ne.s32.totalorder %s137, %s153
    %p155 = scmp.eq.s32.totalorder %s19, 0
    %p156 = por %p154, %p155
    %p157 = scmp.le.s32.totalorder 1, %s13
    %p158 = scmp.lt.s32.totalorder %s13, 3
    %p159 = pnand %p157, %p158
    %p160 = pneg %p159
    // Predicated region
    $region9: #{ca_sa_forward.1} parent=5 // pred_check
      _
    $region10: #{ca_sa_forward.1} parent=5 // pred_check_branch
      %162 = sbr.rel (%p159) target = $region12
    $region11: #{ca_sa_forward.1} parent=5 // pred_region
      %s163 = ssub.s32 %s13, 1
      // Predicated region
      $region13: #{ca_sa_forward.1} parent=11 // pred_check
        %p164 = pneg %p60
      $region14: #{ca_sa_forward.1} parent=11 // pred_check_branch
        %166 = sbr.rel (%p164) target = $region16
      $region15: #{ca_sa_forward.1} parent=11 // pred_region
        _
      $region16: #{ca_sa_forward.1} parent=11 // pred_fallthru
        _
      // Predicated region
      $region17: #{ca_sa_forward.1} parent=11 // pred_check
        %p167 = pneg %p81
      $region18: #{ca_sa_forward.1} parent=11 // pred_check_branch
        %169 = sbr.rel (%p167) target = $region20
      $region19: #{ca_sa_forward.1} parent=11 // pred_region
        _
      $region20: #{ca_sa_forward.1} parent=11 // pred_fallthru
        _
      // Predicated region
      $region21: #{ca_sa_forward.1} parent=11 // pred_check
        %p170 = pneg %p102
      $region22: #{ca_sa_forward.1} parent=11 // pred_check_branch
        %172 = sbr.rel (%p170) target = $region24
      $region23: #{ca_sa_forward.1} parent=11 // pred_region
        _
      $region24: #{ca_sa_forward.1} parent=11 // pred_fallthru
        _
      // Predicated region
      $region25: #{ca_sa_forward.1} parent=11 // pred_check
        %p173 = pneg %p123
      $region26: #{ca_sa_forward.1} parent=11 // pred_check_branch
        %175 = sbr.rel (%p173) target = $region28
      $region27: #{ca_sa_forward.1} parent=11 // pred_region
        _
      $region28: #{ca_sa_forward.1} parent=11 // pred_fallthru
        _
    $region12: #{ca_sa_forward.1} parent=5 // pred_fallthru
      _
    %p176 = scmp.lt.s32.totalorder %s13, 2
    // Predicated region
    $region29: #{ca_sa_forward.1} parent=5 // pred_check
      %p177 = pneg %p176
    $region30: #{ca_sa_forward.1} parent=5 // pred_check_branch
      %179 = sbr.rel (%p177) target = $region32
    $region31: #{ca_sa_forward.1} parent=5 // pred_region
      // Predicated region
      $region33: #{ca_sa_forward.1} parent=31 // pred_check
        %p180 = pneg %p33
      $region34: #{ca_sa_forward.1} parent=31 // pred_check_branch
        %182 = sbr.rel (%p180) target = $region36
      $region35: #{ca_sa_forward.1} parent=31 // pred_region
        %p183 = scmp.lt.s32.totalorder %s13, 1
        %s184 = scalar_select %p183, %s13, 1
        %s185 = smul.addr %s184, 2
        %s186 = smul.addr %s185, 4
        %s187 = scalar_lea.vmem %s0, %s186
      $region36: #{ca_sa_forward.1} parent=31 // pred_fallthru
        _
    $region32: #{ca_sa_forward.1} parent=5 // pred_fallthru
      _
    %p188 = scmp.le.s32.totalorder 1, %s13
    %p189 = scmp.lt.s32.totalorder %s13, 3
    %p190 = pnand %p188, %p189
    %p191 = pneg %p190
    // Predicated region
    $region37: #{ca_sa_forward.1} parent=5 // pred_check
      _
    $region38: #{ca_sa_forward.1} parent=5 // pred_check_branch
      %193 = sbr.rel (%p190) target = $region40
    $region39: #{ca_sa_forward.1} parent=5 // pred_region
      %s194 = ssub.s32 %s13, 1
      %p195 = scmp.lt.s32.totalorder %s18, 1
      %s196 = scalar_select %p195, %s18, 1
      %s197 = smul.addr %s196, 2
      %s198 = smul.addr %s197, 4
      %s199 = scalar_lea.vmem %s0, %s198
      %p200 = pneg %p39
      %p201 = pneg %p36
      %p202 = pneg %p60
      %p203 = pneg %p57
      %p204 = pneg %p81
      %p205 = pneg %p78
      %p206 = pneg %p102
      %p207 = pneg %p99
      %p208 = pneg %p123
      %p209 = pneg %p120
      %p210 = pneg %p149
      %p211 = pneg %p146
      %p212 = scmp.lt.s32.totalorder %s18, 1
      %s213 = scalar_select %p212, %s18, 1
      %s214 = smul.addr %s213, 2
      %s215 = smul.addr %s214, 4
      %s216 = scalar_lea.vmem %s5, %s215
      %p217 = scmp.lt.s32.totalorder %s18, 1
      %s218 = scalar_select %p217, %s18, 1
      %s219 = smul.addr %s218, 2
      %s220 = smul.addr %s219, 4
      %s221 = scalar_lea.vmem %s0, %s220
      %p222 = scmp.lt.s32.totalorder %s18, 1
      %s223 = scalar_select %p222, %s18, 1
      %s224 = smul.addr %s223, 2
      %s225 = smul.addr %s224, 4
      %s226 = scalar_lea.vmem %s5, %s225
      %v227 = vld [vmem:[%s221] sm:$0xff]
      %v229 = vcombine.high %v227, %v227
      %vm231 = vcmask 1043456
      %v232 = vsel %vm231, %v227, 0.0
      %v233 = vsel %vm231, %v229, 0.0
      %v234 = vadd.f32 %v232, %v233
      %235 = vadd.xlane.f32.xlu0 %v234
      %v236 = vpop.xlane.xlu0 %235
      %v237 = vmul.f32 %v236, 0.00390625
      %v238 = vsel %vm231, %v227, -inf
      %v239 = vsel %vm231, %v229, -inf
      %v240 = vmax.f32 %v238, %v239
      %241 = vmax.xlane.f32.xlu0 %v240
      %v242 = vpop.xlane.xlu0 %241
      %v243 = vadd.f32 %v237, %v242
      %v244 = vld [vmem:[%s1] sm:$0xf]
      %s245 = sld [smem:[#allocation2]]
      %s246 = smul.f32 %s245, 2.0
      %v247 = vstv %s246
      %v249 = vlaneseq
      %v250 = vand.u32 %v249, 127
      %v251 = vlaneseq
      %v252 = vshrl.u32 %v251, 7
      %v253 = vsub.s32 %v250, %v252
      %v254 = vrot.slane %v243, %v253
      %vm255 = vcmask 31744
      %v256 = vsel %vm255, %v254, 0
      %v259 = vsel %vm231, %v244, 0
      %261 = vmatprep.subr.mxu0 0.0
      %262 = vmatpush1.msra.mxu0 0.0
      %263 = vmatprep.subr.mxu0 0.0
      %264 = vmatpush1.msra.mxu0 0.0
      %265 = vmatprep.subr.mxu0 0.0
      %266 = vmatpush1.msra.mxu0 0.0
      %267 = vmatprep.subr.mxu0 0.0
      %268 = vmatpush1.msra.mxu0 0.0
      %269 = vmatprep.subr.mxu0 0.0
      %270 = vmatpush1.msra.mxu0 0.0
      %271 = vmatprep.subr.mxu0 0.0
      %272 = vmatpush1.msra.mxu0 0.0
      %273 = vmatprep.subr.mxu0 0.0
      %274 = vmatpush1.msra.mxu0 0.0
      %275 = vmatprep.subr.mxu0 0.0
      %276 = vmatpush1.msra.mxu0 0.0
      %277 = vmatprep.subr.mxu0 0.0
      %278 = vmatpush1.msra.mxu0 0.0
      %279 = vmatprep.subr.mxu0 0.0
      %280 = vmatpush1.msra.mxu0 0.0
      %281 = vmatprep.subr.mxu0 0.0
      %282 = vmatpush1.msra.mxu0 0.0
      %283 = vmatprep.subr.mxu0 0.0
      %284 = vmatpush1.msra.mxu0 0.0
      %285 = vmatprep.subr.mxu0 0.0
      %286 = vmatpush1.msra.mxu0 0.0
      %287 = vmatprep.subr.mxu0 0.0
      %288 = vmatpush1.msra.mxu0 0.0
      %289 = vmatprep.subr.mxu0 0.0
      %290 = vmatpush1.msra.mxu0 0.0
      %291 = vmatprep.subr.mxu0 0.0
      %v292 = vand.u32 %v259, 4294901760
      %293 = vmatpush1.msra.mxu0 %v292
      %294 = vmatprep.subr.mxu0 0.0
      %295 = vmatpush2.msra.mxu0 0.0
      %296 = vmatprep.subr.mxu0 0.0
      %297 = vmatpush2.msra.mxu0 0.0
      %298 = vmatprep.subr.mxu0 0.0
      %299 = vmatpush2.msra.mxu0 0.0
      %300 = vmatprep.subr.mxu0 0.0
      %301 = vmatpush2.msra.mxu0 0.0
      %302 = vmatprep.subr.mxu0 0.0
      %303 = vmatpush2.msra.mxu0 0.0
      %304 = vmatprep.subr.mxu0 0.0
      %305 = vmatpush2.msra.mxu0 0.0
      %306 = vmatprep.subr.mxu0 0.0
      %307 = vmatpush2.msra.mxu0 0.0
      %308 = vmatprep.subr.mxu0 0.0
      %309 = vmatpush2.msra.mxu0 0.0
      %310 = vmatprep.subr.mxu0 0.0
      %311 = vmatpush2.msra.mxu0 0.0
      %312 = vmatprep.subr.mxu0 0.0
      %313 = vmatpush2.msra.mxu0 0.0
      %314 = vmatprep.subr.mxu0 0.0
      %315 = vmatpush2.msra.mxu0 0.0
      %316 = vmatprep.subr.mxu0 0.0
      %317 = vmatpush2.msra.mxu0 0.0
      %318 = vmatprep.subr.mxu0 0.0
      %319 = vmatpush2.msra.mxu0 0.0
      %320 = vmatprep.subr.mxu0 0.0
      %321 = vmatpush2.msra.mxu0 0.0
      %322 = vmatprep.subr.mxu0 0.0
      %323 = vmatpush2.msra.mxu0 0.0
      %324 = vmatprep.subr.mxu0 0.0
      %325 = vmatpush2.msra.mxu0 0.0
      %326 = vmatprep.mubr.f32.mxu0 0.0
      %v327 = vand.u32 %v256, 4294901760
      %v328 = vsub.f32 %v256, %v327
      %v329 = vand.u32 %v328, 4294901760
      %v330 = vsub.f32 %v328, %v329
      %v331 = vand.u32 %v330, 4294901760
      %332 = vmatmul.mubr.f32.gmra.mxu0 %v331
      %v333 = vpop.f32.mrf.mxu0
      %v334 = vadd.f32 %v247, %v333
      %v335 = vpop.f32.mrf.mxu0
      %336 = vdwg.mxu0
      %337 = vmatprep.subr.mxu0 0.0
      %338 = vmatpush1.msra.mxu0 0.0
      %339 = vmatprep.subr.mxu0 0.0
      %340 = vmatpush1.msra.mxu0 0.0
      %341 = vmatprep.subr.mxu0 0.0
      %342 = vmatpush1.msra.mxu0 0.0
      %343 = vmatprep.subr.mxu0 0.0
      %344 = vmatpush1.msra.mxu0 0.0
      %345 = vmatprep.subr.mxu0 0.0
      %346 = vmatpush1.msra.mxu0 0.0
      %347 = vmatprep.subr.mxu0 0.0
      %348 = vmatpush1.msra.mxu0 0.0
      %349 = vmatprep.subr.mxu0 0.0
      %350 = vmatpush1.msra.mxu0 0.0
      %351 = vmatprep.subr.mxu0 0.0
      %352 = vmatpush1.msra.mxu0 0.0
      %353 = vmatprep.subr.mxu0 0.0
      %354 = vmatpush1.msra.mxu0 0.0
      %355 = vmatprep.subr.mxu0 0.0
      %356 = vmatpush1.msra.mxu0 0.0
      %357 = vmatprep.subr.mxu0 0.0
      %358 = vmatpush1.msra.mxu0 0.0
      %359 = vmatprep.subr.mxu0 0.0
      %360 = vmatpush1.msra.mxu0 0.0
      %361 = vmatprep.subr.mxu0 0.0
      %362 = vmatpush1.msra.mxu0 0.0
      %363 = vmatprep.subr.mxu0 0.0
      %364 = vmatpush1.msra.mxu0 0.0
      %365 = vmatprep.subr.mxu0 0.0
      %366 = vmatpush1.msra.mxu0 0.0
      %367 = vmatprep.subr.mxu0 0.0
      %v368 = vand.u32 %v259, 4294901760
      %v369 = vsub.f32 %v259, %v368
      %v370 = vand.u32 %v369, 4294901760
      %v371 = vsub.f32 %v369, %v370
      %v372 = vand.u32 %v371, 4294901760
      %373 = vmatpush1.msra.mxu0 %v372
      %374 = vmatprep.subr.mxu0 0.0
      %375 = vmatpush2.msra.mxu0 0.0
      %376 = vmatprep.subr.mxu0 0.0
      %377 = vmatpush2.msra.mxu0 0.0
      %378 = vmatprep.subr.mxu0 0.0
      %379 = vmatpush2.msra.mxu0 0.0
      %380 = vmatprep.subr.mxu0 0.0
      %381 = vmatpush2.msra.mxu0 0.0
      %382 = vmatprep.subr.mxu0 0.0
      %383 = vmatpush2.msra.mxu0 0.0
      %384 = vmatprep.subr.mxu0 0.0
      %385 = vmatpush2.msra.mxu0 0.0
      %386 = vmatprep.subr.mxu0 0.0
      %387 = vmatpush2.msra.mxu0 0.0
      %388 = vmatprep.subr.mxu0 0.0
      %389 = vmatpush2.msra.mxu0 0.0
      %390 = vmatprep.subr.mxu0 0.0
      %391 = vmatpush2.msra.mxu0 0.0
      %392 = vmatprep.subr.mxu0 0.0
      %393 = vmatpush2.msra.mxu0 0.0
      %394 = vmatprep.subr.mxu0 0.0
      %395 = vmatpush2.msra.mxu0 0.0
      %396 = vmatprep.subr.mxu0 0.0
      %397 = vmatpush2.msra.mxu0 0.0
      %398 = vmatprep.subr.mxu0 0.0
      %399 = vmatpush2.msra.mxu0 0.0
      %400 = vmatprep.subr.mxu0 0.0
      %401 = vmatpush2.msra.mxu0 0.0
      %402 = vmatprep.subr.mxu0 0.0
      %403 = vmatpush2.msra.mxu0 0.0
      %404 = vmatprep.subr.mxu0 0.0
      %405 = vmatpush2.msra.mxu0 0.0
      %406 = vmatprep.mubr.f32.mxu0 0.0
      %v407 = vand.u32 %v256, 4294901760
      %408 = vmatmul.mubr.f32.gmra.mxu0 %v407
      %v409 = vpop.f32.mrf.mxu0
      %v410 = vadd.f32 %v334, %v409
      %v411 = vpop.f32.mrf.mxu0
      %412 = vdwg.mxu0
      %413 = vmatprep.subr.mxu0 0.0
      %414 = vmatpush1.msra.mxu0 0.0
      %415 = vmatprep.subr.mxu0 0.0
      %416 = vmatpush1.msra.mxu0 0.0
      %417 = vmatprep.subr.mxu0 0.0
      %418 = vmatpush1.msra.mxu0 0.0
      %419 = vmatprep.subr.mxu0 0.0
      %420 = vmatpush1.msra.mxu0 0.0
      %421 = vmatprep.subr.mxu0 0.0
      %422 = vmatpush1.msra.mxu0 0.0
      %423 = vmatprep.subr.mxu0 0.0
      %424 = vmatpush1.msra.mxu0 0.0
      %425 = vmatprep.subr.mxu0 0.0
      %426 = vmatpush1.msra.mxu0 0.0
      %427 = vmatprep.subr.mxu0 0.0
      %428 = vmatpush1.msra.mxu0 0.0
      %429 = vmatprep.subr.mxu0 0.0
      %430 = vmatpush1.msra.mxu0 0.0
      %431 = vmatprep.subr.mxu0 0.0
      %432 = vmatpush1.msra.mxu0 0.0
      %433 = vmatprep.subr.mxu0 0.0
      %434 = vmatpush1.msra.mxu0 0.0
      %435 = vmatprep.subr.mxu0 0.0
      %436 = vmatpush1.msra.mxu0 0.0
      %437 = vmatprep.subr.mxu0 0.0
      %438 = vmatpush1.msra.mxu0 0.0
      %439 = vmatprep.subr.mxu0 0.0
      %440 = vmatpush1.msra.mxu0 0.0
      %441 = vmatprep.subr.mxu0 0.0
      %442 = vmatpush1.msra.mxu0 0.0
      %443 = vmatprep.subr.mxu0 0.0
      %v444 = vand.u32 %v259, 4294901760
      %v445 = vsub.f32 %v259, %v444
      %446 = vmatpush1.msra.mxu0 %v445
      %447 = vmatprep.subr.mxu0 0.0
      %448 = vmatpush2.msra.mxu0 0.0
      %449 = vmatprep.subr.mxu0 0.0
      %450 = vmatpush2.msra.mxu0 0.0
      %451 = vmatprep.subr.mxu0 0.0
      %452 = vmatpush2.msra.mxu0 0.0
      %453 = vmatprep.subr.mxu0 0.0
      %454 = vmatpush2.msra.mxu0 0.0
      %455 = vmatprep.subr.mxu0 0.0
      %456 = vmatpush2.msra.mxu0 0.0
      %457 = vmatprep.subr.mxu0 0.0
      %458 = vmatpush2.msra.mxu0 0.0
      %459 = vmatprep.subr.mxu0 0.0
      %460 = vmatpush2.msra.mxu0 0.0
      %461 = vmatprep.subr.mxu0 0.0
      %462 = vmatpush2.msra.mxu0 0.0
      %463 = vmatprep.subr.mxu0 0.0
      %464 = vmatpush2.msra.mxu0 0.0
      %465 = vmatprep.subr.mxu0 0.0
      %466 = vmatpush2.msra.mxu0 0.0
      %467 = vmatprep.subr.mxu0 0.0
      %468 = vmatpush2.msra.mxu0 0.0
      %469 = vmatprep.subr.mxu0 0.0
      %470 = vmatpush2.msra.mxu0 0.0
      %471 = vmatprep.subr.mxu0 0.0
      %472 = vmatpush2.msra.mxu0 0.0
      %473 = vmatprep.subr.mxu0 0.0
      %474 = vmatpush2.msra.mxu0 0.0
      %475 = vmatprep.subr.mxu0 0.0
      %476 = vmatpush2.msra.mxu0 0.0
      %477 = vmatprep.subr.mxu0 0.0
      %478 = vmatpush2.msra.mxu0 0.0
      %479 = vmatprep.mubr.f32.mxu0 0.0
      %v480 = vand.u32 %v256, 4294901760
      %v481 = vsub.f32 %v256, %v480
      %482 = vmatmul.mubr.f32.gmra.mxu0 %v481
      %v483 = vpop.f32.mrf.mxu0
      %v484 = vadd.f32 %v410, %v483
      %v485 = vpop.f32.mrf.mxu0
      %486 = vdwg.mxu0
      %487 = vmatprep.subr.mxu0 0.0
      %488 = vmatpush1.msra.mxu0 0.0
      %489 = vmatprep.subr.mxu0 0.0
      %490 = vmatpush1.msra.mxu0 0.0
      %491 = vmatprep.subr.mxu0 0.0
      %492 = vmatpush1.msra.mxu0 0.0
      %493 = vmatprep.subr.mxu0 0.0
      %494 = vmatpush1.msra.mxu0 0.0
      %495 = vmatprep.subr.mxu0 0.0
      %496 = vmatpush1.msra.mxu0 0.0
      %497 = vmatprep.subr.mxu0 0.0
      %498 = vmatpush1.msra.mxu0 0.0
      %499 = vmatprep.subr.mxu0 0.0
      %500 = vmatpush1.msra.mxu0 0.0
      %501 = vmatprep.subr.mxu0 0.0
      %502 = vmatpush1.msra.mxu0 0.0
      %503 = vmatprep.subr.mxu0 0.0
      %504 = vmatpush1.msra.mxu0 0.0
      %505 = vmatprep.subr.mxu0 0.0
      %506 = vmatpush1.msra.mxu0 0.0
      %507 = vmatprep.subr.mxu0 0.0
      %508 = vmatpush1.msra.mxu0 0.0
      %509 = vmatprep.subr.mxu0 0.0
      %510 = vmatpush1.msra.mxu0 0.0
      %511 = vmatprep.subr.mxu0 0.0
      %512 = vmatpush1.msra.mxu0 0.0
      %513 = vmatprep.subr.mxu0 0.0
      %514 = vmatpush1.msra.mxu0 0.0
      %515 = vmatprep.subr.mxu0 0.0
      %516 = vmatpush1.msra.mxu0 0.0
      %517 = vmatprep.subr.mxu0 0.0
      %v518 = vand.u32 %v259, 4294901760
      %519 = vmatpush1.msra.mxu0 %v518
      %520 = vmatprep.subr.mxu0 0.0
      %521 = vmatpush2.msra.mxu0 0.0
      %522 = vmatprep.subr.mxu0 0.0
      %523 = vmatpush2.msra.mxu0 0.0
      %524 = vmatprep.subr.mxu0 0.0
      %525 = vmatpush2.msra.mxu0 0.0
      %526 = vmatprep.subr.mxu0 0.0
      %527 = vmatpush2.msra.mxu0 0.0
      %528 = vmatprep.subr.mxu0 0.0
      %529 = vmatpush2.msra.mxu0 0.0
      %530 = vmatprep.subr.mxu0 0.0
      %531 = vmatpush2.msra.mxu0 0.0
      %532 = vmatprep.subr.mxu0 0.0
      %533 = vmatpush2.msra.mxu0 0.0
      %534 = vmatprep.subr.mxu0 0.0
      %535 = vmatpush2.msra.mxu0 0.0
      %536 = vmatprep.subr.mxu0 0.0
      %537 = vmatpush2.msra.mxu0 0.0
      %538 = vmatprep.subr.mxu0 0.0
      %539 = vmatpush2.msra.mxu0 0.0
      %540 = vmatprep.subr.mxu0 0.0
      %541 = vmatpush2.msra.mxu0 0.0
      %542 = vmatprep.subr.mxu0 0.0
      %543 = vmatpush2.msra.mxu0 0.0
      %544 = vmatprep.subr.mxu0 0.0
      %545 = vmatpush2.msra.mxu0 0.0
      %546 = vmatprep.subr.mxu0 0.0
      %547 = vmatpush2.msra.mxu0 0.0
      %548 = vmatprep.subr.mxu0 0.0
      %549 = vmatpush2.msra.mxu0 0.0
      %550 = vmatprep.subr.mxu0 0.0
      %551 = vmatpush2.msra.mxu0 0.0
      %552 = vmatprep.mubr.f32.mxu0 0.0
      %v553 = vand.u32 %v256, 4294901760
      %v554 = vsub.f32 %v256, %v553
      %v555 = vand.u32 %v554, 4294901760
      %556 = vmatmul.mubr.f32.gmra.mxu0 %v555
      %v557 = vpop.f32.mrf.mxu0
      %v558 = vadd.f32 %v484, %v557
      %v559 = vpop.f32.mrf.mxu0
      %560 = vdwg.mxu0
      %561 = vmatprep.subr.mxu0 0.0
      %562 = vmatpush1.msra.mxu0 0.0
      %563 = vmatprep.subr.mxu0 0.0
      %564 = vmatpush1.msra.mxu0 0.0
      %565 = vmatprep.subr.mxu0 0.0
      %566 = vmatpush1.msra.mxu0 0.0
      %567 = vmatprep.subr.mxu0 0.0
      %568 = vmatpush1.msra.mxu0 0.0
      %569 = vmatprep.subr.mxu0 0.0
      %570 = vmatpush1.msra.mxu0 0.0
      %571 = vmatprep.subr.mxu0 0.0
      %572 = vmatpush1.msra.mxu0 0.0
      %573 = vmatprep.subr.mxu0 0.0
      %574 = vmatpush1.msra.mxu0 0.0
      %575 = vmatprep.subr.mxu0 0.0
      %576 = vmatpush1.msra.mxu0 0.0
      %577 = vmatprep.subr.mxu0 0.0
      %578 = vmatpush1.msra.mxu0 0.0
      %579 = vmatprep.subr.mxu0 0.0
      %580 = vmatpush1.msra.mxu0 0.0
      %581 = vmatprep.subr.mxu0 0.0
      %582 = vmatpush1.msra.mxu0 0.0
      %583 = vmatprep.subr.mxu0 0.0
      %584 = vmatpush1.msra.mxu0 0.0
      %585 = vmatprep.subr.mxu0 0.0
      %586 = vmatpush1.msra.mxu0 0.0
      %587 = vmatprep.subr.mxu0 0.0
      %588 = vmatpush1.msra.mxu0 0.0
      %589 = vmatprep.subr.mxu0 0.0
      %590 = vmatpush1.msra.mxu0 0.0
      %591 = vmatprep.subr.mxu0 0.0
      %v592 = vand.u32 %v259, 4294901760
      %v593 = vsub.f32 %v259, %v592
      %v594 = vand.u32 %v593, 4294901760
      %595 = vmatpush1.msra.mxu0 %v594
      %596 = vmatprep.subr.mxu0 0.0
      %597 = vmatpush2.msra.mxu0 0.0
      %598 = vmatprep.subr.mxu0 0.0
      %599 = vmatpush2.msra.mxu0 0.0
      %600 = vmatprep.subr.mxu0 0.0
      %601 = vmatpush2.msra.mxu0 0.0
      %602 = vmatprep.subr.mxu0 0.0
      %603 = vmatpush2.msra.mxu0 0.0
      %604 = vmatprep.subr.mxu0 0.0
      %605 = vmatpush2.msra.mxu0 0.0
      %606 = vmatprep.subr.mxu0 0.0
      %607 = vmatpush2.msra.mxu0 0.0
      %608 = vmatprep.subr.mxu0 0.0
      %609 = vmatpush2.msra.mxu0 0.0
      %610 = vmatprep.subr.mxu0 0.0
      %611 = vmatpush2.msra.mxu0 0.0
      %612 = vmatprep.subr.mxu0 0.0
      %613 = vmatpush2.msra.mxu0 0.0
      %614 = vmatprep.subr.mxu0 0.0
      %615 = vmatpush2.msra.mxu0 0.0
      %616 = vmatprep.subr.mxu0 0.0
      %617 = vmatpush2.msra.mxu0 0.0
      %618 = vmatprep.subr.mxu0 0.0
      %619 = vmatpush2.msra.mxu0 0.0
      %620 = vmatprep.subr.mxu0 0.0
      %621 = vmatpush2.msra.mxu0 0.0
      %622 = vmatprep.subr.mxu0 0.0
      %623 = vmatpush2.msra.mxu0 0.0
      %624 = vmatprep.subr.mxu0 0.0
      %625 = vmatpush2.msra.mxu0 0.0
      %626 = vmatprep.subr.mxu0 0.0
      %627 = vmatpush2.msra.mxu0 0.0
      %628 = vmatprep.mubr.f32.mxu0 0.0
      %v629 = vand.u32 %v256, 4294901760
      %630 = vmatmul.mubr.f32.gmra.mxu0 %v629
      %v631 = vpop.f32.mrf.mxu0
      %v632 = vadd.f32 %v558, %v631
      %v633 = vpop.f32.mrf.mxu0
      %634 = vdwg.mxu0
      %635 = vmatprep.subr.mxu0 0.0
      %636 = vmatpush1.msra.mxu0 0.0
      %637 = vmatprep.subr.mxu0 0.0
      %638 = vmatpush1.msra.mxu0 0.0
      %639 = vmatprep.subr.mxu0 0.0
      %640 = vmatpush1.msra.mxu0 0.0
      %641 = vmatprep.subr.mxu0 0.0
      %642 = vmatpush1.msra.mxu0 0.0
      %643 = vmatprep.subr.mxu0 0.0
      %644 = vmatpush1.msra.mxu0 0.0
      %645 = vmatprep.subr.mxu0 0.0
      %646 = vmatpush1.msra.mxu0 0.0
      %647 = vmatprep.subr.mxu0 0.0
      %648 = vmatpush1.msra.mxu0 0.0
      %649 = vmatprep.subr.mxu0 0.0
      %650 = vmatpush1.msra.mxu0 0.0
      %651 = vmatprep.subr.mxu0 0.0
      %652 = vmatpush1.msra.mxu0 0.0
      %653 = vmatprep.subr.mxu0 0.0
      %654 = vmatpush1.msra.mxu0 0.0
      %655 = vmatprep.subr.mxu0 0.0
      %656 = vmatpush1.msra.mxu0 0.0
      %657 = vmatprep.subr.mxu0 0.0
      %658 = vmatpush1.msra.mxu0 0.0
      %659 = vmatprep.subr.mxu0 0.0
      %660 = vmatpush1.msra.mxu0 0.0
      %661 = vmatprep.subr.mxu0 0.0
      %662 = vmatpush1.msra.mxu0 0.0
      %663 = vmatprep.subr.mxu0 0.0
      %664 = vmatpush1.msra.mxu0 0.0
      %665 = vmatprep.subr.mxu0 0.0
      %v666 = vand.u32 %v259, 4294901760
      %667 = vmatpush1.msra.mxu0 %v666
      %668 = vmatprep.subr.mxu0 0.0
      %669 = vmatpush2.msra.mxu0 0.0
      %670 = vmatprep.subr.mxu0 0.0
      %671 = vmatpush2.msra.mxu0 0.0
      %672 = vmatprep.subr.mxu0 0.0
      %673 = vmatpush2.msra.mxu0 0.0
      %674 = vmatprep.subr.mxu0 0.0
      %675 = vmatpush2.msra.mxu0 0.0
      %676 = vmatprep.subr.mxu0 0.0
      %677 = vmatpush2.msra.mxu0 0.0
      %678 = vmatprep.subr.mxu0 0.0
      %679 = vmatpush2.msra.mxu0 0.0
      %680 = vmatprep.subr.mxu0 0.0
      %681 = vmatpush2.msra.mxu0 0.0
      %682 = vmatprep.subr.mxu0 0.0
      %683 = vmatpush2.msra.mxu0 0.0
      %684 = vmatprep.subr.mxu0 0.0
      %685 = vmatpush2.msra.mxu0 0.0
      %686 = vmatprep.subr.mxu0 0.0
      %687 = vmatpush2.msra.mxu0 0.0
      %688 = vmatprep.subr.mxu0 0.0
      %689 = vmatpush2.msra.mxu0 0.0
      %690 = vmatprep.subr.mxu0 0.0
      %691 = vmatpush2.msra.mxu0 0.0
      %692 = vmatprep.subr.mxu0 0.0
      %693 = vmatpush2.msra.mxu0 0.0
      %694 = vmatprep.subr.mxu0 0.0
      %695 = vmatpush2.msra.mxu0 0.0
      %696 = vmatprep.subr.mxu0 0.0
      %697 = vmatpush2.msra.mxu0 0.0
      %698 = vmatprep.subr.mxu0 0.0
      %699 = vmatpush2.msra.mxu0 0.0
      %700 = vmatprep.mubr.f32.mxu0 0.0
      %v701 = vand.u32 %v256, 4294901760
      %702 = vmatmul.mubr.f32.gmra.mxu0 %v701
      %v703 = vpop.f32.mrf.mxu0
      %v704 = vadd.f32 %v632, %v703
      %v705 = vpop.f32.mrf.mxu0
      %706 = vdwg.mxu0
      %v707 = vxor.u32 %v704, 2147483648
      %v708 = vmul.f32 %v707, 1.442695
      %v709 = vpow.pop %v708
      %v710 = vadd.f32 %v709, 1.0
      %v711 = vrcp.pop %v710
      %v712 = vmul.f32 1.0, %v711
      %v713 = vlaneseq
      %v714 = vshrl.u32 %v713, 7
      %v715 = vsub.s32 0, %v714
      %v716 = vrot.slane %v712, %v715
      %718 = vbcast.lane.b32.xlu0 %v716, 256
      %v719 = vpop.permute.xlu0 %718
      %v722 = vunpack.c.l.s4 839922192
      %v723 = vunpack.c.0.s8 %v722
      %v724 = vlaneseq
      %v725 = vshrl.u32 %v724, 7
      %v726 = vsub.s32 %v723, %v725
      %v727 = vrot.slane %v719, %v726
      %v729 = vmul.f32 %v227, %v727
      %v731 = vcombine.high %v729, %v729
      %v733 = vsel %vm231, %v729, -inf
      %v734 = vrot.slane %v733, 4
      %v735 = vmax.f32 %v733, %v734
      %v736 = vrot.slane %v735, 2
      %v737 = vmax.f32 %v735, %v736
      %v738 = vrot.slane %v737, 1
      %v739 = vmax.f32 %v737, %v738
      %v740 = vsel %vm231, %v731, -inf
      %v741 = vrot.slane %v740, 4
      %v742 = vmax.f32 %v740, %v741
      %v743 = vrot.slane %v742, 2
      %v744 = vmax.f32 %v742, %v743
      %v745 = vrot.slane %v744, 1
      %v746 = vmax.f32 %v744, %v745
      %v747 = vsel %vm231, %v729, 0.0
      %v748 = vrot.slane %v747, 4
      %v749 = vadd.f32 %v747, %v748
      %v750 = vrot.slane %v749, 2
      %v751 = vadd.f32 %v749, %v750
      %v752 = vrot.slane %v751, 1
      %v753 = vadd.f32 %v751, %v752
      %v754 = vsel %vm231, %v731, 0.0
      %v755 = vrot.slane %v754, 4
      %v756 = vadd.f32 %v754, %v755
      %v757 = vrot.slane %v756, 2
      %v758 = vadd.f32 %v756, %v757
      %v759 = vrot.slane %v758, 1
      %v760 = vadd.f32 %v758, %v759
      %v761 = vmul.f32 %v753, 0.25
      %v762 = vmul.f32 %v760, 0.25
      %v763 = vld [vmem:[%s2] sm:$0xff]
      %v764 = vld [vmem:[%s2 + $0x8] sm:$0xff]
      %v765 = vld [vmem:[%s2 + $0x10] sm:$0xff]
      %v766 = vld [vmem:[%s2 + $0x18] sm:$0xff]
      %v767 = vld [vmem:[%s2 + $0x20] sm:$0xff]
      %v768 = vld [vmem:[%s2 + $0x28] sm:$0xff]
      %v769 = vld [vmem:[%s2 + $0x30] sm:$0xff]
      %v770 = vld [vmem:[%s2 + $0x38] sm:$0xff]
      %v771 = vld [vmem:[%s2 + $0x40] sm:$0xff]
      %v772 = vld [vmem:[%s2 + $0x48] sm:$0xff]
      %v773 = vld [vmem:[%s2 + $0x50] sm:$0xff]
      %v774 = vld [vmem:[%s2 + $0x58] sm:$0xff]
      %v775 = vld [vmem:[%s2 + $0x60] sm:$0xff]
      %v776 = vld [vmem:[%s2 + $0x68] sm:$0xff]
      %v777 = vld [vmem:[%s2 + $0x70] sm:$0xff]
      %v778 = vld [vmem:[%s2 + $0x78] sm:$0xff]
      %v779 = vld [vmem:[%s2 + $0x80] sm:$0xff]
      %v780 = vld [vmem:[%s2 + $0x88] sm:$0xff]
      %v781 = vld [vmem:[%s2 + $0x90] sm:$0xff]
      %v782 = vld [vmem:[%s2 + $0x98] sm:$0xff]
      %v783 = vld [vmem:[%s2 + $0xa0] sm:$0xff]
      %v784 = vld [vmem:[%s2 + $0xa8] sm:$0xff]
      %v785 = vld [vmem:[%s2 + $0xb0] sm:$0xff]
      %v786 = vld [vmem:[%s2 + $0xb8] sm:$0xff]
      %v787 = vld [vmem:[%s2 + $0xc0] sm:$0xff]
      %v788 = vld [vmem:[%s2 + $0xc8] sm:$0xff]
      %v789 = vld [vmem:[%s2 + $0xd0] sm:$0xff]
      %v790 = vld [vmem:[%s2 + $0xd8] sm:$0xff]
      %v791 = vld [vmem:[%s2 + $0xe0] sm:$0xff]
      %v792 = vld [vmem:[%s2 + $0xe8] sm:$0xff]
      %v793 = vld [vmem:[%s2 + $0xf0] sm:$0xff]
      %v794 = vld [vmem:[%s2 + $0xf8] sm:$0xff]
      %v795 = vld [vmem:[%s2 + $0x100] sm:$0xff]
      %v796 = vld [vmem:[%s2 + $0x108] sm:$0xff]
      %v797 = vld [vmem:[%s2 + $0x110] sm:$0xff]
      %v798 = vld [vmem:[%s2 + $0x118] sm:$0xff]
      %v799 = vld [vmem:[%s2 + $0x120] sm:$0xff]
      %v800 = vld [vmem:[%s2 + $0x128] sm:$0xff]
      %v801 = vld [vmem:[%s2 + $0x130] sm:$0xff]
      %v802 = vld [vmem:[%s2 + $0x138] sm:$0xff]
      %v803 = vld [vmem:[%s2 + $0x140] sm:$0xff]
      %v804 = vld [vmem:[%s2 + $0x148] sm:$0xff]
      %v805 = vld [vmem:[%s2 + $0x150] sm:$0xff]
      %v806 = vld [vmem:[%s2 + $0x158] sm:$0xff]
      %v807 = vld [vmem:[%s2 + $0x160] sm:$0xff]
      %v808 = vld [vmem:[%s2 + $0x168] sm:$0xff]
      %v809 = vld [vmem:[%s2 + $0x170] sm:$0xff]
      %v810 = vld [vmem:[%s2 + $0x178] sm:$0xff]
      %v811 = vld [vmem:[%s2 + $0x180] sm:$0xff]
      %v812 = vld [vmem:[%s2 + $0x188] sm:$0xff]
      %v813 = vld [vmem:[%s2 + $0x190] sm:$0xff]
      %v814 = vld [vmem:[%s2 + $0x198] sm:$0xff]
      %v815 = vld [vmem:[%s2 + $0x1a0] sm:$0xff]
      %v816 = vld [vmem:[%s2 + $0x1a8] sm:$0xff]
      %v817 = vld [vmem:[%s2 + $0x1b0] sm:$0xff]
      %v818 = vld [vmem:[%s2 + $0x1b8] sm:$0xff]
      %v819 = vld [vmem:[%s2 + $0x1c0] sm:$0xff]
      %v820 = vld [vmem:[%s2 + $0x1c8] sm:$0xff]
      %v821 = vld [vmem:[%s2 + $0x1d0] sm:$0xff]
      %v822 = vld [vmem:[%s2 + $0x1d8] sm:$0xff]
      %v823 = vld [vmem:[%s2 + $0x1e0] sm:$0xff]
      %v824 = vld [vmem:[%s2 + $0x1e8] sm:$0xff]
      %v825 = vld [vmem:[%s2 + $0x1f0] sm:$0xff]
      %v826 = vld [vmem:[%s2 + $0x1f8] sm:$0xff]
      %s827 = scalar_lea.vmem %s2, 512
      %v828 = vld [vmem:[%s827] sm:$0xff]
      %v829 = vld [vmem:[%s827 + $0x8] sm:$0xff]
      %v830 = vld [vmem:[%s827 + $0x10] sm:$0xff]
      %v831 = vld [vmem:[%s827 + $0x18] sm:$0xff]
      %v832 = vld [vmem:[%s827 + $0x20] sm:$0xff]
      %v833 = vld [vmem:[%s827 + $0x28] sm:$0xff]
      %v834 = vld [vmem:[%s827 + $0x30] sm:$0xff]
      %v835 = vld [vmem:[%s827 + $0x38] sm:$0xff]
      %v836 = vld [vmem:[%s827 + $0x40] sm:$0xff]
      %v837 = vld [vmem:[%s827 + $0x48] sm:$0xff]
      %v838 = vld [vmem:[%s827 + $0x50] sm:$0xff]
      %v839 = vld [vmem:[%s827 + $0x58] sm:$0xff]
      %v840 = vld [vmem:[%s827 + $0x60] sm:$0xff]
      %v841 = vld [vmem:[%s827 + $0x68] sm:$0xff]
      %v842 = vld [vmem:[%s827 + $0x70] sm:$0xff]
      %v843 = vld [vmem:[%s827 + $0x78] sm:$0xff]
      %v844 = vld [vmem:[%s827 + $0x80] sm:$0xff]
      %v845 = vld [vmem:[%s827 + $0x88] sm:$0xff]
      %v846 = vld [vmem:[%s827 + $0x90] sm:$0xff]
      %v847 = vld [vmem:[%s827 + $0x98] sm:$0xff]
      %v848 = vld [vmem:[%s827 + $0xa0] sm:$0xff]
      %v849 = vld [vmem:[%s827 + $0xa8] sm:$0xff]
      %v850 = vld [vmem:[%s827 + $0xb0] sm:$0xff]
      %v851 = vld [vmem:[%s827 + $0xb8] sm:$0xff]
      %v852 = vld [vmem:[%s827 + $0xc0] sm:$0xff]
      %v853 = vld [vmem:[%s827 + $0xc8] sm:$0xff]
      %v854 = vld [vmem:[%s827 + $0xd0] sm:$0xff]
      %v855 = vld [vmem:[%s827 + $0xd8] sm:$0xff]
      %v856 = vld [vmem:[%s827 + $0xe0] sm:$0xff]
      %v857 = vld [vmem:[%s827 + $0xe8] sm:$0xff]
      %v858 = vld [vmem:[%s827 + $0xf0] sm:$0xff]
      %v859 = vld [vmem:[%s827 + $0xf8] sm:$0xff]
      %v860 = vld [vmem:[%s827 + $0x100] sm:$0xff]
      %v861 = vld [vmem:[%s827 + $0x108] sm:$0xff]
      %v862 = vld [vmem:[%s827 + $0x110] sm:$0xff]
      %v863 = vld [vmem:[%s827 + $0x118] sm:$0xff]
      %v864 = vld [vmem:[%s827 + $0x120] sm:$0xff]
      %v865 = vld [vmem:[%s827 + $0x128] sm:$0xff]
      %v866 = vld [vmem:[%s827 + $0x130] sm:$0xff]
      %v867 = vld [vmem:[%s827 + $0x138] sm:$0xff]
      %v868 = vld [vmem:[%s827 + $0x140] sm:$0xff]
      %v869 = vld [vmem:[%s827 + $0x148] sm:$0xff]
      %v870 = vld [vmem:[%s827 + $0x150] sm:$0xff]
      %v871 = vld [vmem:[%s827 + $0x158] sm:$0xff]
      %v872 = vld [vmem:[%s827 + $0x160] sm:$0xff]
      %v873 = vld [vmem:[%s827 + $0x168] sm:$0xff]
      %v874 = vld [vmem:[%s827 + $0x170] sm:$0xff]
      %v875 = vld [vmem:[%s827 + $0x178] sm:$0xff]
      %v876 = vld [vmem:[%s827 + $0x180] sm:$0xff]
      %v877 = vld [vmem:[%s827 + $0x188] sm:$0xff]
      %v878 = vld [vmem:[%s827 + $0x190] sm:$0xff]
      %v879 = vld [vmem:[%s827 + $0x198] sm:$0xff]
      %v880 = vld [vmem:[%s827 + $0x1a0] sm:$0xff]
      %v881 = vld [vmem:[%s827 + $0x1a8] sm:$0xff]
      %v882 = vld [vmem:[%s827 + $0x1b0] sm:$0xff]
      %v883 = vld [vmem:[%s827 + $0x1b8] sm:$0xff]
      %v884 = vld [vmem:[%s827 + $0x1c0] sm:$0xff]
      %v885 = vld [vmem:[%s827 + $0x1c8] sm:$0xff]
      %v886 = vld [vmem:[%s827 + $0x1d0] sm:$0xff]
      %v887 = vld [vmem:[%s827 + $0x1d8] sm:$0xff]
      %v888 = vld [vmem:[%s827 + $0x1e0] sm:$0xff]
      %v889 = vld [vmem:[%s827 + $0x1e8] sm:$0xff]
      %v890 = vld [vmem:[%s827 + $0x1f0] sm:$0xff]
      %v891 = vld [vmem:[%s827 + $0x1f8] sm:$0xff]
      %v892 = vand.u32 %v859, 4294901760
      %893 = vmatprep.subr.mxu0 %v892
      %v894 = vand.u32 %v858, 4294901760
      %895 = vmatpush1.msra.mxu0 %v894
      %v896 = vand.u32 %v857, 4294901760
      %897 = vmatprep.subr.mxu0 %v896
      %v898 = vand.u32 %v856, 4294901760
      %899 = vmatpush1.msra.mxu0 %v898
      %v900 = vand.u32 %v855, 4294901760
      %901 = vmatprep.subr.mxu0 %v900
      %v902 = vand.u32 %v854, 4294901760
      %903 = vmatpush1.msra.mxu0 %v902
      %v904 = vand.u32 %v853, 4294901760
      %905 = vmatprep.subr.mxu0 %v904
      %v906 = vand.u32 %v852, 4294901760
      %907 = vmatpush1.msra.mxu0 %v906
      %v908 = vand.u32 %v851, 4294901760
      %909 = vmatprep.subr.mxu0 %v908
      %v910 = vand.u32 %v850, 4294901760
      %911 = vmatpush1.msra.mxu0 %v910
      %v912 = vand.u32 %v849, 4294901760
      %913 = vmatprep.subr.mxu0 %v912
      %v914 = vand.u32 %v848, 4294901760
      %915 = vmatpush1.msra.mxu0 %v914
      %v916 = vand.u32 %v847, 4294901760
      %917 = vmatprep.subr.mxu0 %v916
      %v918 = vand.u32 %v846, 4294901760
      %919 = vmatpush1.msra.mxu0 %v918
      %v920 = vand.u32 %v845, 4294901760
      %921 = vmatprep.subr.mxu0 %v920
      %v922 = vand.u32 %v844, 4294901760
      %923 = vmatpush1.msra.mxu0 %v922
      %v924 = vand.u32 %v843, 4294901760
      %925 = vmatprep.subr.mxu0 %v924
      %v926 = vand.u32 %v842, 4294901760
      %927 = vmatpush1.msra.mxu0 %v926
      %v928 = vand.u32 %v841, 4294901760
      %929 = vmatprep.subr.mxu0 %v928
      %v930 = vand.u32 %v840, 4294901760
      %931 = vmatpush1.msra.mxu0 %v930
      %v932 = vand.u32 %v839, 4294901760
      %933 = vmatprep.subr.mxu0 %v932
      %v934 = vand.u32 %v838, 4294901760
      %935 = vmatpush1.msra.mxu0 %v934
      %v936 = vand.u32 %v837, 4294901760
      %937 = vmatprep.subr.mxu0 %v936
      %v938 = vand.u32 %v836, 4294901760
      %939 = vmatpush1.msra.mxu0 %v938
      %v940 = vand.u32 %v835, 4294901760
      %941 = vmatprep.subr.mxu0 %v940
      %v942 = vand.u32 %v834, 4294901760
      %943 = vmatpush1.msra.mxu0 %v942
      %v944 = vand.u32 %v833, 4294901760
      %945 = vmatprep.subr.mxu0 %v944
      %v946 = vand.u32 %v832, 4294901760
      %947 = vmatpush1.msra.mxu0 %v946
      %v948 = vand.u32 %v831, 4294901760
      %949 = vmatprep.subr.mxu0 %v948
      %v950 = vand.u32 %v830, 4294901760
      %951 = vmatpush1.msra.mxu0 %v950
      %v952 = vand.u32 %v829, 4294901760
      %953 = vmatprep.subr.mxu0 %v952
      %v954 = vand.u32 %v828, 4294901760
      %955 = vmatpush1.msra.mxu0 %v954
      %v956 = vand.u32 %v891, 4294901760
      %957 = vmatprep.subr.mxu0 %v956
      %v958 = vand.u32 %v890, 4294901760
      %959 = vmatpush2.msra.mxu0 %v958
      %v960 = vand.u32 %v889, 4294901760
      %961 = vmatprep.subr.mxu0 %v960
      %v962 = vand.u32 %v888, 4294901760
      %963 = vmatpush2.msra.mxu0 %v962
      %v964 = vand.u32 %v887, 4294901760
      %965 = vmatprep.subr.mxu0 %v964
      %v966 = vand.u32 %v886, 4294901760
      %967 = vmatpush2.msra.mxu0 %v966
      %v968 = vand.u32 %v885, 4294901760
      %969 = vmatprep.subr.mxu0 %v968
      %v970 = vand.u32 %v884, 4294901760
      %971 = vmatpush2.msra.mxu0 %v970
      %v972 = vand.u32 %v883, 4294901760
      %973 = vmatprep.subr.mxu0 %v972
      %v974 = vand.u32 %v882, 4294901760
      %975 = vmatpush2.msra.mxu0 %v974
      %v976 = vand.u32 %v881, 4294901760
      %977 = vmatprep.subr.mxu0 %v976
      %v978 = vand.u32 %v880, 4294901760
      %979 = vmatpush2.msra.mxu0 %v978
      %v980 = vand.u32 %v879, 4294901760
      %981 = vmatprep.subr.mxu0 %v980
      %v982 = vand.u32 %v878, 4294901760
      %983 = vmatpush2.msra.mxu0 %v982
      %v984 = vand.u32 %v877, 4294901760
      %985 = vmatprep.subr.mxu0 %v984
      %v986 = vand.u32 %v876, 4294901760
      %987 = vmatpush2.msra.mxu0 %v986
      %v988 = vand.u32 %v875, 4294901760
      %989 = vmatprep.subr.mxu0 %v988
      %v990 = vand.u32 %v874, 4294901760
      %991 = vmatpush2.msra.mxu0 %v990
      %v992 = vand.u32 %v873, 4294901760
      %993 = vmatprep.subr.mxu0 %v992
      %v994 = vand.u32 %v872, 4294901760
      %995 = vmatpush2.msra.mxu0 %v994
      %v996 = vand.u32 %v871, 4294901760
      %997 = vmatprep.subr.mxu0 %v996
      %v998 = vand.u32 %v870, 4294901760
      %999 = vmatpush2.msra.mxu0 %v998
      %v1000 = vand.u32 %v869, 4294901760
      %1001 = vmatprep.subr.mxu0 %v1000
      %v1002 = vand.u32 %v868, 4294901760
      %1003 = vmatpush2.msra.mxu0 %v1002
      %v1004 = vand.u32 %v867, 4294901760
      %1005 = vmatprep.subr.mxu0 %v1004
      %v1006 = vand.u32 %v866, 4294901760
      %1007 = vmatpush2.msra.mxu0 %v1006
      %v1008 = vand.u32 %v865, 4294901760
      %1009 = vmatprep.subr.mxu0 %v1008
      %v1010 = vand.u32 %v864, 4294901760
      %1011 = vmatpush2.msra.mxu0 %v1010
      %v1012 = vand.u32 %v863, 4294901760
      %1013 = vmatprep.subr.mxu0 %v1012
      %v1014 = vand.u32 %v862, 4294901760
      %1015 = vmatpush2.msra.mxu0 %v1014
      %v1016 = vand.u32 %v861, 4294901760
      %1017 = vmatprep.subr.mxu0 %v1016
      %v1018 = vand.u32 %v860, 4294901760
      %1019 = vmatpush2.msra.mxu0 %v1018
      %v1020 = vand.u32 %v762, 4294901760
      %v1021 = vsub.f32 %v762, %v1020
      %v1022 = vand.u32 %v1021, 4294901760
      %v1023 = vsub.f32 %v1021, %v1022
      %v1024 = vand.u32 %v1023, 4294901760
      %1025 = vmatprep.mubr.f32.mxu0 %v1024
      %v1026 = vand.u32 %v761, 4294901760
      %v1027 = vsub.f32 %v761, %v1026
      %v1028 = vand.u32 %v1027, 4294901760
      %v1029 = vsub.f32 %v1027, %v1028
      %v1030 = vand.u32 %v1029, 4294901760
      %1031 = vmatmul.mubr.f32.gmra.mxu0 %v1030
      %v1032 = vpop.f32.mrf.mxu0
      %v1033 = vadd.f32 0.0, %v1032
      %v1034 = vpop.f32.mrf.mxu0
      %v1035 = vadd.f32 0.0, %v1034
      %1036 = vdwg.mxu0
      %v1037 = vand.u32 %v859, 4294901760
      %v1038 = vsub.f32 %v859, %v1037
      %v1039 = vand.u32 %v1038, 4294901760
      %v1040 = vsub.f32 %v1038, %v1039
      %v1041 = vand.u32 %v1040, 4294901760
      %1042 = vmatprep.subr.mxu0 %v1041
      %v1043 = vand.u32 %v858, 4294901760
      %v1044 = vsub.f32 %v858, %v1043
      %v1045 = vand.u32 %v1044, 4294901760
      %v1046 = vsub.f32 %v1044, %v1045
      %v1047 = vand.u32 %v1046, 4294901760
      %1048 = vmatpush1.msra.mxu0 %v1047
      %v1049 = vand.u32 %v857, 4294901760
      %v1050 = vsub.f32 %v857, %v1049
      %v1051 = vand.u32 %v1050, 4294901760
      %v1052 = vsub.f32 %v1050, %v1051
      %v1053 = vand.u32 %v1052, 4294901760
      %1054 = vmatprep.subr.mxu0 %v1053
      %v1055 = vand.u32 %v856, 4294901760
      %v1056 = vsub.f32 %v856, %v1055
      %v1057 = vand.u32 %v1056, 4294901760
      %v1058 = vsub.f32 %v1056, %v1057
      %v1059 = vand.u32 %v1058, 4294901760
      %1060 = vmatpush1.msra.mxu0 %v1059
      %v1061 = vand.u32 %v855, 4294901760
      %v1062 = vsub.f32 %v855, %v1061
      %v1063 = vand.u32 %v1062, 4294901760
      %v1064 = vsub.f32 %v1062, %v1063
      %v1065 = vand.u32 %v1064, 4294901760
      %1066 = vmatprep.subr.mxu0 %v1065
      %v1067 = vand.u32 %v854, 4294901760
      %v1068 = vsub.f32 %v854, %v1067
      %v1069 = vand.u32 %v1068, 4294901760
      %v1070 = vsub.f32 %v1068, %v1069
      %v1071 = vand.u32 %v1070, 4294901760
      %1072 = vmatpush1.msra.mxu0 %v1071
      %v1073 = vand.u32 %v853, 4294901760
      %v1074 = vsub.f32 %v853, %v1073
      %v1075 = vand.u32 %v1074, 4294901760
      %v1076 = vsub.f32 %v1074, %v1075
      %v1077 = vand.u32 %v1076, 4294901760
      %1078 = vmatprep.subr.mxu0 %v1077
      %v1079 = vand.u32 %v852, 4294901760
      %v1080 = vsub.f32 %v852, %v1079
      %v1081 = vand.u32 %v1080, 4294901760
      %v1082 = vsub.f32 %v1080, %v1081
      %v1083 = vand.u32 %v1082, 4294901760
      %1084 = vmatpush1.msra.mxu0 %v1083
      %v1085 = vand.u32 %v851, 4294901760
      %v1086 = vsub.f32 %v851, %v1085
      %v1087 = vand.u32 %v1086, 4294901760
      %v1088 = vsub.f32 %v1086, %v1087
      %v1089 = vand.u32 %v1088, 4294901760
      %1090 = vmatprep.subr.mxu0 %v1089
      %v1091 = vand.u32 %v850, 4294901760
      %v1092 = vsub.f32 %v850, %v1091
      %v1093 = vand.u32 %v1092, 4294901760
      %v1094 = vsub.f32 %v1092, %v1093
      %v1095 = vand.u32 %v1094, 4294901760
      %1096 = vmatpush1.msra.mxu0 %v1095
      %v1097 = vand.u32 %v849, 4294901760
      %v1098 = vsub.f32 %v849, %v1097
      %v1099 = vand.u32 %v1098, 4294901760
      %v1100 = vsub.f32 %v1098, %v1099
      %v1101 = vand.u32 %v1100, 4294901760
      %1102 = vmatprep.subr.mxu0 %v1101
      %v1103 = vand.u32 %v848, 4294901760
      %v1104 = vsub.f32 %v848, %v1103
      %v1105 = vand.u32 %v1104, 4294901760
      %v1106 = vsub.f32 %v1104, %v1105
      %v1107 = vand.u32 %v1106, 4294901760
      %1108 = vmatpush1.msra.mxu0 %v1107
      %v1109 = vand.u32 %v847, 4294901760
      %v1110 = vsub.f32 %v847, %v1109
      %v1111 = vand.u32 %v1110, 4294901760
      %v1112 = vsub.f32 %v1110, %v1111
      %v1113 = vand.u32 %v1112, 4294901760
      %1114 = vmatprep.subr.mxu0 %v1113
      %v1115 = vand.u32 %v846, 4294901760
      %v1116 = vsub.f32 %v846, %v1115
      %v1117 = vand.u32 %v1116, 4294901760
      %v1118 = vsub.f32 %v1116, %v1117
      %v1119 = vand.u32 %v1118, 4294901760
      %1120 = vmatpush1.msra.mxu0 %v1119
      %v1121 = vand.u32 %v845, 4294901760
      %v1122 = vsub.f32 %v845, %v1121
      %v1123 = vand.u32 %v1122, 4294901760
      %v1124 = vsub.f32 %v1122, %v1123
      %v1125 = vand.u32 %v1124, 4294901760
      %1126 = vmatprep.subr.mxu0 %v1125
      %v1127 = vand.u32 %v844, 4294901760
      %v1128 = vsub.f32 %v844, %v1127
      %v1129 = vand.u32 %v1128, 4294901760
      %v1130 = vsub.f32 %v1128, %v1129
      %v1131 = vand.u32 %v1130, 4294901760
      %1132 = vmatpush1.msra.mxu0 %v1131
      %v1133 = vand.u32 %v843, 4294901760
      %v1134 = vsub.f32 %v843, %v1133
      %v1135 = vand.u32 %v1134, 4294901760
      %v1136 = vsub.f32 %v1134, %v1135
      %v1137 = vand.u32 %v1136, 4294901760
      %1138 = vmatprep.subr.mxu0 %v1137
      %v1139 = vand.u32 %v842, 4294901760
      %v1140 = vsub.f32 %v842, %v1139
      %v1141 = vand.u32 %v1140, 4294901760
      %v1142 = vsub.f32 %v1140, %v1141
      %v1143 = vand.u32 %v1142, 4294901760
      %1144 = vmatpush1.msra.mxu0 %v1143
      %v1145 = vand.u32 %v841, 4294901760
      %v1146 = vsub.f32 %v841, %v1145
      %v1147 = vand.u32 %v1146, 4294901760
      %v1148 = vsub.f32 %v1146, %v1147
      %v1149 = vand.u32 %v1148, 4294901760
      %1150 = vmatprep.subr.mxu0 %v1149
      %v1151 = vand.u32 %v840, 4294901760
      %v1152 = vsub.f32 %v840, %v1151
      %v1153 = vand.u32 %v1152, 4294901760
      %v1154 = vsub.f32 %v1152, %v1153
      %v1155 = vand.u32 %v1154, 4294901760
      %1156 = vmatpush1.msra.mxu0 %v1155
      %v1157 = vand.u32 %v839, 4294901760
      %v1158 = vsub.f32 %v839, %v1157
      %v1159 = vand.u32 %v1158, 4294901760
      %v1160 = vsub.f32 %v1158, %v1159
      %v1161 = vand.u32 %v1160, 4294901760
      %1162 = vmatprep.subr.mxu0 %v1161
      %v1163 = vand.u32 %v838, 4294901760
      %v1164 = vsub.f32 %v838, %v1163
      %v1165 = vand.u32 %v1164, 4294901760
      %v1166 = vsub.f32 %v1164, %v1165
      %v1167 = vand.u32 %v1166, 4294901760
      %1168 = vmatpush1.msra.mxu0 %v1167
      %v1169 = vand.u32 %v837, 4294901760
      %v1170 = vsub.f32 %v837, %v1169
      %v1171 = vand.u32 %v1170, 4294901760
      %v1172 = vsub.f32 %v1170, %v1171
      %v1173 = vand.u32 %v1172, 4294901760
      %1174 = vmatprep.subr.mxu0 %v1173
      %v1175 = vand.u32 %v836, 4294901760
      %v1176 = vsub.f32 %v836, %v1175
      %v1177 = vand.u32 %v1176, 4294901760
      %v1178 = vsub.f32 %v1176, %v1177
      %v1179 = vand.u32 %v1178, 4294901760
      %1180 = vmatpush1.msra.mxu0 %v1179
      %v1181 = vand.u32 %v835, 4294901760
      %v1182 = vsub.f32 %v835, %v1181
      %v1183 = vand.u32 %v1182, 4294901760
      %v1184 = vsub.f32 %v1182, %v1183
      %v1185 = vand.u32 %v1184, 4294901760
      %1186 = vmatprep.subr.mxu0 %v1185
      %v1187 = vand.u32 %v834, 4294901760
      %v1188 = vsub.f32 %v834, %v1187
      %v1189 = vand.u32 %v1188, 4294901760
      %v1190 = vsub.f32 %v1188, %v1189
      %v1191 = vand.u32 %v1190, 4294901760
      %1192 = vmatpush1.msra.mxu0 %v1191
      %v1193 = vand.u32 %v833, 4294901760
      %v1194 = vsub.f32 %v833, %v1193
      %v1195 = vand.u32 %v1194, 4294901760
      %v1196 = vsub.f32 %v1194, %v1195
      %v1197 = vand.u32 %v1196, 4294901760
      %1198 = vmatprep.subr.mxu0 %v1197
      %v1199 = vand.u32 %v832, 4294901760
      %v1200 = vsub.f32 %v832, %v1199
      %v1201 = vand.u32 %v1200, 4294901760
      %v1202 = vsub.f32 %v1200, %v1201
      %v1203 = vand.u32 %v1202, 4294901760
      %1204 = vmatpush1.msra.mxu0 %v1203
      %v1205 = vand.u32 %v831, 4294901760
      %v1206 = vsub.f32 %v831, %v1205
      %v1207 = vand.u32 %v1206, 4294901760
      %v1208 = vsub.f32 %v1206, %v1207
      %v1209 = vand.u32 %v1208, 4294901760
      %1210 = vmatprep.subr.mxu0 %v1209
      %v1211 = vand.u32 %v830, 4294901760
      %v1212 = vsub.f32 %v830, %v1211
      %v1213 = vand.u32 %v1212, 4294901760
      %v1214 = vsub.f32 %v1212, %v1213
      %v1215 = vand.u32 %v1214, 4294901760
      %1216 = vmatpush1.msra.mxu0 %v1215
      %v1217 = vand.u32 %v829, 4294901760
      %v1218 = vsub.f32 %v829, %v1217
      %v1219 = vand.u32 %v1218, 4294901760
      %v1220 = vsub.f32 %v1218, %v1219
      %v1221 = vand.u32 %v1220, 4294901760
      %1222 = vmatprep.subr.mxu0 %v1221
      %v1223 = vand.u32 %v828, 4294901760
      %v1224 = vsub.f32 %v828, %v1223
      %v1225 = vand.u32 %v1224, 4294901760
      %v1226 = vsub.f32 %v1224, %v1225
      %v1227 = vand.u32 %v1226, 4294901760
      %1228 = vmatpush1.msra.mxu0 %v1227
      %v1229 = vand.u32 %v891, 4294901760
      %v1230 = vsub.f32 %v891, %v1229
      %v1231 = vand.u32 %v1230, 4294901760
      %v1232 = vsub.f32 %v1230, %v1231
      %v1233 = vand.u32 %v1232, 4294901760
      %1234 = vmatprep.subr.mxu0 %v1233
      %v1235 = vand.u32 %v890, 4294901760
      %v1236 = vsub.f32 %v890, %v1235
      %v1237 = vand.u32 %v1236, 4294901760
      %v1238 = vsub.f32 %v1236, %v1237
      %v1239 = vand.u32 %v1238, 4294901760
      %1240 = vmatpush2.msra.mxu0 %v1239
      %v1241 = vand.u32 %v889, 4294901760
      %v1242 = vsub.f32 %v889, %v1241
      %v1243 = vand.u32 %v1242, 4294901760
      %v1244 = vsub.f32 %v1242, %v1243
      %v1245 = vand.u32 %v1244, 4294901760
      %1246 = vmatprep.subr.mxu0 %v1245
      %v1247 = vand.u32 %v888, 4294901760
      %v1248 = vsub.f32 %v888, %v1247
      %v1249 = vand.u32 %v1248, 4294901760
      %v1250 = vsub.f32 %v1248, %v1249
      %v1251 = vand.u32 %v1250, 4294901760
      %1252 = vmatpush2.msra.mxu0 %v1251
      %v1253 = vand.u32 %v887, 4294901760
      %v1254 = vsub.f32 %v887, %v1253
      %v1255 = vand.u32 %v1254, 4294901760
      %v1256 = vsub.f32 %v1254, %v1255
      %v1257 = vand.u32 %v1256, 4294901760
      %1258 = vmatprep.subr.mxu0 %v1257
      %v1259 = vand.u32 %v886, 4294901760
      %v1260 = vsub.f32 %v886, %v1259
      %v1261 = vand.u32 %v1260, 4294901760
      %v1262 = vsub.f32 %v1260, %v1261
      %v1263 = vand.u32 %v1262, 4294901760
      %1264 = vmatpush2.msra.mxu0 %v1263
      %v1265 = vand.u32 %v885, 4294901760
      %v1266 = vsub.f32 %v885, %v1265
      %v1267 = vand.u32 %v1266, 4294901760
      %v1268 = vsub.f32 %v1266, %v1267
      %v1269 = vand.u32 %v1268, 4294901760
      %1270 = vmatprep.subr.mxu0 %v1269
      %v1271 = vand.u32 %v884, 4294901760
      %v1272 = vsub.f32 %v884, %v1271
      %v1273 = vand.u32 %v1272, 4294901760
      %v1274 = vsub.f32 %v1272, %v1273
      %v1275 = vand.u32 %v1274, 4294901760
      %1276 = vmatpush2.msra.mxu0 %v1275
      %v1277 = vand.u32 %v883, 4294901760
      %v1278 = vsub.f32 %v883, %v1277
      %v1279 = vand.u32 %v1278, 4294901760
      %v1280 = vsub.f32 %v1278, %v1279
      %v1281 = vand.u32 %v1280, 4294901760
      %1282 = vmatprep.subr.mxu0 %v1281
      %v1283 = vand.u32 %v882, 4294901760
      %v1284 = vsub.f32 %v882, %v1283
      %v1285 = vand.u32 %v1284, 4294901760
      %v1286 = vsub.f32 %v1284, %v1285
      %v1287 = vand.u32 %v1286, 4294901760
      %1288 = vmatpush2.msra.mxu0 %v1287
      %v1289 = vand.u32 %v881, 4294901760
      %v1290 = vsub.f32 %v881, %v1289
      %v1291 = vand.u32 %v1290, 4294901760
      %v1292 = vsub.f32 %v1290, %v1291
      %v1293 = vand.u32 %v1292, 4294901760
      %1294 = vmatprep.subr.mxu0 %v1293
      %v1295 = vand.u32 %v880, 4294901760
      %v1296 = vsub.f32 %v880, %v1295
      %v1297 = vand.u32 %v1296, 4294901760
      %v1298 = vsub.f32 %v1296, %v1297
      %v1299 = vand.u32 %v1298, 4294901760
      %1300 = vmatpush2.msra.mxu0 %v1299
      %v1301 = vand.u32 %v879, 4294901760
      %v1302 = vsub.f32 %v879, %v1301
      %v1303 = vand.u32 %v1302, 4294901760
      %v1304 = vsub.f32 %v1302, %v1303
      %v1305 = vand.u32 %v1304, 4294901760
      %1306 = vmatprep.subr.mxu0 %v1305
      %v1307 = vand.u32 %v878, 4294901760
      %v1308 = vsub.f32 %v878, %v1307
      %v1309 = vand.u32 %v1308, 4294901760
      %v1310 = vsub.f32 %v1308, %v1309
      %v1311 = vand.u32 %v1310, 4294901760
      %1312 = vmatpush2.msra.mxu0 %v1311
      %v1313 = vand.u32 %v877, 4294901760
      %v1314 = vsub.f32 %v877, %v1313
      %v1315 = vand.u32 %v1314, 4294901760
      %v1316 = vsub.f32 %v1314, %v1315
      %v1317 = vand.u32 %v1316, 4294901760
      %1318 = vmatprep.subr.mxu0 %v1317
      %v1319 = vand.u32 %v876, 4294901760
      %v1320 = vsub.f32 %v876, %v1319
      %v1321 = vand.u32 %v1320, 4294901760
      %v1322 = vsub.f32 %v1320, %v1321
      %v1323 = vand.u32 %v1322, 4294901760
      %1324 = vmatpush2.msra.mxu0 %v1323
      %v1325 = vand.u32 %v875, 4294901760
      %v1326 = vsub.f32 %v875, %v1325
      %v1327 = vand.u32 %v1326, 4294901760
      %v1328 = vsub.f32 %v1326, %v1327
      %v1329 = vand.u32 %v1328, 4294901760
      %1330 = vmatprep.subr.mxu0 %v1329
      %v1331 = vand.u32 %v874, 4294901760
      %v1332 = vsub.f32 %v874, %v1331
      %v1333 = vand.u32 %v1332, 4294901760
      %v1334 = vsub.f32 %v1332, %v1333
      %v1335 = vand.u32 %v1334, 4294901760
      %1336 = vmatpush2.msra.mxu0 %v1335
      %v1337 = vand.u32 %v873, 4294901760
      %v1338 = vsub.f32 %v873, %v1337
      %v1339 = vand.u32 %v1338, 4294901760
      %v1340 = vsub.f32 %v1338, %v1339
      %v1341 = vand.u32 %v1340, 4294901760
      %1342 = vmatprep.subr.mxu0 %v1341
      %v1343 = vand.u32 %v872, 4294901760
      %v1344 = vsub.f32 %v872, %v1343
      %v1345 = vand.u32 %v1344, 4294901760
      %v1346 = vsub.f32 %v1344, %v1345
      %v1347 = vand.u32 %v1346, 4294901760
      %1348 = vmatpush2.msra.mxu0 %v1347
      %v1349 = vand.u32 %v871, 4294901760
      %v1350 = vsub.f32 %v871, %v1349
      %v1351 = vand.u32 %v1350, 4294901760
      %v1352 = vsub.f32 %v1350, %v1351
      %v1353 = vand.u32 %v1352, 4294901760
      %1354 = vmatprep.subr.mxu0 %v1353
      %v1355 = vand.u32 %v870, 4294901760
      %v1356 = vsub.f32 %v870, %v1355
      %v1357 = vand.u32 %v1356, 4294901760
      %v1358 = vsub.f32 %v1356, %v1357
      %v1359 = vand.u32 %v1358, 4294901760
      %1360 = vmatpush2.msra.mxu0 %v1359
      %v1361 = vand.u32 %v869, 4294901760
      %v1362 = vsub.f32 %v869, %v1361
      %v1363 = vand.u32 %v1362, 4294901760
      %v1364 = vsub.f32 %v1362, %v1363
      %v1365 = vand.u32 %v1364, 4294901760
      %1366 = vmatprep.subr.mxu0 %v1365
      %v1367 = vand.u32 %v868, 4294901760
      %v1368 = vsub.f32 %v868, %v1367
      %v1369 = vand.u32 %v1368, 4294901760
      %v1370 = vsub.f32 %v1368, %v1369
      %v1371 = vand.u32 %v1370, 4294901760
      %1372 = vmatpush2.msra.mxu0 %v1371
      %v1373 = vand.u32 %v867, 4294901760
      %v1374 = vsub.f32 %v867, %v1373
      %v1375 = vand.u32 %v1374, 4294901760
      %v1376 = vsub.f32 %v1374, %v1375
      %v1377 = vand.u32 %v1376, 4294901760
      %1378 = vmatprep.subr.mxu0 %v1377
      %v1379 = vand.u32 %v866, 4294901760
      %v1380 = vsub.f32 %v866, %v1379
      %v1381 = vand.u32 %v1380, 4294901760
      %v1382 = vsub.f32 %v1380, %v1381
      %v1383 = vand.u32 %v1382, 4294901760
      %1384 = vmatpush2.msra.mxu0 %v1383
      %v1385 = vand.u32 %v865, 4294901760
      %v1386 = vsub.f32 %v865, %v1385
      %v1387 = vand.u32 %v1386, 4294901760
      %v1388 = vsub.f32 %v1386, %v1387
      %v1389 = vand.u32 %v1388, 4294901760
      %1390 = vmatprep.subr.mxu0 %v1389
      %v1391 = vand.u32 %v864, 4294901760
      %v1392 = vsub.f32 %v864, %v1391
      %v1393 = vand.u32 %v1392, 4294901760
      %v1394 = vsub.f32 %v1392, %v1393
      %v1395 = vand.u32 %v1394, 4294901760
      %1396 = vmatpush2.msra.mxu0 %v1395
      %v1397 = vand.u32 %v863, 4294901760
      %v1398 = vsub.f32 %v863, %v1397
      %v1399 = vand.u32 %v1398, 4294901760
      %v1400 = vsub.f32 %v1398, %v1399
      %v1401 = vand.u32 %v1400, 4294901760
      %1402 = vmatprep.subr.mxu0 %v1401
      %v1403 = vand.u32 %v862, 4294901760
      %v1404 = vsub.f32 %v862, %v1403
      %v1405 = vand.u32 %v1404, 4294901760
      %v1406 = vsub.f32 %v1404, %v1405
      %v1407 = vand.u32 %v1406, 4294901760
      %1408 = vmatpush2.msra.mxu0 %v1407
      %v1409 = vand.u32 %v861, 4294901760
      %v1410 = vsub.f32 %v861, %v1409
      %v1411 = vand.u32 %v1410, 4294901760
      %v1412 = vsub.f32 %v1410, %v1411
      %v1413 = vand.u32 %v1412, 4294901760
      %1414 = vmatprep.subr.mxu0 %v1413
      %v1415 = vand.u32 %v860, 4294901760
      %v1416 = vsub.f32 %v860, %v1415
      %v1417 = vand.u32 %v1416, 4294901760
      %v1418 = vsub.f32 %v1416, %v1417
      %v1419 = vand.u32 %v1418, 4294901760
      %1420 = vmatpush2.msra.mxu0 %v1419
      %v1421 = vand.u32 %v762, 4294901760
      %1422 = vmatprep.mubr.f32.mxu0 %v1421
      %v1423 = vand.u32 %v761, 4294901760
      %1424 = vmatmul.mubr.f32.gmra.mxu0 %v1423
      %v1425 = vpop.f32.mrf.mxu0
      %v1426 = vadd.f32 %v1033, %v1425
      %v1427 = vpop.f32.mrf.mxu0
      %v1428 = vadd.f32 %v1035, %v1427
      %1429 = vdwg.mxu0
      %v1430 = vand.u32 %v859, 4294901760
      %v1431 = vsub.f32 %v859, %v1430
      %1432 = vmatprep.subr.mxu0 %v1431
      %v1433 = vand.u32 %v858, 4294901760
      %v1434 = vsub.f32 %v858, %v1433
      %1435 = vmatpush1.msra.mxu0 %v1434
      %v1436 = vand.u32 %v857, 4294901760
      %v1437 = vsub.f32 %v857, %v1436
      %1438 = vmatprep.subr.mxu0 %v1437
      %v1439 = vand.u32 %v856, 4294901760
      %v1440 = vsub.f32 %v856, %v1439
      %1441 = vmatpush1.msra.mxu0 %v1440
      %v1442 = vand.u32 %v855, 4294901760
      %v1443 = vsub.f32 %v855, %v1442
      %1444 = vmatprep.subr.mxu0 %v1443
      %v1445 = vand.u32 %v854, 4294901760
      %v1446 = vsub.f32 %v854, %v1445
      %1447 = vmatpush1.msra.mxu0 %v1446
      %v1448 = vand.u32 %v853, 4294901760
      %v1449 = vsub.f32 %v853, %v1448
      %1450 = vmatprep.subr.mxu0 %v1449
      %v1451 = vand.u32 %v852, 4294901760
      %v1452 = vsub.f32 %v852, %v1451
      %1453 = vmatpush1.msra.mxu0 %v1452
      %v1454 = vand.u32 %v851, 4294901760
      %v1455 = vsub.f32 %v851, %v1454
      %1456 = vmatprep.subr.mxu0 %v1455
      %v1457 = vand.u32 %v850, 4294901760
      %v1458 = vsub.f32 %v850, %v1457
      %1459 = vmatpush1.msra.mxu0 %v1458
      %v1460 = vand.u32 %v849, 4294901760
      %v1461 = vsub.f32 %v849, %v1460
      %1462 = vmatprep.subr.mxu0 %v1461
      %v1463 = vand.u32 %v848, 4294901760
      %v1464 = vsub.f32 %v848, %v1463
      %1465 = vmatpush1.msra.mxu0 %v1464
      %v1466 = vand.u32 %v847, 4294901760
      %v1467 = vsub.f32 %v847, %v1466
      %1468 = vmatprep.subr.mxu0 %v1467
      %v1469 = vand.u32 %v846, 4294901760
      %v1470 = vsub.f32 %v846, %v1469
      %1471 = vmatpush1.msra.mxu0 %v1470
      %v1472 = vand.u32 %v845, 4294901760
      %v1473 = vsub.f32 %v845, %v1472
      %1474 = vmatprep.subr.mxu0 %v1473
      %v1475 = vand.u32 %v844, 4294901760
      %v1476 = vsub.f32 %v844, %v1475
      %1477 = vmatpush1.msra.mxu0 %v1476
      %v1478 = vand.u32 %v843, 4294901760
      %v1479 = vsub.f32 %v843, %v1478
      %1480 = vmatprep.subr.mxu0 %v1479
      %v1481 = vand.u32 %v842, 4294901760
      %v1482 = vsub.f32 %v842, %v1481
      %1483 = vmatpush1.msra.mxu0 %v1482
      %v1484 = vand.u32 %v841, 4294901760
      %v1485 = vsub.f32 %v841, %v1484
      %1486 = vmatprep.subr.mxu0 %v1485
      %v1487 = vand.u32 %v840, 4294901760
      %v1488 = vsub.f32 %v840, %v1487
      %1489 = vmatpush1.msra.mxu0 %v1488
      %v1490 = vand.u32 %v839, 4294901760
      %v1491 = vsub.f32 %v839, %v1490
      %1492 = vmatprep.subr.mxu0 %v1491
      %v1493 = vand.u32 %v838, 4294901760
      %v1494 = vsub.f32 %v838, %v1493
      %1495 = vmatpush1.msra.mxu0 %v1494
      %v1496 = vand.u32 %v837, 4294901760
      %v1497 = vsub.f32 %v837, %v1496
      %1498 = vmatprep.subr.mxu0 %v1497
      %v1499 = vand.u32 %v836, 4294901760
      %v1500 = vsub.f32 %v836, %v1499
      %1501 = vmatpush1.msra.mxu0 %v1500
      %v1502 = vand.u32 %v835, 4294901760
      %v1503 = vsub.f32 %v835, %v1502
      %1504 = vmatprep.subr.mxu0 %v1503
      %v1505 = vand.u32 %v834, 4294901760
      %v1506 = vsub.f32 %v834, %v1505
      %1507 = vmatpush1.msra.mxu0 %v1506
      %v1508 = vand.u32 %v833, 4294901760
      %v1509 = vsub.f32 %v833, %v1508
      %1510 = vmatprep.subr.mxu0 %v1509
      %v1511 = vand.u32 %v832, 4294901760
      %v1512 = vsub.f32 %v832, %v1511
      %1513 = vmatpush1.msra.mxu0 %v1512
      %v1514 = vand.u32 %v831, 4294901760
      %v1515 = vsub.f32 %v831, %v1514
      %1516 = vmatprep.subr.mxu0 %v1515
      %v1517 = vand.u32 %v830, 4294901760
      %v1518 = vsub.f32 %v830, %v1517
      %1519 = vmatpush1.msra.mxu0 %v1518
      %v1520 = vand.u32 %v829, 4294901760
      %v1521 = vsub.f32 %v829, %v1520
      %1522 = vmatprep.subr.mxu0 %v1521
      %v1523 = vand.u32 %v828, 4294901760
      %v1524 = vsub.f32 %v828, %v1523
      %1525 = vmatpush1.msra.mxu0 %v1524
      %v1526 = vand.u32 %v891, 4294901760
      %v1527 = vsub.f32 %v891, %v1526
      %1528 = vmatprep.subr.mxu0 %v1527
      %v1529 = vand.u32 %v890, 4294901760
      %v1530 = vsub.f32 %v890, %v1529
      %1531 = vmatpush2.msra.mxu0 %v1530
      %v1532 = vand.u32 %v889, 4294901760
      %v1533 = vsub.f32 %v889, %v1532
      %1534 = vmatprep.subr.mxu0 %v1533
      %v1535 = vand.u32 %v888, 4294901760
      %v1536 = vsub.f32 %v888, %v1535
      %1537 = vmatpush2.msra.mxu0 %v1536
      %v1538 = vand.u32 %v887, 4294901760
      %v1539 = vsub.f32 %v887, %v1538
      %1540 = vmatprep.subr.mxu0 %v1539
      %v1541 = vand.u32 %v886, 4294901760
      %v1542 = vsub.f32 %v886, %v1541
      %1543 = vmatpush2.msra.mxu0 %v1542
      %v1544 = vand.u32 %v885, 4294901760
      %v1545 = vsub.f32 %v885, %v1544
      %1546 = vmatprep.subr.mxu0 %v1545
      %v1547 = vand.u32 %v884, 4294901760
      %v1548 = vsub.f32 %v884, %v1547
      %1549 = vmatpush2.msra.mxu0 %v1548
      %v1550 = vand.u32 %v883, 4294901760
      %v1551 = vsub.f32 %v883, %v1550
      %1552 = vmatprep.subr.mxu0 %v1551
      %v1553 = vand.u32 %v882, 4294901760
      %v1554 = vsub.f32 %v882, %v1553
      %1555 = vmatpush2.msra.mxu0 %v1554
      %v1556 = vand.u32 %v881, 4294901760
      %v1557 = vsub.f32 %v881, %v1556
      %1558 = vmatprep.subr.mxu0 %v1557
      %v1559 = vand.u32 %v880, 4294901760
      %v1560 = vsub.f32 %v880, %v1559
      %1561 = vmatpush2.msra.mxu0 %v1560
      %v1562 = vand.u32 %v879, 4294901760
      %v1563 = vsub.f32 %v879, %v1562
      %1564 = vmatprep.subr.mxu0 %v1563
      %v1565 = vand.u32 %v878, 4294901760
      %v1566 = vsub.f32 %v878, %v1565
      %1567 = vmatpush2.msra.mxu0 %v1566
      %v1568 = vand.u32 %v877, 4294901760
      %v1569 = vsub.f32 %v877, %v1568
      %1570 = vmatprep.subr.mxu0 %v1569
      %v1571 = vand.u32 %v876, 4294901760
      %v1572 = vsub.f32 %v876, %v1571
      %1573 = vmatpush2.msra.mxu0 %v1572
      %v1574 = vand.u32 %v875, 4294901760
      %v1575 = vsub.f32 %v875, %v1574
      %1576 = vmatprep.subr.mxu0 %v1575
      %v1577 = vand.u32 %v874, 4294901760
      %v1578 = vsub.f32 %v874, %v1577
      %1579 = vmatpush2.msra.mxu0 %v1578
      %v1580 = vand.u32 %v873, 4294901760
      %v1581 = vsub.f32 %v873, %v1580
      %1582 = vmatprep.subr.mxu0 %v1581
      %v1583 = vand.u32 %v872, 4294901760
      %v1584 = vsub.f32 %v872, %v1583
      %1585 = vmatpush2.msra.mxu0 %v1584
      %v1586 = vand.u32 %v871, 4294901760
      %v1587 = vsub.f32 %v871, %v1586
      %1588 = vmatprep.subr.mxu0 %v1587
      %v1589 = vand.u32 %v870, 4294901760
      %v1590 = vsub.f32 %v870, %v1589
      %1591 = vmatpush2.msra.mxu0 %v1590
      %v1592 = vand.u32 %v869, 4294901760
      %v1593 = vsub.f32 %v869, %v1592
      %1594 = vmatprep.subr.mxu0 %v1593
      %v1595 = vand.u32 %v868, 4294901760
      %v1596 = vsub.f32 %v868, %v1595
      %1597 = vmatpush2.msra.mxu0 %v1596
      %v1598 = vand.u32 %v867, 4294901760
      %v1599 = vsub.f32 %v867, %v1598
      %1600 = vmatprep.subr.mxu0 %v1599
      %v1601 = vand.u32 %v866, 4294901760
      %v1602 = vsub.f32 %v866, %v1601
      %1603 = vmatpush2.msra.mxu0 %v1602
      %v1604 = vand.u32 %v865, 4294901760
      %v1605 = vsub.f32 %v865, %v1604
      %1606 = vmatprep.subr.mxu0 %v1605
      %v1607 = vand.u32 %v864, 4294901760
      %v1608 = vsub.f32 %v864, %v1607
      %1609 = vmatpush2.msra.mxu0 %v1608
      %v1610 = vand.u32 %v863, 4294901760
      %v1611 = vsub.f32 %v863, %v1610
      %1612 = vmatprep.subr.mxu0 %v1611
      %v1613 = vand.u32 %v862, 4294901760
      %v1614 = vsub.f32 %v862, %v1613
      %1615 = vmatpush2.msra.mxu0 %v1614
      %v1616 = vand.u32 %v861, 4294901760
      %v1617 = vsub.f32 %v861, %v1616
      %1618 = vmatprep.subr.mxu0 %v1617
      %v1619 = vand.u32 %v860, 4294901760
      %v1620 = vsub.f32 %v860, %v1619
      %1621 = vmatpush2.msra.mxu0 %v1620
      %v1622 = vand.u32 %v762, 4294901760
      %v1623 = vsub.f32 %v762, %v1622
      %1624 = vmatprep.mubr.f32.mxu0 %v1623
      %v1625 = vand.u32 %v761, 4294901760
      %v1626 = vsub.f32 %v761, %v1625
      %1627 = vmatmul.mubr.f32.gmra.mxu0 %v1626
      %v1628 = vpop.f32.mrf.mxu0
      %v1629 = vadd.f32 %v1426, %v1628
      %v1630 = vpop.f32.mrf.mxu0
      %v1631 = vadd.f32 %v1428, %v1630
      %1632 = vdwg.mxu0
      %v1633 = vand.u32 %v859, 4294901760
      %1634 = vmatprep.subr.mxu0 %v1633
      %v1635 = vand.u32 %v858, 4294901760
      %1636 = vmatpush1.msra.mxu0 %v1635
      %v1637 = vand.u32 %v857, 4294901760
      %1638 = vmatprep.subr.mxu0 %v1637
      %v1639 = vand.u32 %v856, 4294901760
      %1640 = vmatpush1.msra.mxu0 %v1639
      %v1641 = vand.u32 %v855, 4294901760
      %1642 = vmatprep.subr.mxu0 %v1641
      %v1643 = vand.u32 %v854, 4294901760
      %1644 = vmatpush1.msra.mxu0 %v1643
      %v1645 = vand.u32 %v853, 4294901760
      %1646 = vmatprep.subr.mxu0 %v1645
      %v1647 = vand.u32 %v852, 4294901760
      %1648 = vmatpush1.msra.mxu0 %v1647
      %v1649 = vand.u32 %v851, 4294901760
      %1650 = vmatprep.subr.mxu0 %v1649
      %v1651 = vand.u32 %v850, 4294901760
      %1652 = vmatpush1.msra.mxu0 %v1651
      %v1653 = vand.u32 %v849, 4294901760
      %1654 = vmatprep.subr.mxu0 %v1653
      %v1655 = vand.u32 %v848, 4294901760
      %1656 = vmatpush1.msra.mxu0 %v1655
      %v1657 = vand.u32 %v847, 4294901760
      %1658 = vmatprep.subr.mxu0 %v1657
      %v1659 = vand.u32 %v846, 4294901760
      %1660 = vmatpush1.msra.mxu0 %v1659
      %v1661 = vand.u32 %v845, 4294901760
      %1662 = vmatprep.subr.mxu0 %v1661
      %v1663 = vand.u32 %v844, 4294901760
      %1664 = vmatpush1.msra.mxu0 %v1663
      %v1665 = vand.u32 %v843, 4294901760
      %1666 = vmatprep.subr.mxu0 %v1665
      %v1667 = vand.u32 %v842, 4294901760
      %1668 = vmatpush1.msra.mxu0 %v1667
      %v1669 = vand.u32 %v841, 4294901760
      %1670 = vmatprep.subr.mxu0 %v1669
      %v1671 = vand.u32 %v840, 4294901760
      %1672 = vmatpush1.msra.mxu0 %v1671
      %v1673 = vand.u32 %v839, 4294901760
      %1674 = vmatprep.subr.mxu0 %v1673
      %v1675 = vand.u32 %v838, 4294901760
      %1676 = vmatpush1.msra.mxu0 %v1675
      %v1677 = vand.u32 %v837, 4294901760
      %1678 = vmatprep.subr.mxu0 %v1677
      %v1679 = vand.u32 %v836, 4294901760
      %1680 = vmatpush1.msra.mxu0 %v1679
      %v1681 = vand.u32 %v835, 4294901760
      %1682 = vmatprep.subr.mxu0 %v1681
      %v1683 = vand.u32 %v834, 4294901760
      %1684 = vmatpush1.msra.mxu0 %v1683
      %v1685 = vand.u32 %v833, 4294901760
      %1686 = vmatprep.subr.mxu0 %v1685
      %v1687 = vand.u32 %v832, 4294901760
      %1688 = vmatpush1.msra.mxu0 %v1687
      %v1689 = vand.u32 %v831, 4294901760
      %1690 = vmatprep.subr.mxu0 %v1689
      %v1691 = vand.u32 %v830, 4294901760
      %1692 = vmatpush1.msra.mxu0 %v1691
      %v1693 = vand.u32 %v829, 4294901760
      %1694 = vmatprep.subr.mxu0 %v1693
      %v1695 = vand.u32 %v828, 4294901760
      %1696 = vmatpush1.msra.mxu0 %v1695
      %v1697 = vand.u32 %v891, 4294901760
      %1698 = vmatprep.subr.mxu0 %v1697
      %v1699 = vand.u32 %v890, 4294901760
      %1700 = vmatpush2.msra.mxu0 %v1699
      %v1701 = vand.u32 %v889, 4294901760
      %1702 = vmatprep.subr.mxu0 %v1701
      %v1703 = vand.u32 %v888, 4294901760
      %1704 = vmatpush2.msra.mxu0 %v1703
      %v1705 = vand.u32 %v887, 4294901760
      %1706 = vmatprep.subr.mxu0 %v1705
      %v1707 = vand.u32 %v886, 4294901760
      %1708 = vmatpush2.msra.mxu0 %v1707
      %v1709 = vand.u32 %v885, 4294901760
      %1710 = vmatprep.subr.mxu0 %v1709
      %v1711 = vand.u32 %v884, 4294901760
      %1712 = vmatpush2.msra.mxu0 %v1711
      %v1713 = vand.u32 %v883, 4294901760
      %1714 = vmatprep.subr.mxu0 %v1713
      %v1715 = vand.u32 %v882, 4294901760
      %1716 = vmatpush2.msra.mxu0 %v1715
      %v1717 = vand.u32 %v881, 4294901760
      %1718 = vmatprep.subr.mxu0 %v1717
      %v1719 = vand.u32 %v880, 4294901760
      %1720 = vmatpush2.msra.mxu0 %v1719
      %v1721 = vand.u32 %v879, 4294901760
      %1722 = vmatprep.subr.mxu0 %v1721
      %v1723 = vand.u32 %v878, 4294901760
      %1724 = vmatpush2.msra.mxu0 %v1723
      %v1725 = vand.u32 %v877, 4294901760
      %1726 = vmatprep.subr.mxu0 %v1725
      %v1727 = vand.u32 %v876, 4294901760
      %1728 = vmatpush2.msra.mxu0 %v1727
      %v1729 = vand.u32 %v875, 4294901760
      %1730 = vmatprep.subr.mxu0 %v1729
      %v1731 = vand.u32 %v874, 4294901760
      %1732 = vmatpush2.msra.mxu0 %v1731
      %v1733 = vand.u32 %v873, 4294901760
      %1734 = vmatprep.subr.mxu0 %v1733
      %v1735 = vand.u32 %v872, 4294901760
      %1736 = vmatpush2.msra.mxu0 %v1735
      %v1737 = vand.u32 %v871, 4294901760
      %1738 = vmatprep.subr.mxu0 %v1737
      %v1739 = vand.u32 %v870, 4294901760
      %1740 = vmatpush2.msra.mxu0 %v1739
      %v1741 = vand.u32 %v869, 4294901760
      %1742 = vmatprep.subr.mxu0 %v1741
      %v1743 = vand.u32 %v868, 4294901760
      %1744 = vmatpush2.msra.mxu0 %v1743
      %v1745 = vand.u32 %v867, 4294901760
      %1746 = vmatprep.subr.mxu0 %v1745
      %v1747 = vand.u32 %v866, 4294901760
      %1748 = vmatpush2.msra.mxu0 %v1747
      %v1749 = vand.u32 %v865, 4294901760
      %1750 = vmatprep.subr.mxu0 %v1749
      %v1751 = vand.u32 %v864, 4294901760
      %1752 = vmatpush2.msra.mxu0 %v1751
      %v1753 = vand.u32 %v863, 4294901760
      %1754 = vmatprep.subr.mxu0 %v1753
      %v1755 = vand.u32 %v862, 4294901760
      %1756 = vmatpush2.msra.mxu0 %v1755
      %v1757 = vand.u32 %v861, 4294901760
      %1758 = vmatprep.subr.mxu0 %v1757
      %v1759 = vand.u32 %v860, 4294901760
      %1760 = vmatpush2.msra.mxu0 %v1759
      %v1761 = vand.u32 %v762, 4294901760
      %v1762 = vsub.f32 %v762, %v1761
      %v1763 = vand.u32 %v1762, 4294901760
      %1764 = vmatprep.mubr.f32.mxu0 %v1763
      %v1765 = vand.u32 %v761, 4294901760
      %v1766 = vsub.f32 %v761, %v1765
      %v1767 = vand.u32 %v1766, 4294901760
      %1768 = vmatmul.mubr.f32.gmra.mxu0 %v1767
      %v1769 = vpop.f32.mrf.mxu0
      %v1770 = vadd.f32 %v1629, %v1769
      %v1771 = vpop.f32.mrf.mxu0
      %v1772 = vadd.f32 %v1631, %v1771
      %1773 = vdwg.mxu0
      %v1774 = vand.u32 %v859, 4294901760
      %v1775 = vsub.f32 %v859, %v1774
      %v1776 = vand.u32 %v1775, 4294901760
      %1777 = vmatprep.subr.mxu0 %v1776
      %v1778 = vand.u32 %v858, 4294901760
      %v1779 = vsub.f32 %v858, %v1778
      %v1780 = vand.u32 %v1779, 4294901760
      %1781 = vmatpush1.msra.mxu0 %v1780
      %v1782 = vand.u32 %v857, 4294901760
      %v1783 = vsub.f32 %v857, %v1782
      %v1784 = vand.u32 %v1783, 4294901760
      %1785 = vmatprep.subr.mxu0 %v1784
      %v1786 = vand.u32 %v856, 4294901760
      %v1787 = vsub.f32 %v856, %v1786
      %v1788 = vand.u32 %v1787, 4294901760
      %1789 = vmatpush1.msra.mxu0 %v1788
      %v1790 = vand.u32 %v855, 4294901760
      %v1791 = vsub.f32 %v855, %v1790
      %v1792 = vand.u32 %v1791, 4294901760
      %1793 = vmatprep.subr.mxu0 %v1792
      %v1794 = vand.u32 %v854, 4294901760
      %v1795 = vsub.f32 %v854, %v1794
      %v1796 = vand.u32 %v1795, 4294901760
      %1797 = vmatpush1.msra.mxu0 %v1796
      %v1798 = vand.u32 %v853, 4294901760
      %v1799 = vsub.f32 %v853, %v1798
      %v1800 = vand.u32 %v1799, 4294901760
      %1801 = vmatprep.subr.mxu0 %v1800
      %v1802 = vand.u32 %v852, 4294901760
      %v1803 = vsub.f32 %v852, %v1802
      %v1804 = vand.u32 %v1803, 4294901760
      %1805 = vmatpush1.msra.mxu0 %v1804
      %v1806 = vand.u32 %v851, 4294901760
      %v1807 = vsub.f32 %v851, %v1806
      %v1808 = vand.u32 %v1807, 4294901760
      %1809 = vmatprep.subr.mxu0 %v1808
      %v1810 = vand.u32 %v850, 4294901760
      %v1811 = vsub.f32 %v850, %v1810
      %v1812 = vand.u32 %v1811, 4294901760
      %1813 = vmatpush1.msra.mxu0 %v1812
      %v1814 = vand.u32 %v849, 4294901760
      %v1815 = vsub.f32 %v849, %v1814
      %v1816 = vand.u32 %v1815, 4294901760
      %1817 = vmatprep.subr.mxu0 %v1816
      %v1818 = vand.u32 %v848, 4294901760
      %v1819 = vsub.f32 %v848, %v1818
      %v1820 = vand.u32 %v1819, 4294901760
      %1821 = vmatpush1.msra.mxu0 %v1820
      %v1822 = vand.u32 %v847, 4294901760
      %v1823 = vsub.f32 %v847, %v1822
      %v1824 = vand.u32 %v1823, 4294901760
      %1825 = vmatprep.subr.mxu0 %v1824
      %v1826 = vand.u32 %v846, 4294901760
      %v1827 = vsub.f32 %v846, %v1826
      %v1828 = vand.u32 %v1827, 4294901760
      %1829 = vmatpush1.msra.mxu0 %v1828
      %v1830 = vand.u32 %v845, 4294901760
      %v1831 = vsub.f32 %v845, %v1830
      %v1832 = vand.u32 %v1831, 4294901760
      %1833 = vmatprep.subr.mxu0 %v1832
      %v1834 = vand.u32 %v844, 4294901760
      %v1835 = vsub.f32 %v844, %v1834
      %v1836 = vand.u32 %v1835, 4294901760
      %1837 = vmatpush1.msra.mxu0 %v1836
      %v1838 = vand.u32 %v843, 4294901760
      %v1839 = vsub.f32 %v843, %v1838
      %v1840 = vand.u32 %v1839, 4294901760
      %1841 = vmatprep.subr.mxu0 %v1840
      %v1842 = vand.u32 %v842, 4294901760
      %v1843 = vsub.f32 %v842, %v1842
      %v1844 = vand.u32 %v1843, 4294901760
      %1845 = vmatpush1.msra.mxu0 %v1844
      %v1846 = vand.u32 %v841, 4294901760
      %v1847 = vsub.f32 %v841, %v1846
      %v1848 = vand.u32 %v1847, 4294901760
      %1849 = vmatprep.subr.mxu0 %v1848
      %v1850 = vand.u32 %v840, 4294901760
      %v1851 = vsub.f32 %v840, %v1850
      %v1852 = vand.u32 %v1851, 4294901760
      %1853 = vmatpush1.msra.mxu0 %v1852
      %v1854 = vand.u32 %v839, 4294901760
      %v1855 = vsub.f32 %v839, %v1854
      %v1856 = vand.u32 %v1855, 4294901760
      %1857 = vmatprep.subr.mxu0 %v1856
      %v1858 = vand.u32 %v838, 4294901760
      %v1859 = vsub.f32 %v838, %v1858
      %v1860 = vand.u32 %v1859, 4294901760
      %1861 = vmatpush1.msra.mxu0 %v1860
      %v1862 = vand.u32 %v837, 4294901760
      %v1863 = vsub.f32 %v837, %v1862
      %v1864 = vand.u32 %v1863, 4294901760
      %1865 = vmatprep.subr.mxu0 %v1864
      %v1866 = vand.u32 %v836, 4294901760
      %v1867 = vsub.f32 %v836, %v1866
      %v1868 = vand.u32 %v1867, 4294901760
      %1869 = vmatpush1.msra.mxu0 %v1868
      %v1870 = vand.u32 %v835, 4294901760
      %v1871 = vsub.f32 %v835, %v1870
      %v1872 = vand.u32 %v1871, 4294901760
      %1873 = vmatprep.subr.mxu0 %v1872
      %v1874 = vand.u32 %v834, 4294901760
      %v1875 = vsub.f32 %v834, %v1874
      %v1876 = vand.u32 %v1875, 4294901760
      %1877 = vmatpush1.msra.mxu0 %v1876
      %v1878 = vand.u32 %v833, 4294901760
      %v1879 = vsub.f32 %v833, %v1878
      %v1880 = vand.u32 %v1879, 4294901760
      %1881 = vmatprep.subr.mxu0 %v1880
      %v1882 = vand.u32 %v832, 4294901760
      %v1883 = vsub.f32 %v832, %v1882
      %v1884 = vand.u32 %v1883, 4294901760
      %1885 = vmatpush1.msra.mxu0 %v1884
      %v1886 = vand.u32 %v831, 4294901760
      %v1887 = vsub.f32 %v831, %v1886
      %v1888 = vand.u32 %v1887, 4294901760
      %1889 = vmatprep.subr.mxu0 %v1888
      %v1890 = vand.u32 %v830, 4294901760
      %v1891 = vsub.f32 %v830, %v1890
      %v1892 = vand.u32 %v1891, 4294901760
      %1893 = vmatpush1.msra.mxu0 %v1892
      %v1894 = vand.u32 %v829, 4294901760
      %v1895 = vsub.f32 %v829, %v1894
      %v1896 = vand.u32 %v1895, 4294901760
      %1897 = vmatprep.subr.mxu0 %v1896
      %v1898 = vand.u32 %v828, 4294901760
      %v1899 = vsub.f32 %v828, %v1898
      %v1900 = vand.u32 %v1899, 4294901760
      %1901 = vmatpush1.msra.mxu0 %v1900
      %v1902 = vand.u32 %v891, 4294901760
      %v1903 = vsub.f32 %v891, %v1902
      %v1904 = vand.u32 %v1903, 4294901760
      %1905 = vmatprep.subr.mxu0 %v1904
      %v1906 = vand.u32 %v890, 4294901760
      %v1907 = vsub.f32 %v890, %v1906
      %v1908 = vand.u32 %v1907, 4294901760
      %1909 = vmatpush2.msra.mxu0 %v1908
      %v1910 = vand.u32 %v889, 4294901760
      %v1911 = vsub.f32 %v889, %v1910
      %v1912 = vand.u32 %v1911, 4294901760
      %1913 = vmatprep.subr.mxu0 %v1912
      %v1914 = vand.u32 %v888, 4294901760
      %v1915 = vsub.f32 %v888, %v1914
      %v1916 = vand.u32 %v1915, 4294901760
      %1917 = vmatpush2.msra.mxu0 %v1916
      %v1918 = vand.u32 %v887, 4294901760
      %v1919 = vsub.f32 %v887, %v1918
      %v1920 = vand.u32 %v1919, 4294901760
      %1921 = vmatprep.subr.mxu0 %v1920
      %v1922 = vand.u32 %v886, 4294901760
      %v1923 = vsub.f32 %v886, %v1922
      %v1924 = vand.u32 %v1923, 4294901760
      %1925 = vmatpush2.msra.mxu0 %v1924
      %v1926 = vand.u32 %v885, 4294901760
      %v1927 = vsub.f32 %v885, %v1926
      %v1928 = vand.u32 %v1927, 4294901760
      %1929 = vmatprep.subr.mxu0 %v1928
      %v1930 = vand.u32 %v884, 4294901760
      %v1931 = vsub.f32 %v884, %v1930
      %v1932 = vand.u32 %v1931, 4294901760
      %1933 = vmatpush2.msra.mxu0 %v1932
      %v1934 = vand.u32 %v883, 4294901760
      %v1935 = vsub.f32 %v883, %v1934
      %v1936 = vand.u32 %v1935, 4294901760
      %1937 = vmatprep.subr.mxu0 %v1936
      %v1938 = vand.u32 %v882, 4294901760
      %v1939 = vsub.f32 %v882, %v1938
      %v1940 = vand.u32 %v1939, 4294901760
      %1941 = vmatpush2.msra.mxu0 %v1940
      %v1942 = vand.u32 %v881, 4294901760
      %v1943 = vsub.f32 %v881, %v1942
      %v1944 = vand.u32 %v1943, 4294901760
      %1945 = vmatprep.subr.mxu0 %v1944
      %v1946 = vand.u32 %v880, 4294901760
      %v1947 = vsub.f32 %v880, %v1946
      %v1948 = vand.u32 %v1947, 4294901760
      %1949 = vmatpush2.msra.mxu0 %v1948
      %v1950 = vand.u32 %v879, 4294901760
      %v1951 = vsub.f32 %v879, %v1950
      %v1952 = vand.u32 %v1951, 4294901760
      %1953 = vmatprep.subr.mxu0 %v1952
      %v1954 = vand.u32 %v878, 4294901760
      %v1955 = vsub.f32 %v878, %v1954
      %v1956 = vand.u32 %v1955, 4294901760
      %1957 = vmatpush2.msra.mxu0 %v1956
      %v1958 = vand.u32 %v877, 4294901760
      %v1959 = vsub.f32 %v877, %v1958
      %v1960 = vand.u32 %v1959, 4294901760
      %1961 = vmatprep.subr.mxu0 %v1960
      %v1962 = vand.u32 %v876, 4294901760
      %v1963 = vsub.f32 %v876, %v1962
      %v1964 = vand.u32 %v1963, 4294901760
      %1965 = vmatpush2.msra.mxu0 %v1964
      %v1966 = vand.u32 %v875, 4294901760
      %v1967 = vsub.f32 %v875, %v1966
      %v1968 = vand.u32 %v1967, 4294901760
      %1969 = vmatprep.subr.mxu0 %v1968
      %v1970 = vand.u32 %v874, 4294901760
      %v1971 = vsub.f32 %v874, %v1970
      %v1972 = vand.u32 %v1971, 4294901760
      %1973 = vmatpush2.msra.mxu0 %v1972
      %v1974 = vand.u32 %v873, 4294901760
      %v1975 = vsub.f32 %v873, %v1974
      %v1976 = vand.u32 %v1975, 4294901760
      %1977 = vmatprep.subr.mxu0 %v1976
      %v1978 = vand.u32 %v872, 4294901760
      %v1979 = vsub.f32 %v872, %v1978
      %v1980 = vand.u32 %v1979, 4294901760
      %1981 = vmatpush2.msra.mxu0 %v1980
      %v1982 = vand.u32 %v871, 4294901760
      %v1983 = vsub.f32 %v871, %v1982
      %v1984 = vand.u32 %v1983, 4294901760
      %1985 = vmatprep.subr.mxu0 %v1984
      %v1986 = vand.u32 %v870, 4294901760
      %v1987 = vsub.f32 %v870, %v1986
      %v1988 = vand.u32 %v1987, 4294901760
      %1989 = vmatpush2.msra.mxu0 %v1988
      %v1990 = vand.u32 %v869, 4294901760
      %v1991 = vsub.f32 %v869, %v1990
      %v1992 = vand.u32 %v1991, 4294901760
      %1993 = vmatprep.subr.mxu0 %v1992
      %v1994 = vand.u32 %v868, 4294901760
      %v1995 = vsub.f32 %v868, %v1994
      %v1996 = vand.u32 %v1995, 4294901760
      %1997 = vmatpush2.msra.mxu0 %v1996
      %v1998 = vand.u32 %v867, 4294901760
      %v1999 = vsub.f32 %v867, %v1998
      %v2000 = vand.u32 %v1999, 4294901760
      %2001 = vmatprep.subr.mxu0 %v2000
      %v2002 = vand.u32 %v866, 4294901760
      %v2003 = vsub.f32 %v866, %v2002
      %v2004 = vand.u32 %v2003, 4294901760
      %2005 = vmatpush2.msra.mxu0 %v2004
      %v2006 = vand.u32 %v865, 4294901760
      %v2007 = vsub.f32 %v865, %v2006
      %v2008 = vand.u32 %v2007, 4294901760
      %2009 = vmatprep.subr.mxu0 %v2008
      %v2010 = vand.u32 %v864, 4294901760
      %v2011 = vsub.f32 %v864, %v2010
      %v2012 = vand.u32 %v2011, 4294901760
      %2013 = vmatpush2.msra.mxu0 %v2012
      %v2014 = vand.u32 %v863, 4294901760
      %v2015 = vsub.f32 %v863, %v2014
      %v2016 = vand.u32 %v2015, 4294901760
      %2017 = vmatprep.subr.mxu0 %v2016
      %v2018 = vand.u32 %v862, 4294901760
      %v2019 = vsub.f32 %v862, %v2018
      %v2020 = vand.u32 %v2019, 4294901760
      %2021 = vmatpush2.msra.mxu0 %v2020
      %v2022 = vand.u32 %v861, 4294901760
      %v2023 = vsub.f32 %v861, %v2022
      %v2024 = vand.u32 %v2023, 4294901760
      %2025 = vmatprep.subr.mxu0 %v2024
      %v2026 = vand.u32 %v860, 4294901760
      %v2027 = vsub.f32 %v860, %v2026
      %v2028 = vand.u32 %v2027, 4294901760
      %2029 = vmatpush2.msra.mxu0 %v2028
      %v2030 = vand.u32 %v762, 4294901760
      %2031 = vmatprep.mubr.f32.mxu0 %v2030
      %v2032 = vand.u32 %v761, 4294901760
      %2033 = vmatmul.mubr.f32.gmra.mxu0 %v2032
      %v2034 = vpop.f32.mrf.mxu0
      %v2035 = vadd.f32 %v1770, %v2034
      %v2036 = vpop.f32.mrf.mxu0
      %v2037 = vadd.f32 %v1772, %v2036
      %2038 = vdwg.mxu0
      %v2039 = vand.u32 %v859, 4294901760
      %2040 = vmatprep.subr.mxu0 %v2039
      %v2041 = vand.u32 %v858, 4294901760
      %2042 = vmatpush1.msra.mxu0 %v2041
      %v2043 = vand.u32 %v857, 4294901760
      %2044 = vmatprep.subr.mxu0 %v2043
      %v2045 = vand.u32 %v856, 4294901760
      %2046 = vmatpush1.msra.mxu0 %v2045
      %v2047 = vand.u32 %v855, 4294901760
      %2048 = vmatprep.subr.mxu0 %v2047
      %v2049 = vand.u32 %v854, 4294901760
      %2050 = vmatpush1.msra.mxu0 %v2049
      %v2051 = vand.u32 %v853, 4294901760
      %2052 = vmatprep.subr.mxu0 %v2051
      %v2053 = vand.u32 %v852, 4294901760
      %2054 = vmatpush1.msra.mxu0 %v2053
      %v2055 = vand.u32 %v851, 4294901760
      %2056 = vmatprep.subr.mxu0 %v2055
      %v2057 = vand.u32 %v850, 4294901760
      %2058 = vmatpush1.msra.mxu0 %v2057
      %v2059 = vand.u32 %v849, 4294901760
      %2060 = vmatprep.subr.mxu0 %v2059
      %v2061 = vand.u32 %v848, 4294901760
      %2062 = vmatpush1.msra.mxu0 %v2061
      %v2063 = vand.u32 %v847, 4294901760
      %2064 = vmatprep.subr.mxu0 %v2063
      %v2065 = vand.u32 %v846, 4294901760
      %2066 = vmatpush1.msra.mxu0 %v2065
      %v2067 = vand.u32 %v845, 4294901760
      %2068 = vmatprep.subr.mxu0 %v2067
      %v2069 = vand.u32 %v844, 4294901760
      %2070 = vmatpush1.msra.mxu0 %v2069
      %v2071 = vand.u32 %v843, 4294901760
      %2072 = vmatprep.subr.mxu0 %v2071
      %v2073 = vand.u32 %v842, 4294901760
      %2074 = vmatpush1.msra.mxu0 %v2073
      %v2075 = vand.u32 %v841, 4294901760
      %2076 = vmatprep.subr.mxu0 %v2075
      %v2077 = vand.u32 %v840, 4294901760
      %2078 = vmatpush1.msra.mxu0 %v2077
      %v2079 = vand.u32 %v839, 4294901760
      %2080 = vmatprep.subr.mxu0 %v2079
      %v2081 = vand.u32 %v838, 4294901760
      %2082 = vmatpush1.msra.mxu0 %v2081
      %v2083 = vand.u32 %v837, 4294901760
      %2084 = vmatprep.subr.mxu0 %v2083
      %v2085 = vand.u32 %v836, 4294901760
      %2086 = vmatpush1.msra.mxu0 %v2085
      %v2087 = vand.u32 %v835, 4294901760
      %2088 = vmatprep.subr.mxu0 %v2087
      %v2089 = vand.u32 %v834, 4294901760
      %2090 = vmatpush1.msra.mxu0 %v2089
      %v2091 = vand.u32 %v833, 4294901760
      %2092 = vmatprep.subr.mxu0 %v2091
      %v2093 = vand.u32 %v832, 4294901760
      %2094 = vmatpush1.msra.mxu0 %v2093
      %v2095 = vand.u32 %v831, 4294901760
      %2096 = vmatprep.subr.mxu0 %v2095
      %v2097 = vand.u32 %v830, 4294901760
      %2098 = vmatpush1.msra.mxu0 %v2097
      %v2099 = vand.u32 %v829, 4294901760
      %2100 = vmatprep.subr.mxu0 %v2099
      %v2101 = vand.u32 %v828, 4294901760
      %2102 = vmatpush1.msra.mxu0 %v2101
      %v2103 = vand.u32 %v891, 4294901760
      %2104 = vmatprep.subr.mxu0 %v2103
      %v2105 = vand.u32 %v890, 4294901760
      %2106 = vmatpush2.msra.mxu0 %v2105
      %v2107 = vand.u32 %v889, 4294901760
      %2108 = vmatprep.subr.mxu0 %v2107
      %v2109 = vand.u32 %v888, 4294901760
      %2110 = vmatpush2.msra.mxu0 %v2109
      %v2111 = vand.u32 %v887, 4294901760
      %2112 = vmatprep.subr.mxu0 %v2111
      %v2113 = vand.u32 %v886, 4294901760
      %2114 = vmatpush2.msra.mxu0 %v2113
      %v2115 = vand.u32 %v885, 4294901760
      %2116 = vmatprep.subr.mxu0 %v2115
      %v2117 = vand.u32 %v884, 4294901760
      %2118 = vmatpush2.msra.mxu0 %v2117
      %v2119 = vand.u32 %v883, 4294901760
      %2120 = vmatprep.subr.mxu0 %v2119
      %v2121 = vand.u32 %v882, 4294901760
      %2122 = vmatpush2.msra.mxu0 %v2121
      %v2123 = vand.u32 %v881, 4294901760
      %2124 = vmatprep.subr.mxu0 %v2123
      %v2125 = vand.u32 %v880, 4294901760
      %2126 = vmatpush2.msra.mxu0 %v2125
      %v2127 = vand.u32 %v879, 4294901760
      %2128 = vmatprep.subr.mxu0 %v2127
      %v2129 = vand.u32 %v878, 4294901760
      %2130 = vmatpush2.msra.mxu0 %v2129
      %v2131 = vand.u32 %v877, 4294901760
      %2132 = vmatprep.subr.mxu0 %v2131
      %v2133 = vand.u32 %v876, 4294901760
      %2134 = vmatpush2.msra.mxu0 %v2133
      %v2135 = vand.u32 %v875, 4294901760
      %2136 = vmatprep.subr.mxu0 %v2135
      %v2137 = vand.u32 %v874, 4294901760
      %2138 = vmatpush2.msra.mxu0 %v2137
      %v2139 = vand.u32 %v873, 4294901760
      %2140 = vmatprep.subr.mxu0 %v2139
      %v2141 = vand.u32 %v872, 4294901760
      %2142 = vmatpush2.msra.mxu0 %v2141
      %v2143 = vand.u32 %v871, 4294901760
      %2144 = vmatprep.subr.mxu0 %v2143
      %v2145 = vand.u32 %v870, 4294901760
      %2146 = vmatpush2.msra.mxu0 %v2145
      %v2147 = vand.u32 %v869, 4294901760
      %2148 = vmatprep.subr.mxu0 %v2147
      %v2149 = vand.u32 %v868, 4294901760
      %2150 = vmatpush2.msra.mxu0 %v2149
      %v2151 = vand.u32 %v867, 4294901760
      %2152 = vmatprep.subr.mxu0 %v2151
      %v2153 = vand.u32 %v866, 4294901760
      %2154 = vmatpush2.msra.mxu0 %v2153
      %v2155 = vand.u32 %v865, 4294901760
      %2156 = vmatprep.subr.mxu0 %v2155
      %v2157 = vand.u32 %v864, 4294901760
      %2158 = vmatpush2.msra.mxu0 %v2157
      %v2159 = vand.u32 %v863, 4294901760
      %2160 = vmatprep.subr.mxu0 %v2159
      %v2161 = vand.u32 %v862, 4294901760
      %2162 = vmatpush2.msra.mxu0 %v2161
      %v2163 = vand.u32 %v861, 4294901760
      %2164 = vmatprep.subr.mxu0 %v2163
      %v2165 = vand.u32 %v860, 4294901760
      %2166 = vmatpush2.msra.mxu0 %v2165
      %v2167 = vand.u32 %v762, 4294901760
      %2168 = vmatprep.mubr.f32.mxu0 %v2167
      %v2169 = vand.u32 %v761, 4294901760
      %2170 = vmatmul.mubr.f32.gmra.mxu0 %v2169
      %v2171 = vpop.f32.mrf.mxu0
      %v2172 = vadd.f32 %v2035, %v2171
      %v2173 = vpop.f32.mrf.mxu0
      %v2174 = vadd.f32 %v2037, %v2173
      %2175 = vdwg.mxu0
      %v2176 = vand.u32 %v794, 4294901760
      %2177 = vmatprep.subr.mxu0 %v2176
      %v2178 = vand.u32 %v793, 4294901760
      %2179 = vmatpush1.msra.mxu0 %v2178
      %v2180 = vand.u32 %v792, 4294901760
      %2181 = vmatprep.subr.mxu0 %v2180
      %v2182 = vand.u32 %v791, 4294901760
      %2183 = vmatpush1.msra.mxu0 %v2182
      %v2184 = vand.u32 %v790, 4294901760
      %2185 = vmatprep.subr.mxu0 %v2184
      %v2186 = vand.u32 %v789, 4294901760
      %2187 = vmatpush1.msra.mxu0 %v2186
      %v2188 = vand.u32 %v788, 4294901760
      %2189 = vmatprep.subr.mxu0 %v2188
      %v2190 = vand.u32 %v787, 4294901760
      %2191 = vmatpush1.msra.mxu0 %v2190
      %v2192 = vand.u32 %v786, 4294901760
      %2193 = vmatprep.subr.mxu0 %v2192
      %v2194 = vand.u32 %v785, 4294901760
      %2195 = vmatpush1.msra.mxu0 %v2194
      %v2196 = vand.u32 %v784, 4294901760
      %2197 = vmatprep.subr.mxu0 %v2196
      %v2198 = vand.u32 %v783, 4294901760
      %2199 = vmatpush1.msra.mxu0 %v2198
      %v2200 = vand.u32 %v782, 4294901760
      %2201 = vmatprep.subr.mxu0 %v2200
      %v2202 = vand.u32 %v781, 4294901760
      %2203 = vmatpush1.msra.mxu0 %v2202
      %v2204 = vand.u32 %v780, 4294901760
      %2205 = vmatprep.subr.mxu0 %v2204
      %v2206 = vand.u32 %v779, 4294901760
      %2207 = vmatpush1.msra.mxu0 %v2206
      %v2208 = vand.u32 %v778, 4294901760
      %2209 = vmatprep.subr.mxu0 %v2208
      %v2210 = vand.u32 %v777, 4294901760
      %2211 = vmatpush1.msra.mxu0 %v2210
      %v2212 = vand.u32 %v776, 4294901760
      %2213 = vmatprep.subr.mxu0 %v2212
      %v2214 = vand.u32 %v775, 4294901760
      %2215 = vmatpush1.msra.mxu0 %v2214
      %v2216 = vand.u32 %v774, 4294901760
      %2217 = vmatprep.subr.mxu0 %v2216
      %v2218 = vand.u32 %v773, 4294901760
      %2219 = vmatpush1.msra.mxu0 %v2218
      %v2220 = vand.u32 %v772, 4294901760
      %2221 = vmatprep.subr.mxu0 %v2220
      %v2222 = vand.u32 %v771, 4294901760
      %2223 = vmatpush1.msra.mxu0 %v2222
      %v2224 = vand.u32 %v770, 4294901760
      %2225 = vmatprep.subr.mxu0 %v2224
      %v2226 = vand.u32 %v769, 4294901760
      %2227 = vmatpush1.msra.mxu0 %v2226
      %v2228 = vand.u32 %v768, 4294901760
      %2229 = vmatprep.subr.mxu0 %v2228
      %v2230 = vand.u32 %v767, 4294901760
      %2231 = vmatpush1.msra.mxu0 %v2230
      %v2232 = vand.u32 %v766, 4294901760
      %2233 = vmatprep.subr.mxu0 %v2232
      %v2234 = vand.u32 %v765, 4294901760
      %2235 = vmatpush1.msra.mxu0 %v2234
      %v2236 = vand.u32 %v764, 4294901760
      %2237 = vmatprep.subr.mxu0 %v2236
      %v2238 = vand.u32 %v763, 4294901760
      %2239 = vmatpush1.msra.mxu0 %v2238
      %v2240 = vand.u32 %v826, 4294901760
      %2241 = vmatprep.subr.mxu0 %v2240
      %v2242 = vand.u32 %v825, 4294901760
      %2243 = vmatpush2.msra.mxu0 %v2242
      %v2244 = vand.u32 %v824, 4294901760
      %2245 = vmatprep.subr.mxu0 %v2244
      %v2246 = vand.u32 %v823, 4294901760
      %2247 = vmatpush2.msra.mxu0 %v2246
      %v2248 = vand.u32 %v822, 4294901760
      %2249 = vmatprep.subr.mxu0 %v2248
      %v2250 = vand.u32 %v821, 4294901760
      %2251 = vmatpush2.msra.mxu0 %v2250
      %v2252 = vand.u32 %v820, 4294901760
      %2253 = vmatprep.subr.mxu0 %v2252
      %v2254 = vand.u32 %v819, 4294901760
      %2255 = vmatpush2.msra.mxu0 %v2254
      %v2256 = vand.u32 %v818, 4294901760
      %2257 = vmatprep.subr.mxu0 %v2256
      %v2258 = vand.u32 %v817, 4294901760
      %2259 = vmatpush2.msra.mxu0 %v2258
      %v2260 = vand.u32 %v816, 4294901760
      %2261 = vmatprep.subr.mxu0 %v2260
      %v2262 = vand.u32 %v815, 4294901760
      %2263 = vmatpush2.msra.mxu0 %v2262
      %v2264 = vand.u32 %v814, 4294901760
      %2265 = vmatprep.subr.mxu0 %v2264
      %v2266 = vand.u32 %v813, 4294901760
      %2267 = vmatpush2.msra.mxu0 %v2266
      %v2268 = vand.u32 %v812, 4294901760
      %2269 = vmatprep.subr.mxu0 %v2268
      %v2270 = vand.u32 %v811, 4294901760
      %2271 = vmatpush2.msra.mxu0 %v2270
      %v2272 = vand.u32 %v810, 4294901760
      %2273 = vmatprep.subr.mxu0 %v2272
      %v2274 = vand.u32 %v809, 4294901760
      %2275 = vmatpush2.msra.mxu0 %v2274
      %v2276 = vand.u32 %v808, 4294901760
      %2277 = vmatprep.subr.mxu0 %v2276
      %v2278 = vand.u32 %v807, 4294901760
      %2279 = vmatpush2.msra.mxu0 %v2278
      %v2280 = vand.u32 %v806, 4294901760
      %2281 = vmatprep.subr.mxu0 %v2280
      %v2282 = vand.u32 %v805, 4294901760
      %2283 = vmatpush2.msra.mxu0 %v2282
      %v2284 = vand.u32 %v804, 4294901760
      %2285 = vmatprep.subr.mxu0 %v2284
      %v2286 = vand.u32 %v803, 4294901760
      %2287 = vmatpush2.msra.mxu0 %v2286
      %v2288 = vand.u32 %v802, 4294901760
      %2289 = vmatprep.subr.mxu0 %v2288
      %v2290 = vand.u32 %v801, 4294901760
      %2291 = vmatpush2.msra.mxu0 %v2290
      %v2292 = vand.u32 %v800, 4294901760
      %2293 = vmatprep.subr.mxu0 %v2292
      %v2294 = vand.u32 %v799, 4294901760
      %2295 = vmatpush2.msra.mxu0 %v2294
      %v2296 = vand.u32 %v798, 4294901760
      %2297 = vmatprep.subr.mxu0 %v2296
      %v2298 = vand.u32 %v797, 4294901760
      %2299 = vmatpush2.msra.mxu0 %v2298
      %v2300 = vand.u32 %v796, 4294901760
      %2301 = vmatprep.subr.mxu0 %v2300
      %v2302 = vand.u32 %v795, 4294901760
      %2303 = vmatpush2.msra.mxu0 %v2302
      %v2304 = vand.u32 %v746, 4294901760
      %v2305 = vsub.f32 %v746, %v2304
      %v2306 = vand.u32 %v2305, 4294901760
      %v2307 = vsub.f32 %v2305, %v2306
      %v2308 = vand.u32 %v2307, 4294901760
      %2309 = vmatprep.mubr.f32.mxu0 %v2308
      %v2310 = vand.u32 %v739, 4294901760
      %v2311 = vsub.f32 %v739, %v2310
      %v2312 = vand.u32 %v2311, 4294901760
      %v2313 = vsub.f32 %v2311, %v2312
      %v2314 = vand.u32 %v2313, 4294901760
      %2315 = vmatmul.mubr.f32.gmra.mxu0 %v2314
      %v2316 = vpop.f32.mrf.mxu0
      %v2317 = vadd.f32 %v2172, %v2316
      %v2318 = vpop.f32.mrf.mxu0
      %v2319 = vadd.f32 %v2174, %v2318
      %2320 = vdwg.mxu0
      %v2321 = vand.u32 %v794, 4294901760
      %v2322 = vsub.f32 %v794, %v2321
      %v2323 = vand.u32 %v2322, 4294901760
      %v2324 = vsub.f32 %v2322, %v2323
      %v2325 = vand.u32 %v2324, 4294901760
      %2326 = vmatprep.subr.mxu0 %v2325
      %v2327 = vand.u32 %v793, 4294901760
      %v2328 = vsub.f32 %v793, %v2327
      %v2329 = vand.u32 %v2328, 4294901760
      %v2330 = vsub.f32 %v2328, %v2329
      %v2331 = vand.u32 %v2330, 4294901760
      %2332 = vmatpush1.msra.mxu0 %v2331
      %v2333 = vand.u32 %v792, 4294901760
      %v2334 = vsub.f32 %v792, %v2333
      %v2335 = vand.u32 %v2334, 4294901760
      %v2336 = vsub.f32 %v2334, %v2335
      %v2337 = vand.u32 %v2336, 4294901760
      %2338 = vmatprep.subr.mxu0 %v2337
      %v2339 = vand.u32 %v791, 4294901760
      %v2340 = vsub.f32 %v791, %v2339
      %v2341 = vand.u32 %v2340, 4294901760
      %v2342 = vsub.f32 %v2340, %v2341
      %v2343 = vand.u32 %v2342, 4294901760
      %2344 = vmatpush1.msra.mxu0 %v2343
      %v2345 = vand.u32 %v790, 4294901760
      %v2346 = vsub.f32 %v790, %v2345
      %v2347 = vand.u32 %v2346, 4294901760
      %v2348 = vsub.f32 %v2346, %v2347
      %v2349 = vand.u32 %v2348, 4294901760
      %2350 = vmatprep.subr.mxu0 %v2349
      %v2351 = vand.u32 %v789, 4294901760
      %v2352 = vsub.f32 %v789, %v2351
      %v2353 = vand.u32 %v2352, 4294901760
      %v2354 = vsub.f32 %v2352, %v2353
      %v2355 = vand.u32 %v2354, 4294901760
      %2356 = vmatpush1.msra.mxu0 %v2355
      %v2357 = vand.u32 %v788, 4294901760
      %v2358 = vsub.f32 %v788, %v2357
      %v2359 = vand.u32 %v2358, 4294901760
      %v2360 = vsub.f32 %v2358, %v2359
      %v2361 = vand.u32 %v2360, 4294901760
      %2362 = vmatprep.subr.mxu0 %v2361
      %v2363 = vand.u32 %v787, 4294901760
      %v2364 = vsub.f32 %v787, %v2363
      %v2365 = vand.u32 %v2364, 4294901760
      %v2366 = vsub.f32 %v2364, %v2365
      %v2367 = vand.u32 %v2366, 4294901760
      %2368 = vmatpush1.msra.mxu0 %v2367
      %v2369 = vand.u32 %v786, 4294901760
      %v2370 = vsub.f32 %v786, %v2369
      %v2371 = vand.u32 %v2370, 4294901760
      %v2372 = vsub.f32 %v2370, %v2371
      %v2373 = vand.u32 %v2372, 4294901760
      %2374 = vmatprep.subr.mxu0 %v2373
      %v2375 = vand.u32 %v785, 4294901760
      %v2376 = vsub.f32 %v785, %v2375
      %v2377 = vand.u32 %v2376, 4294901760
      %v2378 = vsub.f32 %v2376, %v2377
      %v2379 = vand.u32 %v2378, 4294901760
      %2380 = vmatpush1.msra.mxu0 %v2379
      %v2381 = vand.u32 %v784, 4294901760
      %v2382 = vsub.f32 %v784, %v2381
      %v2383 = vand.u32 %v2382, 4294901760
      %v2384 = vsub.f32 %v2382, %v2383
      %v2385 = vand.u32 %v2384, 4294901760
      %2386 = vmatprep.subr.mxu0 %v2385
      %v2387 = vand.u32 %v783, 4294901760
      %v2388 = vsub.f32 %v783, %v2387
      %v2389 = vand.u32 %v2388, 4294901760
      %v2390 = vsub.f32 %v2388, %v2389
      %v2391 = vand.u32 %v2390, 4294901760
      %2392 = vmatpush1.msra.mxu0 %v2391
      %v2393 = vand.u32 %v782, 4294901760
      %v2394 = vsub.f32 %v782, %v2393
      %v2395 = vand.u32 %v2394, 4294901760
      %v2396 = vsub.f32 %v2394, %v2395
      %v2397 = vand.u32 %v2396, 4294901760
      %2398 = vmatprep.subr.mxu0 %v2397
      %v2399 = vand.u32 %v781, 4294901760
      %v2400 = vsub.f32 %v781, %v2399
      %v2401 = vand.u32 %v2400, 4294901760
      %v2402 = vsub.f32 %v2400, %v2401
      %v2403 = vand.u32 %v2402, 4294901760
      %2404 = vmatpush1.msra.mxu0 %v2403
      %v2405 = vand.u32 %v780, 4294901760
      %v2406 = vsub.f32 %v780, %v2405
      %v2407 = vand.u32 %v2406, 4294901760
      %v2408 = vsub.f32 %v2406, %v2407
      %v2409 = vand.u32 %v2408, 4294901760
      %2410 = vmatprep.subr.mxu0 %v2409
      %v2411 = vand.u32 %v779, 4294901760
      %v2412 = vsub.f32 %v779, %v2411
      %v2413 = vand.u32 %v2412, 4294901760
      %v2414 = vsub.f32 %v2412, %v2413
      %v2415 = vand.u32 %v2414, 4294901760
      %2416 = vmatpush1.msra.mxu0 %v2415
      %v2417 = vand.u32 %v778, 4294901760
      %v2418 = vsub.f32 %v778, %v2417
      %v2419 = vand.u32 %v2418, 4294901760
      %v2420 = vsub.f32 %v2418, %v2419
      %v2421 = vand.u32 %v2420, 4294901760
      %2422 = vmatprep.subr.mxu0 %v2421
      %v2423 = vand.u32 %v777, 4294901760
      %v2424 = vsub.f32 %v777, %v2423
      %v2425 = vand.u32 %v2424, 4294901760
      %v2426 = vsub.f32 %v2424, %v2425
      %v2427 = vand.u32 %v2426, 4294901760
      %2428 = vmatpush1.msra.mxu0 %v2427
      %v2429 = vand.u32 %v776, 4294901760
      %v2430 = vsub.f32 %v776, %v2429
      %v2431 = vand.u32 %v2430, 4294901760
      %v2432 = vsub.f32 %v2430, %v2431
      %v2433 = vand.u32 %v2432, 4294901760
      %2434 = vmatprep.subr.mxu0 %v2433
      %v2435 = vand.u32 %v775, 4294901760
      %v2436 = vsub.f32 %v775, %v2435
      %v2437 = vand.u32 %v2436, 4294901760
      %v2438 = vsub.f32 %v2436, %v2437
      %v2439 = vand.u32 %v2438, 4294901760
      %2440 = vmatpush1.msra.mxu0 %v2439
      %v2441 = vand.u32 %v774, 4294901760
      %v2442 = vsub.f32 %v774, %v2441
      %v2443 = vand.u32 %v2442, 4294901760
      %v2444 = vsub.f32 %v2442, %v2443
      %v2445 = vand.u32 %v2444, 4294901760
      %2446 = vmatprep.subr.mxu0 %v2445
      %v2447 = vand.u32 %v773, 4294901760
      %v2448 = vsub.f32 %v773, %v2447
      %v2449 = vand.u32 %v2448, 4294901760
      %v2450 = vsub.f32 %v2448, %v2449
      %v2451 = vand.u32 %v2450, 4294901760
      %2452 = vmatpush1.msra.mxu0 %v2451
      %v2453 = vand.u32 %v772, 4294901760
      %v2454 = vsub.f32 %v772, %v2453
      %v2455 = vand.u32 %v2454, 4294901760
      %v2456 = vsub.f32 %v2454, %v2455
      %v2457 = vand.u32 %v2456, 4294901760
      %2458 = vmatprep.subr.mxu0 %v2457
      %v2459 = vand.u32 %v771, 4294901760
      %v2460 = vsub.f32 %v771, %v2459
      %v2461 = vand.u32 %v2460, 4294901760
      %v2462 = vsub.f32 %v2460, %v2461
      %v2463 = vand.u32 %v2462, 4294901760
      %2464 = vmatpush1.msra.mxu0 %v2463
      %v2465 = vand.u32 %v770, 4294901760
      %v2466 = vsub.f32 %v770, %v2465
      %v2467 = vand.u32 %v2466, 4294901760
      %v2468 = vsub.f32 %v2466, %v2467
      %v2469 = vand.u32 %v2468, 4294901760
      %2470 = vmatprep.subr.mxu0 %v2469
      %v2471 = vand.u32 %v769, 4294901760
      %v2472 = vsub.f32 %v769, %v2471
      %v2473 = vand.u32 %v2472, 4294901760
      %v2474 = vsub.f32 %v2472, %v2473
      %v2475 = vand.u32 %v2474, 4294901760
      %2476 = vmatpush1.msra.mxu0 %v2475
      %v2477 = vand.u32 %v768, 4294901760
      %v2478 = vsub.f32 %v768, %v2477
      %v2479 = vand.u32 %v2478, 4294901760
      %v2480 = vsub.f32 %v2478, %v2479
      %v2481 = vand.u32 %v2480, 4294901760
      %2482 = vmatprep.subr.mxu0 %v2481
      %v2483 = vand.u32 %v767, 4294901760
      %v2484 = vsub.f32 %v767, %v2483
      %v2485 = vand.u32 %v2484, 4294901760
      %v2486 = vsub.f32 %v2484, %v2485
      %v2487 = vand.u32 %v2486, 4294901760
      %2488 = vmatpush1.msra.mxu0 %v2487
      %v2489 = vand.u32 %v766, 4294901760
      %v2490 = vsub.f32 %v766, %v2489
      %v2491 = vand.u32 %v2490, 4294901760
      %v2492 = vsub.f32 %v2490, %v2491
      %v2493 = vand.u32 %v2492, 4294901760
      %2494 = vmatprep.subr.mxu0 %v2493
      %v2495 = vand.u32 %v765, 4294901760
      %v2496 = vsub.f32 %v765, %v2495
      %v2497 = vand.u32 %v2496, 4294901760
      %v2498 = vsub.f32 %v2496, %v2497
      %v2499 = vand.u32 %v2498, 4294901760
      %2500 = vmatpush1.msra.mxu0 %v2499
      %v2501 = vand.u32 %v764, 4294901760
      %v2502 = vsub.f32 %v764, %v2501
      %v2503 = vand.u32 %v2502, 4294901760
      %v2504 = vsub.f32 %v2502, %v2503
      %v2505 = vand.u32 %v2504, 4294901760
      %2506 = vmatprep.subr.mxu0 %v2505
      %v2507 = vand.u32 %v763, 4294901760
      %v2508 = vsub.f32 %v763, %v2507
      %v2509 = vand.u32 %v2508, 4294901760
      %v2510 = vsub.f32 %v2508, %v2509
      %v2511 = vand.u32 %v2510, 4294901760
      %2512 = vmatpush1.msra.mxu0 %v2511
      %v2513 = vand.u32 %v826, 4294901760
      %v2514 = vsub.f32 %v826, %v2513
      %v2515 = vand.u32 %v2514, 4294901760
      %v2516 = vsub.f32 %v2514, %v2515
      %v2517 = vand.u32 %v2516, 4294901760
      %2518 = vmatprep.subr.mxu0 %v2517
      %v2519 = vand.u32 %v825, 4294901760
      %v2520 = vsub.f32 %v825, %v2519
      %v2521 = vand.u32 %v2520, 4294901760
      %v2522 = vsub.f32 %v2520, %v2521
      %v2523 = vand.u32 %v2522, 4294901760
      %2524 = vmatpush2.msra.mxu0 %v2523
      %v2525 = vand.u32 %v824, 4294901760
      %v2526 = vsub.f32 %v824, %v2525
      %v2527 = vand.u32 %v2526, 4294901760
      %v2528 = vsub.f32 %v2526, %v2527
      %v2529 = vand.u32 %v2528, 4294901760
      %2530 = vmatprep.subr.mxu0 %v2529
      %v2531 = vand.u32 %v823, 4294901760
      %v2532 = vsub.f32 %v823, %v2531
      %v2533 = vand.u32 %v2532, 4294901760
      %v2534 = vsub.f32 %v2532, %v2533
      %v2535 = vand.u32 %v2534, 4294901760
      %2536 = vmatpush2.msra.mxu0 %v2535
      %v2537 = vand.u32 %v822, 4294901760
      %v2538 = vsub.f32 %v822, %v2537
      %v2539 = vand.u32 %v2538, 4294901760
      %v2540 = vsub.f32 %v2538, %v2539
      %v2541 = vand.u32 %v2540, 4294901760
      %2542 = vmatprep.subr.mxu0 %v2541
      %v2543 = vand.u32 %v821, 4294901760
      %v2544 = vsub.f32 %v821, %v2543
      %v2545 = vand.u32 %v2544, 4294901760
      %v2546 = vsub.f32 %v2544, %v2545
      %v2547 = vand.u32 %v2546, 4294901760
      %2548 = vmatpush2.msra.mxu0 %v2547
      %v2549 = vand.u32 %v820, 4294901760
      %v2550 = vsub.f32 %v820, %v2549
      %v2551 = vand.u32 %v2550, 4294901760
      %v2552 = vsub.f32 %v2550, %v2551
      %v2553 = vand.u32 %v2552, 4294901760
      %2554 = vmatprep.subr.mxu0 %v2553
      %v2555 = vand.u32 %v819, 4294901760
      %v2556 = vsub.f32 %v819, %v2555
      %v2557 = vand.u32 %v2556, 4294901760
      %v2558 = vsub.f32 %v2556, %v2557
      %v2559 = vand.u32 %v2558, 4294901760
      %2560 = vmatpush2.msra.mxu0 %v2559
      %v2561 = vand.u32 %v818, 4294901760
      %v2562 = vsub.f32 %v818, %v2561
      %v2563 = vand.u32 %v2562, 4294901760
      %v2564 = vsub.f32 %v2562, %v2563
      %v2565 = vand.u32 %v2564, 4294901760
      %2566 = vmatprep.subr.mxu0 %v2565
      %v2567 = vand.u32 %v817, 4294901760
      %v2568 = vsub.f32 %v817, %v2567
      %v2569 = vand.u32 %v2568, 4294901760
      %v2570 = vsub.f32 %v2568, %v2569
      %v2571 = vand.u32 %v2570, 4294901760
      %2572 = vmatpush2.msra.mxu0 %v2571
      %v2573 = vand.u32 %v816, 4294901760
      %v2574 = vsub.f32 %v816, %v2573
      %v2575 = vand.u32 %v2574, 4294901760
      %v2576 = vsub.f32 %v2574, %v2575
      %v2577 = vand.u32 %v2576, 4294901760
      %2578 = vmatprep.subr.mxu0 %v2577
      %v2579 = vand.u32 %v815, 4294901760
      %v2580 = vsub.f32 %v815, %v2579
      %v2581 = vand.u32 %v2580, 4294901760
      %v2582 = vsub.f32 %v2580, %v2581
      %v2583 = vand.u32 %v2582, 4294901760
      %2584 = vmatpush2.msra.mxu0 %v2583
      %v2585 = vand.u32 %v814, 4294901760
      %v2586 = vsub.f32 %v814, %v2585
      %v2587 = vand.u32 %v2586, 4294901760
      %v2588 = vsub.f32 %v2586, %v2587
      %v2589 = vand.u32 %v2588, 4294901760
      %2590 = vmatprep.subr.mxu0 %v2589
      %v2591 = vand.u32 %v813, 4294901760
      %v2592 = vsub.f32 %v813, %v2591
      %v2593 = vand.u32 %v2592, 4294901760
      %v2594 = vsub.f32 %v2592, %v2593
      %v2595 = vand.u32 %v2594, 4294901760
      %2596 = vmatpush2.msra.mxu0 %v2595
      %v2597 = vand.u32 %v812, 4294901760
      %v2598 = vsub.f32 %v812, %v2597
      %v2599 = vand.u32 %v2598, 4294901760
      %v2600 = vsub.f32 %v2598, %v2599
      %v2601 = vand.u32 %v2600, 4294901760
      %2602 = vmatprep.subr.mxu0 %v2601
      %v2603 = vand.u32 %v811, 4294901760
      %v2604 = vsub.f32 %v811, %v2603
      %v2605 = vand.u32 %v2604, 4294901760
      %v2606 = vsub.f32 %v2604, %v2605
      %v2607 = vand.u32 %v2606, 4294901760
      %2608 = vmatpush2.msra.mxu0 %v2607
      %v2609 = vand.u32 %v810, 4294901760
      %v2610 = vsub.f32 %v810, %v2609
      %v2611 = vand.u32 %v2610, 4294901760
      %v2612 = vsub.f32 %v2610, %v2611
      %v2613 = vand.u32 %v2612, 4294901760
      %2614 = vmatprep.subr.mxu0 %v2613
      %v2615 = vand.u32 %v809, 4294901760
      %v2616 = vsub.f32 %v809, %v2615
      %v2617 = vand.u32 %v2616, 4294901760
      %v2618 = vsub.f32 %v2616, %v2617
      %v2619 = vand.u32 %v2618, 4294901760
      %2620 = vmatpush2.msra.mxu0 %v2619
      %v2621 = vand.u32 %v808, 4294901760
      %v2622 = vsub.f32 %v808, %v2621
      %v2623 = vand.u32 %v2622, 4294901760
      %v2624 = vsub.f32 %v2622, %v2623
      %v2625 = vand.u32 %v2624, 4294901760
      %2626 = vmatprep.subr.mxu0 %v2625
      %v2627 = vand.u32 %v807, 4294901760
      %v2628 = vsub.f32 %v807, %v2627
      %v2629 = vand.u32 %v2628, 4294901760
      %v2630 = vsub.f32 %v2628, %v2629
      %v2631 = vand.u32 %v2630, 4294901760
      %2632 = vmatpush2.msra.mxu0 %v2631
      %v2633 = vand.u32 %v806, 4294901760
      %v2634 = vsub.f32 %v806, %v2633
      %v2635 = vand.u32 %v2634, 4294901760
      %v2636 = vsub.f32 %v2634, %v2635
      %v2637 = vand.u32 %v2636, 4294901760
      %2638 = vmatprep.subr.mxu0 %v2637
      %v2639 = vand.u32 %v805, 4294901760
      %v2640 = vsub.f32 %v805, %v2639
      %v2641 = vand.u32 %v2640, 4294901760
      %v2642 = vsub.f32 %v2640, %v2641
      %v2643 = vand.u32 %v2642, 4294901760
      %2644 = vmatpush2.msra.mxu0 %v2643
      %v2645 = vand.u32 %v804, 4294901760
      %v2646 = vsub.f32 %v804, %v2645
      %v2647 = vand.u32 %v2646, 4294901760
      %v2648 = vsub.f32 %v2646, %v2647
      %v2649 = vand.u32 %v2648, 4294901760
      %2650 = vmatprep.subr.mxu0 %v2649
      %v2651 = vand.u32 %v803, 4294901760
      %v2652 = vsub.f32 %v803, %v2651
      %v2653 = vand.u32 %v2652, 4294901760
      %v2654 = vsub.f32 %v2652, %v2653
      %v2655 = vand.u32 %v2654, 4294901760
      %2656 = vmatpush2.msra.mxu0 %v2655
      %v2657 = vand.u32 %v802, 4294901760
      %v2658 = vsub.f32 %v802, %v2657
      %v2659 = vand.u32 %v2658, 4294901760
      %v2660 = vsub.f32 %v2658, %v2659
      %v2661 = vand.u32 %v2660, 4294901760
      %2662 = vmatprep.subr.mxu0 %v2661
      %v2663 = vand.u32 %v801, 4294901760
      %v2664 = vsub.f32 %v801, %v2663
      %v2665 = vand.u32 %v2664, 4294901760
      %v2666 = vsub.f32 %v2664, %v2665
      %v2667 = vand.u32 %v2666, 4294901760
      %2668 = vmatpush2.msra.mxu0 %v2667
      %v2669 = vand.u32 %v800, 4294901760
      %v2670 = vsub.f32 %v800, %v2669
      %v2671 = vand.u32 %v2670, 4294901760
      %v2672 = vsub.f32 %v2670, %v2671
      %v2673 = vand.u32 %v2672, 4294901760
      %2674 = vmatprep.subr.mxu0 %v2673
      %v2675 = vand.u32 %v799, 4294901760
      %v2676 = vsub.f32 %v799, %v2675
      %v2677 = vand.u32 %v2676, 4294901760
      %v2678 = vsub.f32 %v2676, %v2677
      %v2679 = vand.u32 %v2678, 4294901760
      %2680 = vmatpush2.msra.mxu0 %v2679
      %v2681 = vand.u32 %v798, 4294901760
      %v2682 = vsub.f32 %v798, %v2681
      %v2683 = vand.u32 %v2682, 4294901760
      %v2684 = vsub.f32 %v2682, %v2683
      %v2685 = vand.u32 %v2684, 4294901760
      %2686 = vmatprep.subr.mxu0 %v2685
      %v2687 = vand.u32 %v797, 4294901760
      %v2688 = vsub.f32 %v797, %v2687
      %v2689 = vand.u32 %v2688, 4294901760
      %v2690 = vsub.f32 %v2688, %v2689
      %v2691 = vand.u32 %v2690, 4294901760
      %2692 = vmatpush2.msra.mxu0 %v2691
      %v2693 = vand.u32 %v796, 4294901760
      %v2694 = vsub.f32 %v796, %v2693
      %v2695 = vand.u32 %v2694, 4294901760
      %v2696 = vsub.f32 %v2694, %v2695
      %v2697 = vand.u32 %v2696, 4294901760
      %2698 = vmatprep.subr.mxu0 %v2697
      %v2699 = vand.u32 %v795, 4294901760
      %v2700 = vsub.f32 %v795, %v2699
      %v2701 = vand.u32 %v2700, 4294901760
      %v2702 = vsub.f32 %v2700, %v2701
      %v2703 = vand.u32 %v2702, 4294901760
      %2704 = vmatpush2.msra.mxu0 %v2703
      %v2705 = vand.u32 %v746, 4294901760
      %2706 = vmatprep.mubr.f32.mxu0 %v2705
      %v2707 = vand.u32 %v739, 4294901760
      %2708 = vmatmul.mubr.f32.gmra.mxu0 %v2707
      %v2709 = vpop.f32.mrf.mxu0
      %v2710 = vadd.f32 %v2317, %v2709
      %v2711 = vpop.f32.mrf.mxu0
      %v2712 = vadd.f32 %v2319, %v2711
      %2713 = vdwg.mxu0
      %v2714 = vand.u32 %v794, 4294901760
      %v2715 = vsub.f32 %v794, %v2714
      %2716 = vmatprep.subr.mxu0 %v2715
      %v2717 = vand.u32 %v793, 4294901760
      %v2718 = vsub.f32 %v793, %v2717
      %2719 = vmatpush1.msra.mxu0 %v2718
      %v2720 = vand.u32 %v792, 4294901760
      %v2721 = vsub.f32 %v792, %v2720
      %2722 = vmatprep.subr.mxu0 %v2721
      %v2723 = vand.u32 %v791, 4294901760
      %v2724 = vsub.f32 %v791, %v2723
      %2725 = vmatpush1.msra.mxu0 %v2724
      %v2726 = vand.u32 %v790, 4294901760
      %v2727 = vsub.f32 %v790, %v2726
      %2728 = vmatprep.subr.mxu0 %v2727
      %v2729 = vand.u32 %v789, 4294901760
      %v2730 = vsub.f32 %v789, %v2729
      %2731 = vmatpush1.msra.mxu0 %v2730
      %v2732 = vand.u32 %v788, 4294901760
      %v2733 = vsub.f32 %v788, %v2732
      %2734 = vmatprep.subr.mxu0 %v2733
      %v2735 = vand.u32 %v787, 4294901760
      %v2736 = vsub.f32 %v787, %v2735
      %2737 = vmatpush1.msra.mxu0 %v2736
      %v2738 = vand.u32 %v786, 4294901760
      %v2739 = vsub.f32 %v786, %v2738
      %2740 = vmatprep.subr.mxu0 %v2739
      %v2741 = vand.u32 %v785, 4294901760
      %v2742 = vsub.f32 %v785, %v2741
      %2743 = vmatpush1.msra.mxu0 %v2742
      %v2744 = vand.u32 %v784, 4294901760
      %v2745 = vsub.f32 %v784, %v2744
      %2746 = vmatprep.subr.mxu0 %v2745
      %v2747 = vand.u32 %v783, 4294901760
      %v2748 = vsub.f32 %v783, %v2747
      %2749 = vmatpush1.msra.mxu0 %v2748
      %v2750 = vand.u32 %v782, 4294901760
      %v2751 = vsub.f32 %v782, %v2750
      %2752 = vmatprep.subr.mxu0 %v2751
      %v2753 = vand.u32 %v781, 4294901760
      %v2754 = vsub.f32 %v781, %v2753
      %2755 = vmatpush1.msra.mxu0 %v2754
      %v2756 = vand.u32 %v780, 4294901760
      %v2757 = vsub.f32 %v780, %v2756
      %2758 = vmatprep.subr.mxu0 %v2757
      %v2759 = vand.u32 %v779, 4294901760
      %v2760 = vsub.f32 %v779, %v2759
      %2761 = vmatpush1.msra.mxu0 %v2760
      %v2762 = vand.u32 %v778, 4294901760
      %v2763 = vsub.f32 %v778, %v2762
      %2764 = vmatprep.subr.mxu0 %v2763
      %v2765 = vand.u32 %v777, 4294901760
      %v2766 = vsub.f32 %v777, %v2765
      %2767 = vmatpush1.msra.mxu0 %v2766
      %v2768 = vand.u32 %v776, 4294901760
      %v2769 = vsub.f32 %v776, %v2768
      %2770 = vmatprep.subr.mxu0 %v2769
      %v2771 = vand.u32 %v775, 4294901760
      %v2772 = vsub.f32 %v775, %v2771
      %2773 = vmatpush1.msra.mxu0 %v2772
      %v2774 = vand.u32 %v774, 4294901760
      %v2775 = vsub.f32 %v774, %v2774
      %2776 = vmatprep.subr.mxu0 %v2775
      %v2777 = vand.u32 %v773, 4294901760
      %v2778 = vsub.f32 %v773, %v2777
      %2779 = vmatpush1.msra.mxu0 %v2778
      %v2780 = vand.u32 %v772, 4294901760
      %v2781 = vsub.f32 %v772, %v2780
      %2782 = vmatprep.subr.mxu0 %v2781
      %v2783 = vand.u32 %v771, 4294901760
      %v2784 = vsub.f32 %v771, %v2783
      %2785 = vmatpush1.msra.mxu0 %v2784
      %v2786 = vand.u32 %v770, 4294901760
      %v2787 = vsub.f32 %v770, %v2786
      %2788 = vmatprep.subr.mxu0 %v2787
      %v2789 = vand.u32 %v769, 4294901760
      %v2790 = vsub.f32 %v769, %v2789
      %2791 = vmatpush1.msra.mxu0 %v2790
      %v2792 = vand.u32 %v768, 4294901760
      %v2793 = vsub.f32 %v768, %v2792
      %2794 = vmatprep.subr.mxu0 %v2793
      %v2795 = vand.u32 %v767, 4294901760
      %v2796 = vsub.f32 %v767, %v2795
      %2797 = vmatpush1.msra.mxu0 %v2796
      %v2798 = vand.u32 %v766, 4294901760
      %v2799 = vsub.f32 %v766, %v2798
      %2800 = vmatprep.subr.mxu0 %v2799
      %v2801 = vand.u32 %v765, 4294901760
      %v2802 = vsub.f32 %v765, %v2801
      %2803 = vmatpush1.msra.mxu0 %v2802
      %v2804 = vand.u32 %v764, 4294901760
      %v2805 = vsub.f32 %v764, %v2804
      %2806 = vmatprep.subr.mxu0 %v2805
      %v2807 = vand.u32 %v763, 4294901760
      %v2808 = vsub.f32 %v763, %v2807
      %2809 = vmatpush1.msra.mxu0 %v2808
      %v2810 = vand.u32 %v826, 4294901760
      %v2811 = vsub.f32 %v826, %v2810
      %2812 = vmatprep.subr.mxu0 %v2811
      %v2813 = vand.u32 %v825, 4294901760
      %v2814 = vsub.f32 %v825, %v2813
      %2815 = vmatpush2.msra.mxu0 %v2814
      %v2816 = vand.u32 %v824, 4294901760
      %v2817 = vsub.f32 %v824, %v2816
      %2818 = vmatprep.subr.mxu0 %v2817
      %v2819 = vand.u32 %v823, 4294901760
      %v2820 = vsub.f32 %v823, %v2819
      %2821 = vmatpush2.msra.mxu0 %v2820
      %v2822 = vand.u32 %v822, 4294901760
      %v2823 = vsub.f32 %v822, %v2822
      %2824 = vmatprep.subr.mxu0 %v2823
      %v2825 = vand.u32 %v821, 4294901760
      %v2826 = vsub.f32 %v821, %v2825
      %2827 = vmatpush2.msra.mxu0 %v2826
      %v2828 = vand.u32 %v820, 4294901760
      %v2829 = vsub.f32 %v820, %v2828
      %2830 = vmatprep.subr.mxu0 %v2829
      %v2831 = vand.u32 %v819, 4294901760
      %v2832 = vsub.f32 %v819, %v2831
      %2833 = vmatpush2.msra.mxu0 %v2832
      %v2834 = vand.u32 %v818, 4294901760
      %v2835 = vsub.f32 %v818, %v2834
      %2836 = vmatprep.subr.mxu0 %v2835
      %v2837 = vand.u32 %v817, 4294901760
      %v2838 = vsub.f32 %v817, %v2837
      %2839 = vmatpush2.msra.mxu0 %v2838
      %v2840 = vand.u32 %v816, 4294901760
      %v2841 = vsub.f32 %v816, %v2840
      %2842 = vmatprep.subr.mxu0 %v2841
      %v2843 = vand.u32 %v815, 4294901760
      %v2844 = vsub.f32 %v815, %v2843
      %2845 = vmatpush2.msra.mxu0 %v2844
      %v2846 = vand.u32 %v814, 4294901760
      %v2847 = vsub.f32 %v814, %v2846
      %2848 = vmatprep.subr.mxu0 %v2847
      %v2849 = vand.u32 %v813, 4294901760
      %v2850 = vsub.f32 %v813, %v2849
      %2851 = vmatpush2.msra.mxu0 %v2850
      %v2852 = vand.u32 %v812, 4294901760
      %v2853 = vsub.f32 %v812, %v2852
      %2854 = vmatprep.subr.mxu0 %v2853
      %v2855 = vand.u32 %v811, 4294901760
      %v2856 = vsub.f32 %v811, %v2855
      %2857 = vmatpush2.msra.mxu0 %v2856
      %v2858 = vand.u32 %v810, 4294901760
      %v2859 = vsub.f32 %v810, %v2858
      %2860 = vmatprep.subr.mxu0 %v2859
      %v2861 = vand.u32 %v809, 4294901760
      %v2862 = vsub.f32 %v809, %v2861
      %2863 = vmatpush2.msra.mxu0 %v2862
      %v2864 = vand.u32 %v808, 4294901760
      %v2865 = vsub.f32 %v808, %v2864
      %2866 = vmatprep.subr.mxu0 %v2865
      %v2867 = vand.u32 %v807, 4294901760
      %v2868 = vsub.f32 %v807, %v2867
      %2869 = vmatpush2.msra.mxu0 %v2868
      %v2870 = vand.u32 %v806, 4294901760
      %v2871 = vsub.f32 %v806, %v2870
      %2872 = vmatprep.subr.mxu0 %v2871
      %v2873 = vand.u32 %v805, 4294901760
      %v2874 = vsub.f32 %v805, %v2873
      %2875 = vmatpush2.msra.mxu0 %v2874
      %v2876 = vand.u32 %v804, 4294901760
      %v2877 = vsub.f32 %v804, %v2876
      %2878 = vmatprep.subr.mxu0 %v2877
      %v2879 = vand.u32 %v803, 4294901760
      %v2880 = vsub.f32 %v803, %v2879
      %2881 = vmatpush2.msra.mxu0 %v2880
      %v2882 = vand.u32 %v802, 4294901760
      %v2883 = vsub.f32 %v802, %v2882
      %2884 = vmatprep.subr.mxu0 %v2883
      %v2885 = vand.u32 %v801, 4294901760
      %v2886 = vsub.f32 %v801, %v2885
      %2887 = vmatpush2.msra.mxu0 %v2886
      %v2888 = vand.u32 %v800, 4294901760
      %v2889 = vsub.f32 %v800, %v2888
      %2890 = vmatprep.subr.mxu0 %v2889
      %v2891 = vand.u32 %v799, 4294901760
      %v2892 = vsub.f32 %v799, %v2891
      %2893 = vmatpush2.msra.mxu0 %v2892
      %v2894 = vand.u32 %v798, 4294901760
      %v2895 = vsub.f32 %v798, %v2894
      %2896 = vmatprep.subr.mxu0 %v2895
      %v2897 = vand.u32 %v797, 4294901760
      %v2898 = vsub.f32 %v797, %v2897
      %2899 = vmatpush2.msra.mxu0 %v2898
      %v2900 = vand.u32 %v796, 4294901760
      %v2901 = vsub.f32 %v796, %v2900
      %2902 = vmatprep.subr.mxu0 %v2901
      %v2903 = vand.u32 %v795, 4294901760
      %v2904 = vsub.f32 %v795, %v2903
      %2905 = vmatpush2.msra.mxu0 %v2904
      %v2906 = vand.u32 %v746, 4294901760
      %v2907 = vsub.f32 %v746, %v2906
      %2908 = vmatprep.mubr.f32.mxu0 %v2907
      %v2909 = vand.u32 %v739, 4294901760
      %v2910 = vsub.f32 %v739, %v2909
      %2911 = vmatmul.mubr.f32.gmra.mxu0 %v2910
      %v2912 = vpop.f32.mrf.mxu0
      %v2913 = vadd.f32 %v2710, %v2912
      %v2914 = vpop.f32.mrf.mxu0
      %v2915 = vadd.f32 %v2712, %v2914
      %2916 = vdwg.mxu0
      %v2917 = vand.u32 %v794, 4294901760
      %2918 = vmatprep.subr.mxu0 %v2917
      %v2919 = vand.u32 %v793, 4294901760
      %2920 = vmatpush1.msra.mxu0 %v2919
      %v2921 = vand.u32 %v792, 4294901760
      %2922 = vmatprep.subr.mxu0 %v2921
      %v2923 = vand.u32 %v791, 4294901760
      %2924 = vmatpush1.msra.mxu0 %v2923
      %v2925 = vand.u32 %v790, 4294901760
      %2926 = vmatprep.subr.mxu0 %v2925
      %v2927 = vand.u32 %v789, 4294901760
      %2928 = vmatpush1.msra.mxu0 %v2927
      %v2929 = vand.u32 %v788, 4294901760
      %2930 = vmatprep.subr.mxu0 %v2929
      %v2931 = vand.u32 %v787, 4294901760
      %2932 = vmatpush1.msra.mxu0 %v2931
      %v2933 = vand.u32 %v786, 4294901760
      %2934 = vmatprep.subr.mxu0 %v2933
      %v2935 = vand.u32 %v785, 4294901760
      %2936 = vmatpush1.msra.mxu0 %v2935
      %v2937 = vand.u32 %v784, 4294901760
      %2938 = vmatprep.subr.mxu0 %v2937
      %v2939 = vand.u32 %v783, 4294901760
      %2940 = vmatpush1.msra.mxu0 %v2939
      %v2941 = vand.u32 %v782, 4294901760
      %2942 = vmatprep.subr.mxu0 %v2941
      %v2943 = vand.u32 %v781, 4294901760
      %2944 = vmatpush1.msra.mxu0 %v2943
      %v2945 = vand.u32 %v780, 4294901760
      %2946 = vmatprep.subr.mxu0 %v2945
      %v2947 = vand.u32 %v779, 4294901760
      %2948 = vmatpush1.msra.mxu0 %v2947
      %v2949 = vand.u32 %v778, 4294901760
      %2950 = vmatprep.subr.mxu0 %v2949
      %v2951 = vand.u32 %v777, 4294901760
      %2952 = vmatpush1.msra.mxu0 %v2951
      %v2953 = vand.u32 %v776, 4294901760
      %2954 = vmatprep.subr.mxu0 %v2953
      %v2955 = vand.u32 %v775, 4294901760
      %2956 = vmatpush1.msra.mxu0 %v2955
      %v2957 = vand.u32 %v774, 4294901760
      %2958 = vmatprep.subr.mxu0 %v2957
      %v2959 = vand.u32 %v773, 4294901760
      %2960 = vmatpush1.msra.mxu0 %v2959
      %v2961 = vand.u32 %v772, 4294901760
      %2962 = vmatprep.subr.mxu0 %v2961
      %v2963 = vand.u32 %v771, 4294901760
      %2964 = vmatpush1.msra.mxu0 %v2963
      %v2965 = vand.u32 %v770, 4294901760
      %2966 = vmatprep.subr.mxu0 %v2965
      %v2967 = vand.u32 %v769, 4294901760
      %2968 = vmatpush1.msra.mxu0 %v2967
      %v2969 = vand.u32 %v768, 4294901760
      %2970 = vmatprep.subr.mxu0 %v2969
      %v2971 = vand.u32 %v767, 4294901760
      %2972 = vmatpush1.msra.mxu0 %v2971
      %v2973 = vand.u32 %v766, 4294901760
      %2974 = vmatprep.subr.mxu0 %v2973
      %v2975 = vand.u32 %v765, 4294901760
      %2976 = vmatpush1.msra.mxu0 %v2975
      %v2977 = vand.u32 %v764, 4294901760
      %2978 = vmatprep.subr.mxu0 %v2977
      %v2979 = vand.u32 %v763, 4294901760
      %2980 = vmatpush1.msra.mxu0 %v2979
      %v2981 = vand.u32 %v826, 4294901760
      %2982 = vmatprep.subr.mxu0 %v2981
      %v2983 = vand.u32 %v825, 4294901760
      %2984 = vmatpush2.msra.mxu0 %v2983
      %v2985 = vand.u32 %v824, 4294901760
      %2986 = vmatprep.subr.mxu0 %v2985
      %v2987 = vand.u32 %v823, 4294901760
      %2988 = vmatpush2.msra.mxu0 %v2987
      %v2989 = vand.u32 %v822, 4294901760
      %2990 = vmatprep.subr.mxu0 %v2989
      %v2991 = vand.u32 %v821, 4294901760
      %2992 = vmatpush2.msra.mxu0 %v2991
      %v2993 = vand.u32 %v820, 4294901760
      %2994 = vmatprep.subr.mxu0 %v2993
      %v2995 = vand.u32 %v819, 4294901760
      %2996 = vmatpush2.msra.mxu0 %v2995
      %v2997 = vand.u32 %v818, 4294901760
      %2998 = vmatprep.subr.mxu0 %v2997
      %v2999 = vand.u32 %v817, 4294901760
      %3000 = vmatpush2.msra.mxu0 %v2999
      %v3001 = vand.u32 %v816, 4294901760
      %3002 = vmatprep.subr.mxu0 %v3001
      %v3003 = vand.u32 %v815, 4294901760
      %3004 = vmatpush2.msra.mxu0 %v3003
      %v3005 = vand.u32 %v814, 4294901760
      %3006 = vmatprep.subr.mxu0 %v3005
      %v3007 = vand.u32 %v813, 4294901760
      %3008 = vmatpush2.msra.mxu0 %v3007
      %v3009 = vand.u32 %v812, 4294901760
      %3010 = vmatprep.subr.mxu0 %v3009
      %v3011 = vand.u32 %v811, 4294901760
      %3012 = vmatpush2.msra.mxu0 %v3011
      %v3013 = vand.u32 %v810, 4294901760
      %3014 = vmatprep.subr.mxu0 %v3013
      %v3015 = vand.u32 %v809, 4294901760
      %3016 = vmatpush2.msra.mxu0 %v3015
      %v3017 = vand.u32 %v808, 4294901760
      %3018 = vmatprep.subr.mxu0 %v3017
      %v3019 = vand.u32 %v807, 4294901760
      %3020 = vmatpush2.msra.mxu0 %v3019
      %v3021 = vand.u32 %v806, 4294901760
      %3022 = vmatprep.subr.mxu0 %v3021
      %v3023 = vand.u32 %v805, 4294901760
      %3024 = vmatpush2.msra.mxu0 %v3023
      %v3025 = vand.u32 %v804, 4294901760
      %3026 = vmatprep.subr.mxu0 %v3025
      %v3027 = vand.u32 %v803, 4294901760
      %3028 = vmatpush2.msra.mxu0 %v3027
      %v3029 = vand.u32 %v802, 4294901760
      %3030 = vmatprep.subr.mxu0 %v3029
      %v3031 = vand.u32 %v801, 4294901760
      %3032 = vmatpush2.msra.mxu0 %v3031
      %v3033 = vand.u32 %v800, 4294901760
      %3034 = vmatprep.subr.mxu0 %v3033
      %v3035 = vand.u32 %v799, 4294901760
      %3036 = vmatpush2.msra.mxu0 %v3035
      %v3037 = vand.u32 %v798, 4294901760
      %3038 = vmatprep.subr.mxu0 %v3037
      %v3039 = vand.u32 %v797, 4294901760
      %3040 = vmatpush2.msra.mxu0 %v3039
      %v3041 = vand.u32 %v796, 4294901760
      %3042 = vmatprep.subr.mxu0 %v3041
      %v3043 = vand.u32 %v795, 4294901760
      %3044 = vmatpush2.msra.mxu0 %v3043
      %v3045 = vand.u32 %v746, 4294901760
      %v3046 = vsub.f32 %v746, %v3045
      %v3047 = vand.u32 %v3046, 4294901760
      %3048 = vmatprep.mubr.f32.mxu0 %v3047
      %v3049 = vand.u32 %v739, 4294901760
      %v3050 = vsub.f32 %v739, %v3049
      %v3051 = vand.u32 %v3050, 4294901760
      %3052 = vmatmul.mubr.f32.gmra.mxu0 %v3051
      %v3053 = vpop.f32.mrf.mxu0
      %v3054 = vadd.f32 %v2913, %v3053
      %v3055 = vpop.f32.mrf.mxu0
      %v3056 = vadd.f32 %v2915, %v3055
      %3057 = vdwg.mxu0
      %v3058 = vand.u32 %v794, 4294901760
      %v3059 = vsub.f32 %v794, %v3058
      %v3060 = vand.u32 %v3059, 4294901760
      %3061 = vmatprep.subr.mxu0 %v3060
      %v3062 = vand.u32 %v793, 4294901760
      %v3063 = vsub.f32 %v793, %v3062
      %v3064 = vand.u32 %v3063, 4294901760
      %3065 = vmatpush1.msra.mxu0 %v3064
      %v3066 = vand.u32 %v792, 4294901760
      %v3067 = vsub.f32 %v792, %v3066
      %v3068 = vand.u32 %v3067, 4294901760
      %3069 = vmatprep.subr.mxu0 %v3068
      %v3070 = vand.u32 %v791, 4294901760
      %v3071 = vsub.f32 %v791, %v3070
      %v3072 = vand.u32 %v3071, 4294901760
      %3073 = vmatpush1.msra.mxu0 %v3072
      %v3074 = vand.u32 %v790, 4294901760
      %v3075 = vsub.f32 %v790, %v3074
      %v3076 = vand.u32 %v3075, 4294901760
      %3077 = vmatprep.subr.mxu0 %v3076
      %v3078 = vand.u32 %v789, 4294901760
      %v3079 = vsub.f32 %v789, %v3078
      %v3080 = vand.u32 %v3079, 4294901760
      %3081 = vmatpush1.msra.mxu0 %v3080
      %v3082 = vand.u32 %v788, 4294901760
      %v3083 = vsub.f32 %v788, %v3082
      %v3084 = vand.u32 %v3083, 4294901760
      %3085 = vmatprep.subr.mxu0 %v3084
      %v3086 = vand.u32 %v787, 4294901760
      %v3087 = vsub.f32 %v787, %v3086
      %v3088 = vand.u32 %v3087, 4294901760
      %3089 = vmatpush1.msra.mxu0 %v3088
      %v3090 = vand.u32 %v786, 4294901760
      %v3091 = vsub.f32 %v786, %v3090
      %v3092 = vand.u32 %v3091, 4294901760
      %3093 = vmatprep.subr.mxu0 %v3092
      %v3094 = vand.u32 %v785, 4294901760
      %v3095 = vsub.f32 %v785, %v3094
      %v3096 = vand.u32 %v3095, 4294901760
      %3097 = vmatpush1.msra.mxu0 %v3096
      %v3098 = vand.u32 %v784, 4294901760
      %v3099 = vsub.f32 %v784, %v3098
      %v3100 = vand.u32 %v3099, 4294901760
      %3101 = vmatprep.subr.mxu0 %v3100
      %v3102 = vand.u32 %v783, 4294901760
      %v3103 = vsub.f32 %v783, %v3102
      %v3104 = vand.u32 %v3103, 4294901760
      %3105 = vmatpush1.msra.mxu0 %v3104
      %v3106 = vand.u32 %v782, 4294901760
      %v3107 = vsub.f32 %v782, %v3106
      %v3108 = vand.u32 %v3107, 4294901760
      %3109 = vmatprep.subr.mxu0 %v3108
      %v3110 = vand.u32 %v781, 4294901760
      %v3111 = vsub.f32 %v781, %v3110
      %v3112 = vand.u32 %v3111, 4294901760
      %3113 = vmatpush1.msra.mxu0 %v3112
      %v3114 = vand.u32 %v780, 4294901760
      %v3115 = vsub.f32 %v780, %v3114
      %v3116 = vand.u32 %v3115, 4294901760
      %3117 = vmatprep.subr.mxu0 %v3116
      %v3118 = vand.u32 %v779, 4294901760
      %v3119 = vsub.f32 %v779, %v3118
      %v3120 = vand.u32 %v3119, 4294901760
      %3121 = vmatpush1.msra.mxu0 %v3120
      %v3122 = vand.u32 %v778, 4294901760
      %v3123 = vsub.f32 %v778, %v3122
      %v3124 = vand.u32 %v3123, 4294901760
      %3125 = vmatprep.subr.mxu0 %v3124
      %v3126 = vand.u32 %v777, 4294901760
      %v3127 = vsub.f32 %v777, %v3126
      %v3128 = vand.u32 %v3127, 4294901760
      %3129 = vmatpush1.msra.mxu0 %v3128
      %v3130 = vand.u32 %v776, 4294901760
      %v3131 = vsub.f32 %v776, %v3130
      %v3132 = vand.u32 %v3131, 4294901760
      %3133 = vmatprep.subr.mxu0 %v3132
      %v3134 = vand.u32 %v775, 4294901760
      %v3135 = vsub.f32 %v775, %v3134
      %v3136 = vand.u32 %v3135, 4294901760
      %3137 = vmatpush1.msra.mxu0 %v3136
      %v3138 = vand.u32 %v774, 4294901760
      %v3139 = vsub.f32 %v774, %v3138
      %v3140 = vand.u32 %v3139, 4294901760
      %3141 = vmatprep.subr.mxu0 %v3140
      %v3142 = vand.u32 %v773, 4294901760
      %v3143 = vsub.f32 %v773, %v3142
      %v3144 = vand.u32 %v3143, 4294901760
      %3145 = vmatpush1.msra.mxu0 %v3144
      %v3146 = vand.u32 %v772, 4294901760
      %v3147 = vsub.f32 %v772, %v3146
      %v3148 = vand.u32 %v3147, 4294901760
      %3149 = vmatprep.subr.mxu0 %v3148
      %v3150 = vand.u32 %v771, 4294901760
      %v3151 = vsub.f32 %v771, %v3150
      %v3152 = vand.u32 %v3151, 4294901760
      %3153 = vmatpush1.msra.mxu0 %v3152
      %v3154 = vand.u32 %v770, 4294901760
      %v3155 = vsub.f32 %v770, %v3154
      %v3156 = vand.u32 %v3155, 4294901760
      %3157 = vmatprep.subr.mxu0 %v3156
      %v3158 = vand.u32 %v769, 4294901760
      %v3159 = vsub.f32 %v769, %v3158
      %v3160 = vand.u32 %v3159, 4294901760
      %3161 = vmatpush1.msra.mxu0 %v3160
      %v3162 = vand.u32 %v768, 4294901760
      %v3163 = vsub.f32 %v768, %v3162
      %v3164 = vand.u32 %v3163, 4294901760
      %3165 = vmatprep.subr.mxu0 %v3164
      %v3166 = vand.u32 %v767, 4294901760
      %v3167 = vsub.f32 %v767, %v3166
      %v3168 = vand.u32 %v3167, 4294901760
      %3169 = vmatpush1.msra.mxu0 %v3168
      %v3170 = vand.u32 %v766, 4294901760
      %v3171 = vsub.f32 %v766, %v3170
      %v3172 = vand.u32 %v3171, 4294901760
      %3173 = vmatprep.subr.mxu0 %v3172
      %v3174 = vand.u32 %v765, 4294901760
      %v3175 = vsub.f32 %v765, %v3174
      %v3176 = vand.u32 %v3175, 4294901760
      %3177 = vmatpush1.msra.mxu0 %v3176
      %v3178 = vand.u32 %v764, 4294901760
      %v3179 = vsub.f32 %v764, %v3178
      %v3180 = vand.u32 %v3179, 4294901760
      %3181 = vmatprep.subr.mxu0 %v3180
      %v3182 = vand.u32 %v763, 4294901760
      %v3183 = vsub.f32 %v763, %v3182
      %v3184 = vand.u32 %v3183, 4294901760
      %3185 = vmatpush1.msra.mxu0 %v3184
      %v3186 = vand.u32 %v826, 4294901760
      %v3187 = vsub.f32 %v826, %v3186
      %v3188 = vand.u32 %v3187, 4294901760
      %3189 = vmatprep.subr.mxu0 %v3188
      %v3190 = vand.u32 %v825, 4294901760
      %v3191 = vsub.f32 %v825, %v3190
      %v3192 = vand.u32 %v3191, 4294901760
      %3193 = vmatpush2.msra.mxu0 %v3192
      %v3194 = vand.u32 %v824, 4294901760
      %v3195 = vsub.f32 %v824, %v3194
      %v3196 = vand.u32 %v3195, 4294901760
      %3197 = vmatprep.subr.mxu0 %v3196
      %v3198 = vand.u32 %v823, 4294901760
      %v3199 = vsub.f32 %v823, %v3198
      %v3200 = vand.u32 %v3199, 4294901760
      %3201 = vmatpush2.msra.mxu0 %v3200
      %v3202 = vand.u32 %v822, 4294901760
      %v3203 = vsub.f32 %v822, %v3202
      %v3204 = vand.u32 %v3203, 4294901760
      %3205 = vmatprep.subr.mxu0 %v3204
      %v3206 = vand.u32 %v821, 4294901760
      %v3207 = vsub.f32 %v821, %v3206
      %v3208 = vand.u32 %v3207, 4294901760
      %3209 = vmatpush2.msra.mxu0 %v3208
      %v3210 = vand.u32 %v820, 4294901760
      %v3211 = vsub.f32 %v820, %v3210
      %v3212 = vand.u32 %v3211, 4294901760
      %3213 = vmatprep.subr.mxu0 %v3212
      %v3214 = vand.u32 %v819, 4294901760
      %v3215 = vsub.f32 %v819, %v3214
      %v3216 = vand.u32 %v3215, 4294901760
      %3217 = vmatpush2.msra.mxu0 %v3216
      %v3218 = vand.u32 %v818, 4294901760
      %v3219 = vsub.f32 %v818, %v3218
      %v3220 = vand.u32 %v3219, 4294901760
      %3221 = vmatprep.subr.mxu0 %v3220
      %v3222 = vand.u32 %v817, 4294901760
      %v3223 = vsub.f32 %v817, %v3222
      %v3224 = vand.u32 %v3223, 4294901760
      %3225 = vmatpush2.msra.mxu0 %v3224
      %v3226 = vand.u32 %v816, 4294901760
      %v3227 = vsub.f32 %v816, %v3226
      %v3228 = vand.u32 %v3227, 4294901760
      %3229 = vmatprep.subr.mxu0 %v3228
      %v3230 = vand.u32 %v815, 4294901760
      %v3231 = vsub.f32 %v815, %v3230
      %v3232 = vand.u32 %v3231, 4294901760
      %3233 = vmatpush2.msra.mxu0 %v3232
      %v3234 = vand.u32 %v814, 4294901760
      %v3235 = vsub.f32 %v814, %v3234
      %v3236 = vand.u32 %v3235, 4294901760
      %3237 = vmatprep.subr.mxu0 %v3236
      %v3238 = vand.u32 %v813, 4294901760
      %v3239 = vsub.f32 %v813, %v3238
      %v3240 = vand.u32 %v3239, 4294901760
      %3241 = vmatpush2.msra.mxu0 %v3240
      %v3242 = vand.u32 %v812, 4294901760
      %v3243 = vsub.f32 %v812, %v3242
      %v3244 = vand.u32 %v3243, 4294901760
      %3245 = vmatprep.subr.mxu0 %v3244
      %v3246 = vand.u32 %v811, 4294901760
      %v3247 = vsub.f32 %v811, %v3246
      %v3248 = vand.u32 %v3247, 4294901760
      %3249 = vmatpush2.msra.mxu0 %v3248
      %v3250 = vand.u32 %v810, 4294901760
      %v3251 = vsub.f32 %v810, %v3250
      %v3252 = vand.u32 %v3251, 4294901760
      %3253 = vmatprep.subr.mxu0 %v3252
      %v3254 = vand.u32 %v809, 4294901760
      %v3255 = vsub.f32 %v809, %v3254
      %v3256 = vand.u32 %v3255, 4294901760
      %3257 = vmatpush2.msra.mxu0 %v3256
      %v3258 = vand.u32 %v808, 4294901760
      %v3259 = vsub.f32 %v808, %v3258
      %v3260 = vand.u32 %v3259, 4294901760
      %3261 = vmatprep.subr.mxu0 %v3260
      %v3262 = vand.u32 %v807, 4294901760
      %v3263 = vsub.f32 %v807, %v3262
      %v3264 = vand.u32 %v3263, 4294901760
      %3265 = vmatpush2.msra.mxu0 %v3264
      %v3266 = vand.u32 %v806, 4294901760
      %v3267 = vsub.f32 %v806, %v3266
      %v3268 = vand.u32 %v3267, 4294901760
      %3269 = vmatprep.subr.mxu0 %v3268
      %v3270 = vand.u32 %v805, 4294901760
      %v3271 = vsub.f32 %v805, %v3270
      %v3272 = vand.u32 %v3271, 4294901760
      %3273 = vmatpush2.msra.mxu0 %v3272
      %v3274 = vand.u32 %v804, 4294901760
      %v3275 = vsub.f32 %v804, %v3274
      %v3276 = vand.u32 %v3275, 4294901760
      %3277 = vmatprep.subr.mxu0 %v3276
      %v3278 = vand.u32 %v803, 4294901760
      %v3279 = vsub.f32 %v803, %v3278
      %v3280 = vand.u32 %v3279, 4294901760
      %3281 = vmatpush2.msra.mxu0 %v3280
      %v3282 = vand.u32 %v802, 4294901760
      %v3283 = vsub.f32 %v802, %v3282
      %v3284 = vand.u32 %v3283, 4294901760
      %3285 = vmatprep.subr.mxu0 %v3284
      %v3286 = vand.u32 %v801, 4294901760
      %v3287 = vsub.f32 %v801, %v3286
      %v3288 = vand.u32 %v3287, 4294901760
      %3289 = vmatpush2.msra.mxu0 %v3288
      %v3290 = vand.u32 %v800, 4294901760
      %v3291 = vsub.f32 %v800, %v3290
      %v3292 = vand.u32 %v3291, 4294901760
      %3293 = vmatprep.subr.mxu0 %v3292
      %v3294 = vand.u32 %v799, 4294901760
      %v3295 = vsub.f32 %v799, %v3294
      %v3296 = vand.u32 %v3295, 4294901760
      %3297 = vmatpush2.msra.mxu0 %v3296
      %v3298 = vand.u32 %v798, 4294901760
      %v3299 = vsub.f32 %v798, %v3298
      %v3300 = vand.u32 %v3299, 4294901760
      %3301 = vmatprep.subr.mxu0 %v3300
      %v3302 = vand.u32 %v797, 4294901760
      %v3303 = vsub.f32 %v797, %v3302
      %v3304 = vand.u32 %v3303, 4294901760
      %3305 = vmatpush2.msra.mxu0 %v3304
      %v3306 = vand.u32 %v796, 4294901760
      %v3307 = vsub.f32 %v796, %v3306
      %v3308 = vand.u32 %v3307, 4294901760
      %3309 = vmatprep.subr.mxu0 %v3308
      %v3310 = vand.u32 %v795, 4294901760
      %v3311 = vsub.f32 %v795, %v3310
      %v3312 = vand.u32 %v3311, 4294901760
      %3313 = vmatpush2.msra.mxu0 %v3312
      %v3314 = vand.u32 %v746, 4294901760
      %3315 = vmatprep.mubr.f32.mxu0 %v3314
      %v3316 = vand.u32 %v739, 4294901760
      %3317 = vmatmul.mubr.f32.gmra.mxu0 %v3316
      %v3318 = vpop.f32.mrf.mxu0
      %v3319 = vadd.f32 %v3054, %v3318
      %v3320 = vpop.f32.mrf.mxu0
      %v3321 = vadd.f32 %v3056, %v3320
      %3322 = vdwg.mxu0
      %v3323 = vand.u32 %v794, 4294901760
      %3324 = vmatprep.subr.mxu0 %v3323
      %v3325 = vand.u32 %v793, 4294901760
      %3326 = vmatpush1.msra.mxu0 %v3325
      %v3327 = vand.u32 %v792, 4294901760
      %3328 = vmatprep.subr.mxu0 %v3327
      %v3329 = vand.u32 %v791, 4294901760
      %3330 = vmatpush1.msra.mxu0 %v3329
      %v3331 = vand.u32 %v790, 4294901760
      %3332 = vmatprep.subr.mxu0 %v3331
      %v3333 = vand.u32 %v789, 4294901760
      %3334 = vmatpush1.msra.mxu0 %v3333
      %v3335 = vand.u32 %v788, 4294901760
      %3336 = vmatprep.subr.mxu0 %v3335
      %v3337 = vand.u32 %v787, 4294901760
      %3338 = vmatpush1.msra.mxu0 %v3337
      %v3339 = vand.u32 %v786, 4294901760
      %3340 = vmatprep.subr.mxu0 %v3339
      %v3341 = vand.u32 %v785, 4294901760
      %3342 = vmatpush1.msra.mxu0 %v3341
      %v3343 = vand.u32 %v784, 4294901760
      %3344 = vmatprep.subr.mxu0 %v3343
      %v3345 = vand.u32 %v783, 4294901760
      %3346 = vmatpush1.msra.mxu0 %v3345
      %v3347 = vand.u32 %v782, 4294901760
      %3348 = vmatprep.subr.mxu0 %v3347
      %v3349 = vand.u32 %v781, 4294901760
      %3350 = vmatpush1.msra.mxu0 %v3349
      %v3351 = vand.u32 %v780, 4294901760
      %3352 = vmatprep.subr.mxu0 %v3351
      %v3353 = vand.u32 %v779, 4294901760
      %3354 = vmatpush1.msra.mxu0 %v3353
      %v3355 = vand.u32 %v778, 4294901760
      %3356 = vmatprep.subr.mxu0 %v3355
      %v3357 = vand.u32 %v777, 4294901760
      %3358 = vmatpush1.msra.mxu0 %v3357
      %v3359 = vand.u32 %v776, 4294901760
      %3360 = vmatprep.subr.mxu0 %v3359
      %v3361 = vand.u32 %v775, 4294901760
      %3362 = vmatpush1.msra.mxu0 %v3361
      %v3363 = vand.u32 %v774, 4294901760
      %3364 = vmatprep.subr.mxu0 %v3363
      %v3365 = vand.u32 %v773, 4294901760
      %3366 = vmatpush1.msra.mxu0 %v3365
      %v3367 = vand.u32 %v772, 4294901760
      %3368 = vmatprep.subr.mxu0 %v3367
      %v3369 = vand.u32 %v771, 4294901760
      %3370 = vmatpush1.msra.mxu0 %v3369
      %v3371 = vand.u32 %v770, 4294901760
      %3372 = vmatprep.subr.mxu0 %v3371
      %v3373 = vand.u32 %v769, 4294901760
      %3374 = vmatpush1.msra.mxu0 %v3373
      %v3375 = vand.u32 %v768, 4294901760
      %3376 = vmatprep.subr.mxu0 %v3375
      %v3377 = vand.u32 %v767, 4294901760
      %3378 = vmatpush1.msra.mxu0 %v3377
      %v3379 = vand.u32 %v766, 4294901760
      %3380 = vmatprep.subr.mxu0 %v3379
      %v3381 = vand.u32 %v765, 4294901760
      %3382 = vmatpush1.msra.mxu0 %v3381
      %v3383 = vand.u32 %v764, 4294901760
      %3384 = vmatprep.subr.mxu0 %v3383
      %v3385 = vand.u32 %v763, 4294901760
      %3386 = vmatpush1.msra.mxu0 %v3385
      %v3387 = vand.u32 %v826, 4294901760
      %3388 = vmatprep.subr.mxu0 %v3387
      %v3389 = vand.u32 %v825, 4294901760
      %3390 = vmatpush2.msra.mxu0 %v3389
      %v3391 = vand.u32 %v824, 4294901760
      %3392 = vmatprep.subr.mxu0 %v3391
      %v3393 = vand.u32 %v823, 4294901760
      %3394 = vmatpush2.msra.mxu0 %v3393
      %v3395 = vand.u32 %v822, 4294901760
      %3396 = vmatprep.subr.mxu0 %v3395
      %v3397 = vand.u32 %v821, 4294901760
      %3398 = vmatpush2.msra.mxu0 %v3397
      %v3399 = vand.u32 %v820, 4294901760
      %3400 = vmatprep.subr.mxu0 %v3399
      %v3401 = vand.u32 %v819, 4294901760
      %3402 = vmatpush2.msra.mxu0 %v3401
      %v3403 = vand.u32 %v818, 4294901760
      %3404 = vmatprep.subr.mxu0 %v3403
      %v3405 = vand.u32 %v817, 4294901760
      %3406 = vmatpush2.msra.mxu0 %v3405
      %v3407 = vand.u32 %v816, 4294901760
      %3408 = vmatprep.subr.mxu0 %v3407
      %v3409 = vand.u32 %v815, 4294901760
      %3410 = vmatpush2.msra.mxu0 %v3409
      %v3411 = vand.u32 %v814, 4294901760
      %3412 = vmatprep.subr.mxu0 %v3411
      %v3413 = vand.u32 %v813, 4294901760
      %3414 = vmatpush2.msra.mxu0 %v3413
      %v3415 = vand.u32 %v812, 4294901760
      %3416 = vmatprep.subr.mxu0 %v3415
      %v3417 = vand.u32 %v811, 4294901760
      %3418 = vmatpush2.msra.mxu0 %v3417
      %v3419 = vand.u32 %v810, 4294901760
      %3420 = vmatprep.subr.mxu0 %v3419
      %v3421 = vand.u32 %v809, 4294901760
      %3422 = vmatpush2.msra.mxu0 %v3421
      %v3423 = vand.u32 %v808, 4294901760
      %3424 = vmatprep.subr.mxu0 %v3423
      %v3425 = vand.u32 %v807, 4294901760
      %3426 = vmatpush2.msra.mxu0 %v3425
      %v3427 = vand.u32 %v806, 4294901760
      %3428 = vmatprep.subr.mxu0 %v3427
      %v3429 = vand.u32 %v805, 4294901760
      %3430 = vmatpush2.msra.mxu0 %v3429
      %v3431 = vand.u32 %v804, 4294901760
      %3432 = vmatprep.subr.mxu0 %v3431
      %v3433 = vand.u32 %v803, 4294901760
      %3434 = vmatpush2.msra.mxu0 %v3433
      %v3435 = vand.u32 %v802, 4294901760
      %3436 = vmatprep.subr.mxu0 %v3435
      %v3437 = vand.u32 %v801, 4294901760
      %3438 = vmatpush2.msra.mxu0 %v3437
      %v3439 = vand.u32 %v800, 4294901760
      %3440 = vmatprep.subr.mxu0 %v3439
      %v3441 = vand.u32 %v799, 4294901760
      %3442 = vmatpush2.msra.mxu0 %v3441
      %v3443 = vand.u32 %v798, 4294901760
      %3444 = vmatprep.subr.mxu0 %v3443
      %v3445 = vand.u32 %v797, 4294901760
      %3446 = vmatpush2.msra.mxu0 %v3445
      %v3447 = vand.u32 %v796, 4294901760
      %3448 = vmatprep.subr.mxu0 %v3447
      %v3449 = vand.u32 %v795, 4294901760
      %3450 = vmatpush2.msra.mxu0 %v3449
      %v3451 = vand.u32 %v746, 4294901760
      %3452 = vmatprep.mubr.f32.mxu0 %v3451
      %v3453 = vand.u32 %v739, 4294901760
      %3454 = vmatmul.mubr.f32.gmra.mxu0 %v3453
      %v3455 = vpop.f32.mrf.mxu0
      %v3456 = vadd.f32 %v3319, %v3455
      %v3457 = vpop.f32.mrf.mxu0
      %v3458 = vadd.f32 %v3321, %v3457
      %3459 = vdwg.mxu0
      %s3460 = sld [smem:[#allocation3]]
      %v3461 = vstv %s3460
      %v3462 = vadd.f32 %v3456, %v3461
      %v3463 = vadd.f32 %v3458, %v3461
      %v3464 = vxor.u32 %v3462, 2147483648
      %v3465 = vxor.u32 %v3463, 2147483648
      %v3466 = vmul.f32 %v3464, 1.442695
      %v3467 = vpow.pop %v3466
      %v3468 = vmul.f32 %v3465, 1.442695
      %v3469 = vpow.pop %v3468
      %v3470 = vadd.f32 %v3467, 1.0
      %v3471 = vadd.f32 %v3469, 1.0
      %v3472 = vrcp.pop %v3470
      %v3473 = vmul.f32 1.0, %v3472
      %v3474 = vrcp.pop %v3471
      %v3475 = vmul.f32 1.0, %v3474
      %v3476 = vlaneseq
      %v3477 = vshrl.u32 %v3476, 7
      %v3478 = vsub.s32 0, %v3477
      %v3479 = vrot.slane %v3473, %v3478
      %v3480 = vlaneseq
      %v3481 = vshrl.u32 %v3480, 7
      %v3482 = vsub.s32 0, %v3481
      %v3483 = vrot.slane %v3475, %v3482
      %v3486 = vcombine.low %v3479, %v3483
      %v3488 = vmul.f32 %v729, %v3486
      %3489 = vst [vmem:[%s226] sm:$0xff] %v3488
      %p3490 = scmp.lt.s32.totalorder %s18, 1
      %s3491 = scalar_select %p3490, %s18, 1
      %s3492 = smul.addr %s3491, 2
      %s3493 = smul.addr %s3492, 4
      %s3494 = scalar_lea.vmem %s5, %s3493
      // Predicated region
      $region41: #{ca_sa_forward.1} parent=39 // pred_check
        %p3495 = pneg %p146
      $region42: #{ca_sa_forward.1} parent=39 // pred_check_branch
        %3497 = sbr.rel (%p3495) target = $region44
      $region43: #{ca_sa_forward.1} parent=39 // pred_region
        _
      $region44: #{ca_sa_forward.1} parent=39 // pred_fallthru
        _
    $region40: #{ca_sa_forward.1} parent=5 // pred_fallthru
      _
    %p3498 = scmp.le.s32.totalorder 2, %s13
    // Predicated region
    $region45: #{ca_sa_forward.1} parent=5 // pred_check
      %p3499 = pneg %p3498
    $region46: #{ca_sa_forward.1} parent=5 // pred_check_branch
      %3501 = sbr.rel (%p3499) target = $region48
    $region47: #{ca_sa_forward.1} parent=5 // pred_region
      %s3502 = ssub.s32 %s13, 2
      // Predicated region
      $region49: #{ca_sa_forward.1} parent=47 // pred_check
        %p3503 = pneg %p152
      $region50: #{ca_sa_forward.1} parent=47 // pred_check_branch
        %3505 = sbr.rel (%p3503) target = $region52
      $region51: #{ca_sa_forward.1} parent=47 // pred_region
        %p3506 = scmp.lt.s32.totalorder %s19, 1
        %s3507 = scalar_select %p3506, %s19, 1
        %s3508 = smul.addr %s3507, 2
        %s3509 = smul.addr %s3508, 4
        %s3510 = scalar_lea.vmem %s5, %s3509
      $region52: #{ca_sa_forward.1} parent=47 // pred_fallthru
        _
    $region48: #{ca_sa_forward.1} parent=5 // pred_fallthru
      _
  $region6: #{ca_sa_forward.1} parent=0 // loop_footer
    %s17 = sadd.s32 1, %s13
  $region7: #{ca_sa_forward.1} parent=0 // loop_footer_branch
    %12 = sbr.rel target = $region3
  $region8: #{ca_sa_forward.1} parent=0 // loop_exit
    _

</llo_original>
